<compile_context>
chip_gen: v6e
topology: v6e:2x2x1
jax: 0.10.0
libtpu: 0.0.40
codegen_flags: <defaults>
</compile_context>

<pallas_src>
import functools

import numpy as np
import jax
import jax.numpy as jnp
from jax.experimental import pallas as pl
from jax.experimental.pallas import tpu as pltpu


# ---------------------------- fused Pallas kernel ----------------------------

def _smallnet_kernel(x2_ref, rw_ref, ldh_ref, sh_ref, m_ref, bcrow_ref,
                     rsel_ref, csel_ref, rsel2_ref, w1p_ref, b1_ref,
                     w2t_ref, b2_ref, out_ref):
    f32 = jnp.float32
    dot = functools.partial(jnp.dot, preferred_element_type=f32)

    # --- AvgPool3d(k=5, s=5, divisor_override=1): 5x5x5 SUM pool as two GEMMs.
    #     rows of `pooled` = (n, do, ho), cols = wo.
    pooled = dot(dot(ldh_ref[...], x2_ref[...]), rw_ref[...])          # (16, 22)

    # --- Conv3d(1 -> 18, k=3, pad=1) + bias + ReLU.
    #     For each (kd, kh): row-shift (Sh) then a banded weight matrix (M)
    #     that applies the 3 kw taps and scatters over the (wo, oc) lane axis.
    #     Output layout: rows = (n, do, ho), cols = wo*18 + oc  -> (16, 396).
    conv = None
    for i in range(sh_ref.shape[0]):                                   # 9 (kd, kh) taps
        t = dot(sh_ref[i], pooled)                                     # (16, 22)
        c = dot(t, m_ref[i])                                           # (16, 396)
        conv = c if conv is None else conv + c
    conv = jnp.maximum(conv + bcrow_ref[...], 0.0)                     # (16, 396)

    # --- MaxPool3d(k=2, s=2): elementwise max over the 8 window taps, each tap
    #     obtained by a 0/1 row selection (dz, dy) and column selection (dx).
    #     Result rows = (n, zo, yo), cols = xo*18 + oc  -> (4, 198).
    maxed = None
    for i in range(rsel_ref.shape[0]):                                 # 4 (dz, dy)
        rows = dot(rsel_ref[i], conv)                                  # (4, 396)
        for j in range(csel_ref.shape[0]):                             # 2 dx
            tap = dot(rows, csel_ref[j])                               # (4, 198)
            maxed = tap if maxed is None else jnp.maximum(maxed, tap)

    # --- flatten (channel-major, torch.flatten order) + Linear(396, 64) + ReLU
    #     + Linear(64, C).  The flatten permutation is folded into w1 (w1p) and
    #     a per-(zo, yo) batch-row selection; batch is the GEMM M dimension.
    h = None
    for i in range(rsel2_ref.shape[0]):                                # dd*hh = 2
        part = dot(dot(rsel2_ref[i], maxed), w1p_ref[i])               # (N, 64)
        h = part if h is None else h + part
    h = jnp.maximum(h + b1_ref[...], 0.0)                              # (N, 64)
    out_ref[...] = dot(h, w2t_ref[...]) + b2_ref[...]                  # (N, C)


# ---------------------- host-side constant matrix builders -------------------

def _pool_matrices(N, D, H, W):
    d, h, w = D // 5, H // 5, W // 5
    rw = np.zeros((W, w), np.float32)                 # sum over W groups of 5
    for ww_ in range(W):
        rw[ww_, ww_ // 5] = 1.0
    ldh = np.zeros((N * d * h, N * D * H), np.float32)  # sum over 5x5 (z, y) blocks
    for n in range(N):
        for do in range(d):
            for ho in range(h):
                s = n * d * h + do * h + ho
                for z in range(5 * do, 5 * do + 5):
                    for y in range(5 * ho, 5 * ho + 5):
                        ldh[s, n * D * H + z * H + y] = 1.0
    return rw, ldh


def _conv_shift_matrices(N, d, h):
    S = N * d * h
    sh = np.zeros((9, S, S), np.float32)              # zero-padded (kd, kh) row shifts
    for kd in range(3):
        for kh in range(3):
            i = kd * 3 + kh
            for n in range(N):
                for do in range(d):
                    for ho in range(h):
                        di, hi = do + kd - 1, ho + kh - 1
                        if 0 <= di < d and 0 <= hi < h:
                            sh[i, n * d * h + do * h + ho,
                               n * d * h + di * h + hi] = 1.0
    return sh


def _w_band(w):
    # band[kw, w_in, wo] = 1 iff w_in == wo + kw - 1  (zero padding at the edges)
    band = np.zeros((3, w, w), np.float32)
    for kw in range(3):
        for wo in range(w):
            wi = wo + kw - 1
            if 0 <= wi < w:
                band[kw, wi, wo] = 1.0
    return band


def _maxpool_matrices(N, d, h, w, OC):
    dd, hh, ww = d // 2, h // 2, w // 2
    rsel = np.zeros((4, N * dd * hh, N * d * h), np.float32)
    for dz in range(2):
        for dy in range(2):
            i = dz * 2 + dy
            for n in range(N):
                for zo in range(dd):
                    for yo in range(hh):
                        t = n * dd * hh + zo * hh + yo
                        s = n * d * h + (2 * zo + dz) * h + (2 * yo + dy)
                        rsel[i, t, s] = 1.0
    csel = np.zeros((2, w * OC, ww * OC), np.float32)
    for dx in range(2):
        for xo in range(ww):
            for oc in range(OC):
                csel[dx, (2 * xo + dx) * OC + oc, xo * OC + oc] = 1.0
    rsel2 = np.zeros((dd * hh, N, N * dd * hh), np.float32)
    for zo in range(dd):
        for yo in range(hh):
            i = zo * hh + yo
            for n in range(N):
                rsel2[i, n, n * dd * hh + i] = 1.0
    return rsel, csel, rsel2


# ------------------------------ SmallNet forward ------------------------------

@jax.jit
def smallnet_forward(x, params):
    N, Cin, D, H, W = x.shape
    assert Cin == 1
    d, h, w = D // 5, H // 5, W // 5              # (2, 4, 22)
    OC = params["wc"].shape[0]                    # 18
    dd, hh, ww = d // 2, h // 2, w // 2           # (1, 2, 11)
    Hd = params["w1"].shape[0]                    # 64
    C = params["w2"].shape[0]                     # num_classes

    # Constant 0/1 structure matrices (trace-time numpy -> baked constants).
    rw, ldh = _pool_matrices(N, D, H, W)
    sh = _conv_shift_matrices(N, d, h)
    rsel, csel, rsel2 = _maxpool_matrices(N, d, h, w, OC)

    # Weight-dependent matrices (tiny XLA prep, fused under jit).
    band = _w_band(w)                                               # (3, w, w)
    wcs = params["wc"].reshape(OC, 3, 3, 3)                         # (oc, kd, kh, kw)
    m = jnp.einsum('kiw,odhk->dhiwo', band, wcs).reshape(9, w, w * OC)
    bcrow = jnp.tile(params["bc"], w).reshape(1, w * OC)            # bias at col wo*OC+oc
    w1p = params["w1"].reshape(Hd, OC, dd, hh, ww)
    w1p = w1p.transpose(2, 3, 4, 1, 0).reshape(dd * hh, ww * OC, Hd)
    b1row = params["b1"].reshape(1, Hd)
    w2t = params["w2"].T
    b2row = params["b2"].reshape(1, C)

    x2 = x.reshape(N * D * H, W)                                    # free reshape

    operands = (x2, rw, ldh, sh, m, bcrow, rsel, csel, rsel2,
                w1p, b1row, w2t, b2row)
    return pl.pallas_call(
        _smallnet_kernel,
        out_shape=jax.ShapeDtypeStruct((N, C), jnp.float32),
        in_specs=[pl.BlockSpec(memory_space=pltpu.MemorySpace.VMEM)] * len(operands),
        out_specs=pl.BlockSpec(memory_space=pltpu.MemorySpace.VMEM),
    )(*operands)


# ----------------------- reference (pure JAX / XLA) ---------------------------

def reference_forward(x, params):
    p = jax.lax.reduce_window(x, 0.0, jax.lax.add,
                              (1, 1, 5, 5, 5), (1, 1, 5, 5, 5), "VALID")
    y = jax.lax.conv_general_dilated(
        p, params["wc"], window_strides=(1, 1, 1),
        padding=((1, 1), (1, 1), (1, 1)),
        dimension_numbers=("NCDHW", "OIDHW", "NCDHW"))
    y = jnp.maximum(y + params["bc"].reshape(1, -1, 1, 1, 1), 0.0)
    y = jax.lax.reduce_window(y, -jnp.inf, jax.lax.max,
                              (1, 1, 2, 2, 2), (1, 1, 2, 2, 2), "VALID")
    flat = y.reshape(y.shape[0], -1)
    a1 = jnp.maximum(flat @ params["w1"].T + params["b1"], 0.0)
    return a1 @ params["w2"].T + params["b2"]


def init_params(key, num_classes=2):
    k = jax.random.split(key, 6)
    return dict(
        wc=jax.random.normal(k[0], (18, 1, 3, 3, 3), jnp.float32) * 0.05,
        bc=jax.random.normal(k[1], (18,), jnp.float32) * 0.05,
        w1=jax.random.normal(k[2], (64, 396), jnp.float32) * 0.05,
        b1=jax.random.normal(k[3], (64,), jnp.float32) * 0.05,
        w2=jax.random.normal(k[4], (num_classes, 64), jnp.float32) * 0.05,
        b2=jax.random.normal(k[5], (num_classes,), jnp.float32) * 0.05,
    )


if __name__ == "__main__":
    key = jax.random.PRNGKey(0)
    kx, kp = jax.random.split(key)
    # NCDHW input chosen so the flattened conv feature count is exactly 396,
    # matching nn.Linear(396, 64): (10//5)//2 * (20//5)//2 * (110//5)//2 * 18 = 396.
    x = jax.random.normal(kx, (2, 1, 10, 20, 110), jnp.float32)
    params = init_params(kp, num_classes=2)

    out = jax.block_until_ready(smallnet_forward(x, params))
    ref = jax.block_until_ready(reference_forward(x, params))

    assert out.shape == (2, 2), out.shape
    # MXU f32 matmuls (multi-pass bf16) vs XLA reduce_window/conv: allow 1e-3.
    if not bool(jnp.allclose(out, ref, rtol=1e-3, atol=1e-3)):
        raise AssertionError(f"Pallas output does not match reference:\n{out}\n{ref}")
    print("KERNEL_OK")
</pallas_src>

<mosaic_0001>
module attributes {stable_mosaic.version = 11 : i64} {
  func.func @_smallnet_kernel(%arg0: memref<400x110xf32, #tpu.memory_space<vmem>>, %arg1: memref<110x22xf32, #tpu.memory_space<vmem>>, %arg2: memref<16x400xf32, #tpu.memory_space<vmem>>, %arg3: memref<9x16x16xf32, #tpu.memory_space<vmem>>, %arg4: memref<9x22x396xf32, #tpu.memory_space<vmem>>, %arg5: memref<1x396xf32, #tpu.memory_space<vmem>>, %arg6: memref<4x4x16xf32, #tpu.memory_space<vmem>>, %arg7: memref<2x396x198xf32, #tpu.memory_space<vmem>>, %arg8: memref<2x2x4xf32, #tpu.memory_space<vmem>>, %arg9: memref<2x198x64xf32, #tpu.memory_space<vmem>>, %arg10: memref<1x64xf32, #tpu.memory_space<vmem>>, %arg11: memref<64x2xf32, #tpu.memory_space<vmem>>, %arg12: memref<1x2xf32, #tpu.memory_space<vmem>>, %arg13: memref<2x2xf32, #tpu.memory_space<vmem>>) attributes {dimension_semantics = [], scalar_prefetch = 0 : i64, scratch_operands = 0 : i64, tpu.core_type = #tpu.core_type<tc>} {
    %c0 = arith.constant 0 : index
    %c0_0 = arith.constant 0 : index
    %0 = vector.load %arg2[%c0, %c0_0] : memref<16x400xf32, #tpu.memory_space<vmem>>, vector<16x400xf32>
    %c0_1 = arith.constant 0 : index
    %c0_2 = arith.constant 0 : index
    %1 = vector.load %arg0[%c0_1, %c0_2] : memref<400x110xf32, #tpu.memory_space<vmem>>, vector<400x110xf32>
    %cst = arith.constant dense<0.000000e+00> : vector<16x110xf32>
    %2 = tpu.matmul %0, %1, %cst {dimension_numbers = #tpu.dot_dimension_numbers<[1], [0], [0], [1], [0, 0, 1, 1], [], []>} : vector<16x400xf32>, vector<400x110xf32>, vector<16x110xf32> -> vector<16x110xf32>
    %c0_3 = arith.constant 0 : index
    %c0_4 = arith.constant 0 : index
    %3 = vector.load %arg1[%c0_3, %c0_4] : memref<110x22xf32, #tpu.memory_space<vmem>>, vector<110x22xf32>
    %cst_5 = arith.constant dense<0.000000e+00> : vector<16x22xf32>
    %4 = tpu.matmul %2, %3, %cst_5 {dimension_numbers = #tpu.dot_dimension_numbers<[1], [0], [0], [1], [0, 0, 1, 1], [], []>} : vector<16x110xf32>, vector<110x22xf32>, vector<16x22xf32> -> vector<16x22xf32>
    %c0_6 = arith.constant 0 : index
    %c0_7 = arith.constant 0 : index
    %c0_8 = arith.constant 0 : index
    %5 = vector.load %arg3[%c0_6, %c0_7, %c0_8] : memref<9x16x16xf32, #tpu.memory_space<vmem>>, vector<1x16x16xf32>
    %6 = vector.shape_cast %5 : vector<1x16x16xf32> to vector<16x16xf32>
    %cst_9 = arith.constant dense<0.000000e+00> : vector<16x22xf32>
    %7 = tpu.matmul %6, %4, %cst_9 {dimension_numbers = #tpu.dot_dimension_numbers<[1], [0], [0], [1], [0, 0, 1, 1], [], []>} : vector<16x16xf32>, vector<16x22xf32>, vector<16x22xf32> -> vector<16x22xf32>
    %c0_10 = arith.constant 0 : index
    %c0_11 = arith.constant 0 : index
    %c0_12 = arith.constant 0 : index
    %8 = vector.load %arg4[%c0_10, %c0_11, %c0_12] : memref<9x22x396xf32, #tpu.memory_space<vmem>>, vector<1x22x396xf32>
    %9 = vector.shape_cast %8 : vector<1x22x396xf32> to vector<22x396xf32>
    %cst_13 = arith.constant dense<0.000000e+00> : vector<16x396xf32>
    %10 = tpu.matmul %7, %9, %cst_13 {dimension_numbers = #tpu.dot_dimension_numbers<[1], [0], [0], [1], [0, 0, 1, 1], [], []>} : vector<16x22xf32>, vector<22x396xf32>, vector<16x396xf32> -> vector<16x396xf32>
    %c1 = arith.constant 1 : index
    %c0_14 = arith.constant 0 : index
    %c0_15 = arith.constant 0 : index
    %11 = vector.load %arg3[%c1, %c0_14, %c0_15] : memref<9x16x16xf32, #tpu.memory_space<vmem>>, vector<1x16x16xf32>
    %12 = vector.shape_cast %11 : vector<1x16x16xf32> to vector<16x16xf32>
    %cst_16 = arith.constant dense<0.000000e+00> : vector<16x22xf32>
    %13 = tpu.matmul %12, %4, %cst_16 {dimension_numbers = #tpu.dot_dimension_numbers<[1], [0], [0], [1], [0, 0, 1, 1], [], []>} : vector<16x16xf32>, vector<16x22xf32>, vector<16x22xf32> -> vector<16x22xf32>
    %c1_17 = arith.constant 1 : index
    %c0_18 = arith.constant 0 : index
    %c0_19 = arith.constant 0 : index
    %14 = vector.load %arg4[%c1_17, %c0_18, %c0_19] : memref<9x22x396xf32, #tpu.memory_space<vmem>>, vector<1x22x396xf32>
    %15 = vector.shape_cast %14 : vector<1x22x396xf32> to vector<22x396xf32>
    %cst_20 = arith.constant dense<0.000000e+00> : vector<16x396xf32>
    %16 = tpu.matmul %13, %15, %cst_20 {dimension_numbers = #tpu.dot_dimension_numbers<[1], [0], [0], [1], [0, 0, 1, 1], [], []>} : vector<16x22xf32>, vector<22x396xf32>, vector<16x396xf32> -> vector<16x396xf32>
    %17 = arith.addf %10, %16 : vector<16x396xf32>
    %c2 = arith.constant 2 : index
    %c0_21 = arith.constant 0 : index
    %c0_22 = arith.constant 0 : index
    %18 = vector.load %arg3[%c2, %c0_21, %c0_22] : memref<9x16x16xf32, #tpu.memory_space<vmem>>, vector<1x16x16xf32>
    %19 = vector.shape_cast %18 : vector<1x16x16xf32> to vector<16x16xf32>
    %cst_23 = arith.constant dense<0.000000e+00> : vector<16x22xf32>
    %20 = tpu.matmul %19, %4, %cst_23 {dimension_numbers = #tpu.dot_dimension_numbers<[1], [0], [0], [1], [0, 0, 1, 1], [], []>} : vector<16x16xf32>, vector<16x22xf32>, vector<16x22xf32> -> vector<16x22xf32>
    %c2_24 = arith.constant 2 : index
    %c0_25 = arith.constant 0 : index
    %c0_26 = arith.constant 0 : index
    %21 = vector.load %arg4[%c2_24, %c0_25, %c0_26] : memref<9x22x396xf32, #tpu.memory_space<vmem>>, vector<1x22x396xf32>
    %22 = vector.shape_cast %21 : vector<1x22x396xf32> to vector<22x396xf32>
    %cst_27 = arith.constant dense<0.000000e+00> : vector<16x396xf32>
    %23 = tpu.matmul %20, %22, %cst_27 {dimension_numbers = #tpu.dot_dimension_numbers<[1], [0], [0], [1], [0, 0, 1, 1], [], []>} : vector<16x22xf32>, vector<22x396xf32>, vector<16x396xf32> -> vector<16x396xf32>
    %24 = arith.addf %17, %23 : vector<16x396xf32>
    %c3 = arith.constant 3 : index
    %c0_28 = arith.constant 0 : index
    %c0_29 = arith.constant 0 : index
    %25 = vector.load %arg3[%c3, %c0_28, %c0_29] : memref<9x16x16xf32, #tpu.memory_space<vmem>>, vector<1x16x16xf32>
    %26 = vector.shape_cast %25 : vector<1x16x16xf32> to vector<16x16xf32>
    %cst_30 = arith.constant dense<0.000000e+00> : vector<16x22xf32>
    %27 = tpu.matmul %26, %4, %cst_30 {dimension_numbers = #tpu.dot_dimension_numbers<[1], [0], [0], [1], [0, 0, 1, 1], [], []>} : vector<16x16xf32>, vector<16x22xf32>, vector<16x22xf32> -> vector<16x22xf32>
    %c3_31 = arith.constant 3 : index
    %c0_32 = arith.constant 0 : index
    %c0_33 = arith.constant 0 : index
    %28 = vector.load %arg4[%c3_31, %c0_32, %c0_33] : memref<9x22x396xf32, #tpu.memory_space<vmem>>, vector<1x22x396xf32>
    %29 = vector.shape_cast %28 : vector<1x22x396xf32> to vector<22x396xf32>
    %cst_34 = arith.constant dense<0.000000e+00> : vector<16x396xf32>
    %30 = tpu.matmul %27, %29, %cst_34 {dimension_numbers = #tpu.dot_dimension_numbers<[1], [0], [0], [1], [0, 0, 1, 1], [], []>} : vector<16x22xf32>, vector<22x396xf32>, vector<16x396xf32> -> vector<16x396xf32>
    %31 = arith.addf %24, %30 : vector<16x396xf32>
    %c4 = arith.constant 4 : index
    %c0_35 = arith.constant 0 : index
    %c0_36 = arith.constant 0 : index
    %32 = vector.load %arg3[%c4, %c0_35, %c0_36] : memref<9x16x16xf32, #tpu.memory_space<vmem>>, vector<1x16x16xf32>
    %33 = vector.shape_cast %32 : vector<1x16x16xf32> to vector<16x16xf32>
    %cst_37 = arith.constant dense<0.000000e+00> : vector<16x22xf32>
    %34 = tpu.matmul %33, %4, %cst_37 {dimension_numbers = #tpu.dot_dimension_numbers<[1], [0], [0], [1], [0, 0, 1, 1], [], []>} : vector<16x16xf32>, vector<16x22xf32>, vector<16x22xf32> -> vector<16x22xf32>
    %c4_38 = arith.constant 4 : index
    %c0_39 = arith.constant 0 : index
    %c0_40 = arith.constant 0 : index
    %35 = vector.load %arg4[%c4_38, %c0_39, %c0_40] : memref<9x22x396xf32, #tpu.memory_space<vmem>>, vector<1x22x396xf32>
    %36 = vector.shape_cast %35 : vector<1x22x396xf32> to vector<22x396xf32>
    %cst_41 = arith.constant dense<0.000000e+00> : vector<16x396xf32>
    %37 = tpu.matmul %34, %36, %cst_41 {dimension_numbers = #tpu.dot_dimension_numbers<[1], [0], [0], [1], [0, 0, 1, 1], [], []>} : vector<16x22xf32>, vector<22x396xf32>, vector<16x396xf32> -> vector<16x396xf32>
    %38 = arith.addf %31, %37 : vector<16x396xf32>
    %c5 = arith.constant 5 : index
    %c0_42 = arith.constant 0 : index
    %c0_43 = arith.constant 0 : index
    %39 = vector.load %arg3[%c5, %c0_42, %c0_43] : memref<9x16x16xf32, #tpu.memory_space<vmem>>, vector<1x16x16xf32>
    %40 = vector.shape_cast %39 : vector<1x16x16xf32> to vector<16x16xf32>
    %cst_44 = arith.constant dense<0.000000e+00> : vector<16x22xf32>
    %41 = tpu.matmul %40, %4, %cst_44 {dimension_numbers = #tpu.dot_dimension_numbers<[1], [0], [0], [1], [0, 0, 1, 1], [], []>} : vector<16x16xf32>, vector<16x22xf32>, vector<16x22xf32> -> vector<16x22xf32>
    %c5_45 = arith.constant 5 : index
    %c0_46 = arith.constant 0 : index
    %c0_47 = arith.constant 0 : index
    %42 = vector.load %arg4[%c5_45, %c0_46, %c0_47] : memref<9x22x396xf32, #tpu.memory_space<vmem>>, vector<1x22x396xf32>
    %43 = vector.shape_cast %42 : vector<1x22x396xf32> to vector<22x396xf32>
    %cst_48 = arith.constant dense<0.000000e+00> : vector<16x396xf32>
    %44 = tpu.matmul %41, %43, %cst_48 {dimension_numbers = #tpu.dot_dimension_numbers<[1], [0], [0], [1], [0, 0, 1, 1], [], []>} : vector<16x22xf32>, vector<22x396xf32>, vector<16x396xf32> -> vector<16x396xf32>
    %45 = arith.addf %38, %44 : vector<16x396xf32>
    %c6 = arith.constant 6 : index
    %c0_49 = arith.constant 0 : index
    %c0_50 = arith.constant 0 : index
    %46 = vector.load %arg3[%c6, %c0_49, %c0_50] : memref<9x16x16xf32, #tpu.memory_space<vmem>>, vector<1x16x16xf32>
    %47 = vector.shape_cast %46 : vector<1x16x16xf32> to vector<16x16xf32>
    %cst_51 = arith.constant dense<0.000000e+00> : vector<16x22xf32>
    %48 = tpu.matmul %47, %4, %cst_51 {dimension_numbers = #tpu.dot_dimension_numbers<[1], [0], [0], [1], [0, 0, 1, 1], [], []>} : vector<16x16xf32>, vector<16x22xf32>, vector<16x22xf32> -> vector<16x22xf32>
    %c6_52 = arith.constant 6 : index
    %c0_53 = arith.constant 0 : index
    %c0_54 = arith.constant 0 : index
    %49 = vector.load %arg4[%c6_52, %c0_53, %c0_54] : memref<9x22x396xf32, #tpu.memory_space<vmem>>, vector<1x22x396xf32>
    %50 = vector.shape_cast %49 : vector<1x22x396xf32> to vector<22x396xf32>
    %cst_55 = arith.constant dense<0.000000e+00> : vector<16x396xf32>
    %51 = tpu.matmul %48, %50, %cst_55 {dimension_numbers = #tpu.dot_dimension_numbers<[1], [0], [0], [1], [0, 0, 1, 1], [], []>} : vector<16x22xf32>, vector<22x396xf32>, vector<16x396xf32> -> vector<16x396xf32>
    %52 = arith.addf %45, %51 : vector<16x396xf32>
    %c7 = arith.constant 7 : index
    %c0_56 = arith.constant 0 : index
    %c0_57 = arith.constant 0 : index
    %53 = vector.load %arg3[%c7, %c0_56, %c0_57] : memref<9x16x16xf32, #tpu.memory_space<vmem>>, vector<1x16x16xf32>
    %54 = vector.shape_cast %53 : vector<1x16x16xf32> to vector<16x16xf32>
    %cst_58 = arith.constant dense<0.000000e+00> : vector<16x22xf32>
    %55 = tpu.matmul %54, %4, %cst_58 {dimension_numbers = #tpu.dot_dimension_numbers<[1], [0], [0], [1], [0, 0, 1, 1], [], []>} : vector<16x16xf32>, vector<16x22xf32>, vector<16x22xf32> -> vector<16x22xf32>
    %c7_59 = arith.constant 7 : index
    %c0_60 = arith.constant 0 : index
    %c0_61 = arith.constant 0 : index
    %56 = vector.load %arg4[%c7_59, %c0_60, %c0_61] : memref<9x22x396xf32, #tpu.memory_space<vmem>>, vector<1x22x396xf32>
    %57 = vector.shape_cast %56 : vector<1x22x396xf32> to vector<22x396xf32>
    %cst_62 = arith.constant dense<0.000000e+00> : vector<16x396xf32>
    %58 = tpu.matmul %55, %57, %cst_62 {dimension_numbers = #tpu.dot_dimension_numbers<[1], [0], [0], [1], [0, 0, 1, 1], [], []>} : vector<16x22xf32>, vector<22x396xf32>, vector<16x396xf32> -> vector<16x396xf32>
    %59 = arith.addf %52, %58 : vector<16x396xf32>
    %c8 = arith.constant 8 : index
    %c0_63 = arith.constant 0 : index
    %c0_64 = arith.constant 0 : index
    %60 = vector.load %arg3[%c8, %c0_63, %c0_64] : memref<9x16x16xf32, #tpu.memory_space<vmem>>, vector<1x16x16xf32>
    %61 = vector.shape_cast %60 : vector<1x16x16xf32> to vector<16x16xf32>
    %cst_65 = arith.constant dense<0.000000e+00> : vector<16x22xf32>
    %62 = tpu.matmul %61, %4, %cst_65 {dimension_numbers = #tpu.dot_dimension_numbers<[1], [0], [0], [1], [0, 0, 1, 1], [], []>} : vector<16x16xf32>, vector<16x22xf32>, vector<16x22xf32> -> vector<16x22xf32>
    %c8_66 = arith.constant 8 : index
    %c0_67 = arith.constant 0 : index
    %c0_68 = arith.constant 0 : index
    %63 = vector.load %arg4[%c8_66, %c0_67, %c0_68] : memref<9x22x396xf32, #tpu.memory_space<vmem>>, vector<1x22x396xf32>
    %64 = vector.shape_cast %63 : vector<1x22x396xf32> to vector<22x396xf32>
    %cst_69 = arith.constant dense<0.000000e+00> : vector<16x396xf32>
    %65 = tpu.matmul %62, %64, %cst_69 {dimension_numbers = #tpu.dot_dimension_numbers<[1], [0], [0], [1], [0, 0, 1, 1], [], []>} : vector<16x22xf32>, vector<22x396xf32>, vector<16x396xf32> -> vector<16x396xf32>
    %66 = arith.addf %59, %65 : vector<16x396xf32>
    %c0_70 = arith.constant 0 : index
    %c0_71 = arith.constant 0 : index
    %67 = vector.load %arg5[%c0_70, %c0_71] : memref<1x396xf32, #tpu.memory_space<vmem>>, vector<1x396xf32>
    %68 = vector.broadcast %67 : vector<1x396xf32> to vector<16x396xf32>
    %69 = arith.addf %66, %68 : vector<16x396xf32>
    %cst_72 = arith.constant 0.000000e+00 : f32
    %70 = vector.broadcast %cst_72 : f32 to vector<16x396xf32>
    %71 = arith.maximumf %69, %70 : vector<16x396xf32>
    %c0_73 = arith.constant 0 : index
    %c0_74 = arith.constant 0 : index
    %c0_75 = arith.constant 0 : index
    %72 = vector.load %arg6[%c0_73, %c0_74, %c0_75] : memref<4x4x16xf32, #tpu.memory_space<vmem>>, vector<1x4x16xf32>
    %73 = vector.shape_cast %72 : vector<1x4x16xf32> to vector<4x16xf32>
    %cst_76 = arith.constant dense<0.000000e+00> : vector<4x396xf32>
    %74 = tpu.matmul %73, %71, %cst_76 {dimension_numbers = #tpu.dot_dimension_numbers<[1], [0], [0], [1], [0, 0, 1, 1], [], []>} : vector<4x16xf32>, vector<16x396xf32>, vector<4x396xf32> -> vector<4x396xf32>
    %c0_77 = arith.constant 0 : index
    %c0_78 = arith.constant 0 : index
    %c0_79 = arith.constant 0 : index
    %75 = vector.load %arg7[%c0_77, %c0_78, %c0_79] : memref<2x396x198xf32, #tpu.memory_space<vmem>>, vector<1x396x198xf32>
    %76 = vector.shape_cast %75 : vector<1x396x198xf32> to vector<396x198xf32>
    %cst_80 = arith.constant dense<0.000000e+00> : vector<4x198xf32>
    %77 = tpu.matmul %74, %76, %cst_80 {dimension_numbers = #tpu.dot_dimension_numbers<[1], [0], [0], [1], [0, 0, 1, 1], [], []>} : vector<4x396xf32>, vector<396x198xf32>, vector<4x198xf32> -> vector<4x198xf32>
    %c1_81 = arith.constant 1 : index
    %c0_82 = arith.constant 0 : index
    %c0_83 = arith.constant 0 : index
    %78 = vector.load %arg7[%c1_81, %c0_82, %c0_83] : memref<2x396x198xf32, #tpu.memory_space<vmem>>, vector<1x396x198xf32>
    %79 = vector.shape_cast %78 : vector<1x396x198xf32> to vector<396x198xf32>
    %cst_84 = arith.constant dense<0.000000e+00> : vector<4x198xf32>
    %80 = tpu.matmul %74, %79, %cst_84 {dimension_numbers = #tpu.dot_dimension_numbers<[1], [0], [0], [1], [0, 0, 1, 1], [], []>} : vector<4x396xf32>, vector<396x198xf32>, vector<4x198xf32> -> vector<4x198xf32>
    %81 = arith.maximumf %77, %80 : vector<4x198xf32>
    %c1_85 = arith.constant 1 : index
    %c0_86 = arith.constant 0 : index
    %c0_87 = arith.constant 0 : index
    %82 = vector.load %arg6[%c1_85, %c0_86, %c0_87] : memref<4x4x16xf32, #tpu.memory_space<vmem>>, vector<1x4x16xf32>
    %83 = vector.shape_cast %82 : vector<1x4x16xf32> to vector<4x16xf32>
    %cst_88 = arith.constant dense<0.000000e+00> : vector<4x396xf32>
    %84 = tpu.matmul %83, %71, %cst_88 {dimension_numbers = #tpu.dot_dimension_numbers<[1], [0], [0], [1], [0, 0, 1, 1], [], []>} : vector<4x16xf32>, vector<16x396xf32>, vector<4x396xf32> -> vector<4x396xf32>
    %c0_89 = arith.constant 0 : index
    %c0_90 = arith.constant 0 : index
    %c0_91 = arith.constant 0 : index
    %85 = vector.load %arg7[%c0_89, %c0_90, %c0_91] : memref<2x396x198xf32, #tpu.memory_space<vmem>>, vector<1x396x198xf32>
    %86 = vector.shape_cast %85 : vector<1x396x198xf32> to vector<396x198xf32>
    %cst_92 = arith.constant dense<0.000000e+00> : vector<4x198xf32>
    %87 = tpu.matmul %84, %86, %cst_92 {dimension_numbers = #tpu.dot_dimension_numbers<[1], [0], [0], [1], [0, 0, 1, 1], [], []>} : vector<4x396xf32>, vector<396x198xf32>, vector<4x198xf32> -> vector<4x198xf32>
    %88 = arith.maximumf %81, %87 : vector<4x198xf32>
    %c1_93 = arith.constant 1 : index
    %c0_94 = arith.constant 0 : index
    %c0_95 = arith.constant 0 : index
    %89 = vector.load %arg7[%c1_93, %c0_94, %c0_95] : memref<2x396x198xf32, #tpu.memory_space<vmem>>, vector<1x396x198xf32>
    %90 = vector.shape_cast %89 : vector<1x396x198xf32> to vector<396x198xf32>
    %cst_96 = arith.constant dense<0.000000e+00> : vector<4x198xf32>
    %91 = tpu.matmul %84, %90, %cst_96 {dimension_numbers = #tpu.dot_dimension_numbers<[1], [0], [0], [1], [0, 0, 1, 1], [], []>} : vector<4x396xf32>, vector<396x198xf32>, vector<4x198xf32> -> vector<4x198xf32>
    %92 = arith.maximumf %88, %91 : vector<4x198xf32>
    %c2_97 = arith.constant 2 : index
    %c0_98 = arith.constant 0 : index
    %c0_99 = arith.constant 0 : index
    %93 = vector.load %arg6[%c2_97, %c0_98, %c0_99] : memref<4x4x16xf32, #tpu.memory_space<vmem>>, vector<1x4x16xf32>
    %94 = vector.shape_cast %93 : vector<1x4x16xf32> to vector<4x16xf32>
    %cst_100 = arith.constant dense<0.000000e+00> : vector<4x396xf32>
    %95 = tpu.matmul %94, %71, %cst_100 {dimension_numbers = #tpu.dot_dimension_numbers<[1], [0], [0], [1], [0, 0, 1, 1], [], []>} : vector<4x16xf32>, vector<16x396xf32>, vector<4x396xf32> -> vector<4x396xf32>
    %c0_101 = arith.constant 0 : index
    %c0_102 = arith.constant 0 : index
    %c0_103 = arith.constant 0 : index
    %96 = vector.load %arg7[%c0_101, %c0_102, %c0_103] : memref<2x396x198xf32, #tpu.memory_space<vmem>>, vector<1x396x198xf32>
    %97 = vector.shape_cast %96 : vector<1x396x198xf32> to vector<396x198xf32>
    %cst_104 = arith.constant dense<0.000000e+00> : vector<4x198xf32>
    %98 = tpu.matmul %95, %97, %cst_104 {dimension_numbers = #tpu.dot_dimension_numbers<[1], [0], [0], [1], [0, 0, 1, 1], [], []>} : vector<4x396xf32>, vector<396x198xf32>, vector<4x198xf32> -> vector<4x198xf32>
    %99 = arith.maximumf %92, %98 : vector<4x198xf32>
    %c1_105 = arith.constant 1 : index
    %c0_106 = arith.constant 0 : index
    %c0_107 = arith.constant 0 : index
    %100 = vector.load %arg7[%c1_105, %c0_106, %c0_107] : memref<2x396x198xf32, #tpu.memory_space<vmem>>, vector<1x396x198xf32>
    %101 = vector.shape_cast %100 : vector<1x396x198xf32> to vector<396x198xf32>
    %cst_108 = arith.constant dense<0.000000e+00> : vector<4x198xf32>
    %102 = tpu.matmul %95, %101, %cst_108 {dimension_numbers = #tpu.dot_dimension_numbers<[1], [0], [0], [1], [0, 0, 1, 1], [], []>} : vector<4x396xf32>, vector<396x198xf32>, vector<4x198xf32> -> vector<4x198xf32>
    %103 = arith.maximumf %99, %102 : vector<4x198xf32>
    %c3_109 = arith.constant 3 : index
    %c0_110 = arith.constant 0 : index
    %c0_111 = arith.constant 0 : index
    %104 = vector.load %arg6[%c3_109, %c0_110, %c0_111] : memref<4x4x16xf32, #tpu.memory_space<vmem>>, vector<1x4x16xf32>
    %105 = vector.shape_cast %104 : vector<1x4x16xf32> to vector<4x16xf32>
    %cst_112 = arith.constant dense<0.000000e+00> : vector<4x396xf32>
    %106 = tpu.matmul %105, %71, %cst_112 {dimension_numbers = #tpu.dot_dimension_numbers<[1], [0], [0], [1], [0, 0, 1, 1], [], []>} : vector<4x16xf32>, vector<16x396xf32>, vector<4x396xf32> -> vector<4x396xf32>
    %c0_113 = arith.constant 0 : index
    %c0_114 = arith.constant 0 : index
    %c0_115 = arith.constant 0 : index
    %107 = vector.load %arg7[%c0_113, %c0_114, %c0_115] : memref<2x396x198xf32, #tpu.memory_space<vmem>>, vector<1x396x198xf32>
    %108 = vector.shape_cast %107 : vector<1x396x198xf32> to vector<396x198xf32>
    %cst_116 = arith.constant dense<0.000000e+00> : vector<4x198xf32>
    %109 = tpu.matmul %106, %108, %cst_116 {dimension_numbers = #tpu.dot_dimension_numbers<[1], [0], [0], [1], [0, 0, 1, 1], [], []>} : vector<4x396xf32>, vector<396x198xf32>, vector<4x198xf32> -> vector<4x198xf32>
    %110 = arith.maximumf %103, %109 : vector<4x198xf32>
    %c1_117 = arith.constant 1 : index
    %c0_118 = arith.constant 0 : index
    %c0_119 = arith.constant 0 : index
    %111 = vector.load %arg7[%c1_117, %c0_118, %c0_119] : memref<2x396x198xf32, #tpu.memory_space<vmem>>, vector<1x396x198xf32>
    %112 = vector.shape_cast %111 : vector<1x396x198xf32> to vector<396x198xf32>
    %cst_120 = arith.constant dense<0.000000e+00> : vector<4x198xf32>
    %113 = tpu.matmul %106, %112, %cst_120 {dimension_numbers = #tpu.dot_dimension_numbers<[1], [0], [0], [1], [0, 0, 1, 1], [], []>} : vector<4x396xf32>, vector<396x198xf32>, vector<4x198xf32> -> vector<4x198xf32>
    %114 = arith.maximumf %110, %113 : vector<4x198xf32>
    %c0_121 = arith.constant 0 : index
    %c0_122 = arith.constant 0 : index
    %c0_123 = arith.constant 0 : index
    %115 = vector.load %arg8[%c0_121, %c0_122, %c0_123] : memref<2x2x4xf32, #tpu.memory_space<vmem>>, vector<1x2x4xf32>
    %116 = vector.shape_cast %115 : vector<1x2x4xf32> to vector<2x4xf32>
    %cst_124 = arith.constant dense<0.000000e+00> : vector<2x198xf32>
    %117 = tpu.matmul %116, %114, %cst_124 {dimension_numbers = #tpu.dot_dimension_numbers<[1], [0], [0], [1], [0, 0, 1, 1], [], []>} : vector<2x4xf32>, vector<4x198xf32>, vector<2x198xf32> -> vector<2x198xf32>
    %c0_125 = arith.constant 0 : index
    %c0_126 = arith.constant 0 : index
    %c0_127 = arith.constant 0 : index
    %118 = vector.load %arg9[%c0_125, %c0_126, %c0_127] : memref<2x198x64xf32, #tpu.memory_space<vmem>>, vector<1x198x64xf32>
    %119 = vector.shape_cast %118 : vector<1x198x64xf32> to vector<198x64xf32>
    %cst_128 = arith.constant dense<0.000000e+00> : vector<2x64xf32>
    %120 = tpu.matmul %117, %119, %cst_128 {dimension_numbers = #tpu.dot_dimension_numbers<[1], [0], [0], [1], [0, 0, 1, 1], [], []>} : vector<2x198xf32>, vector<198x64xf32>, vector<2x64xf32> -> vector<2x64xf32>
    %c1_129 = arith.constant 1 : index
    %c0_130 = arith.constant 0 : index
    %c0_131 = arith.constant 0 : index
    %121 = vector.load %arg8[%c1_129, %c0_130, %c0_131] : memref<2x2x4xf32, #tpu.memory_space<vmem>>, vector<1x2x4xf32>
    %122 = vector.shape_cast %121 : vector<1x2x4xf32> to vector<2x4xf32>
    %cst_132 = arith.constant dense<0.000000e+00> : vector<2x198xf32>
    %123 = tpu.matmul %122, %114, %cst_132 {dimension_numbers = #tpu.dot_dimension_numbers<[1], [0], [0], [1], [0, 0, 1, 1], [], []>} : vector<2x4xf32>, vector<4x198xf32>, vector<2x198xf32> -> vector<2x198xf32>
    %c1_133 = arith.constant 1 : index
    %c0_134 = arith.constant 0 : index
    %c0_135 = arith.constant 0 : index
    %124 = vector.load %arg9[%c1_133, %c0_134, %c0_135] : memref<2x198x64xf32, #tpu.memory_space<vmem>>, vector<1x198x64xf32>
    %125 = vector.shape_cast %124 : vector<1x198x64xf32> to vector<198x64xf32>
    %cst_136 = arith.constant dense<0.000000e+00> : vector<2x64xf32>
    %126 = tpu.matmul %123, %125, %cst_136 {dimension_numbers = #tpu.dot_dimension_numbers<[1], [0], [0], [1], [0, 0, 1, 1], [], []>} : vector<2x198xf32>, vector<198x64xf32>, vector<2x64xf32> -> vector<2x64xf32>
    %127 = arith.addf %120, %126 : vector<2x64xf32>
    %c0_137 = arith.constant 0 : index
    %c0_138 = arith.constant 0 : index
    %128 = vector.load %arg10[%c0_137, %c0_138] : memref<1x64xf32, #tpu.memory_space<vmem>>, vector<1x64xf32>
    %129 = vector.broadcast %128 : vector<1x64xf32> to vector<2x64xf32>
    %130 = arith.addf %127, %129 : vector<2x64xf32>
    %cst_139 = arith.constant 0.000000e+00 : f32
    %131 = vector.broadcast %cst_139 : f32 to vector<2x64xf32>
    %132 = arith.maximumf %130, %131 : vector<2x64xf32>
    %c0_140 = arith.constant 0 : index
    %c0_141 = arith.constant 0 : index
    %133 = vector.load %arg11[%c0_140, %c0_141] : memref<64x2xf32, #tpu.memory_space<vmem>>, vector<64x2xf32>
    %cst_142 = arith.constant dense<0.000000e+00> : vector<2x2xf32>
    %134 = tpu.matmul %132, %133, %cst_142 {dimension_numbers = #tpu.dot_dimension_numbers<[1], [0], [0], [1], [0, 0, 1, 1], [], []>} : vector<2x64xf32>, vector<64x2xf32>, vector<2x2xf32> -> vector<2x2xf32>
    %c0_143 = arith.constant 0 : index
    %c0_144 = arith.constant 0 : index
    %135 = vector.load %arg12[%c0_143, %c0_144] : memref<1x2xf32, #tpu.memory_space<vmem>>, vector<1x2xf32>
    %136 = vector.broadcast %135 : vector<1x2xf32> to vector<2x2xf32>
    %137 = arith.addf %134, %136 : vector<2x2xf32>
    %c0_145 = arith.constant 0 : index
    %c0_146 = arith.constant 0 : index
    %138 = vector.load %arg13[%c0_145, %c0_146] : memref<2x2xf32, #tpu.memory_space<vmem>>, vector<2x2xf32>
    tpu.vector_store %arg13[%c0_145, %c0_146], %137 {strides = array<i32>} : memref<2x2xf32, #tpu.memory_space<vmem>>, vector<2x2xf32>,
    return
  }
}

</mosaic_0001>

<llo_original>
// kernel: tile.8
$region0: #{tile.8}
  #allocation0 [shape = 's32[1]{0}', space=sflag, size = 0x4, scoped, tag = 'scoped memory for tile.8']
  %s0 = inlined_call_operand.vmem [shape: f32[18], index: 0, kind: input, shape index: {}]
  %s1 = inlined_call_operand.vmem [shape: f32[22,18], index: 1, kind: output, shape index: {}]
  // Predicated region
  $region2: #{tile.8} parent=0 // pred_check
    _
  $region3: #{tile.8} parent=0 // pred_check_branch
    %3 = sbr.rel (0) target = $region5
  $region4: #{tile.8} parent=0 // pred_region
    _
  $region5: #{tile.8} parent=0 // pred_fallthru
    _
  %v4 = vld [vmem:[%s0] ss:$0 sm:$0xff]
  %5 = vst [vmem:[%s1] sm:$0xff] %v4
  %s6 = scalar_lea.vmem %s1, 8
  %7 = vst [vmem:[%s6] sm:$0xff] %v4
  %s8 = scalar_lea.vmem %s1, 16
  %9 = vst [vmem:[%s8] sm:$0xff] %v4

// kernel: tile.9
$region0: #{tile.9}
  %s0 = inlined_call_operand.vmem [shape: f32[22,18], index: 0, kind: input, shape index: {}]
  %s1 = inlined_call_operand.vmem [shape: f32[1,396], index: 1, kind: output, shape index: {}]
  $region1: #{tile.9} parent=0
    #allocation0 [shape = 'u8[16384]{0}', space=vmem, size = 0x4000, scoped, tag = 'scoped mem for output reshape']
    %v2 = vld [vmem:[%s0] sm:$0x1]
    %vm3 = vcmask 146432
    %4 = vst.msk [vmem:[#allocation0] sm:$0x1] %vm3, %v2
    %s5 = scalar_lea.vmem %s0, 7
    %v6 = vld [vmem:[%s5] sm:$0x1]
    %s7 = scalar_lea.vmem %s0, 7
    %v8 = vld [vmem:[%s7] sm:$0x1]
    %vm9 = vcmask 15360
    %v10 = vsel %vm9, %v8, %v6
    %11 = vrot.lane.b32.xlu0 %v10, 126
    %v12 = vpop.permute.xlu0 %11
    %vm13 = vcmask 130048
    %s14 = scalar_lea.vmem [#allocation0], 8
    %15 = vst.msk [vmem:[%s14] sm:$0x1] %vm13, %v12
    %vm16 = vcmask 1048560
    %17 = vst.msk [vmem:[#allocation0] sm:$0x1] %vm16, %v12
    %s18 = scalar_lea.vmem %s0, 14
    %v19 = vld [vmem:[%s18] sm:$0x1]
    %s20 = scalar_lea.vmem %s0, 14
    %v21 = vld [vmem:[%s20] sm:$0x1]
    %vm22 = vcmask 31744
    %v23 = vsel %vm22, %v21, %v19
    %24 = vrot.lane.b32.xlu0 %v23, 124
    %v25 = vpop.permute.xlu0 %24
    %vm26 = vcmask 113664
    %s27 = scalar_lea.vmem [#allocation0], 16
    %28 = vst.msk [vmem:[%s27] sm:$0x1] %vm26, %v25
    %vm29 = vcmask 1048544
    %s30 = scalar_lea.vmem [#allocation0], 8
    %31 = vst.msk [vmem:[%s30] sm:$0x1] %vm29, %v25
    %s32 = scalar_lea.vmem %s0, 21
    %v33 = vld [vmem:[%s32] sm:$0x1]
    %s34 = scalar_lea.vmem %s0, 21
    %v35 = vld [vmem:[%s34] sm:$0x1]
    %vm36 = vcmask 48128
    %v37 = vsel %vm36, %v35, %v33
    %38 = vrot.lane.b32.xlu0 %v37, 122
    %v39 = vpop.permute.xlu0 %38
    %vm40 = vcmask 97280
    %s41 = scalar_lea.vmem [#allocation0], 24
    %42 = vst.msk [vmem:[%s41] sm:$0x1] %vm40, %v39
    %vm43 = vcmask 1048528
    %s44 = scalar_lea.vmem [#allocation0], 16
    %45 = vst.msk [vmem:[%s44] sm:$0x1] %vm43, %v39
    %s46 = scalar_lea.vmem %s0, 6
    %v47 = vld [vmem:[%s46] sm:$0x1]
    %48 = vrot.lane.b32.xlu0 %v47, 108
    %v49 = vpop.permute.xlu0 %48
    %vm50 = vcmask 1032032
    %51 = vst.msk [vmem:[#allocation0] sm:$0x1] %vm50, %v49
    %s52 = scalar_lea.vmem %s0, 13
    %v53 = vld [vmem:[%s52] sm:$0x1]
    %54 = vrot.lane.b32.xlu0 %v53, 106
    %v55 = vpop.permute.xlu0 %54
    %vm56 = vcmask 1015632
    %s57 = scalar_lea.vmem [#allocation0], 8
    %58 = vst.msk [vmem:[%s57] sm:$0x1] %vm56, %v55
    %s59 = scalar_lea.vmem %s0, 20
    %v60 = vld [vmem:[%s59] sm:$0x1]
    %61 = vrot.lane.b32.xlu0 %v60, 104
    %v62 = vpop.permute.xlu0 %61
    %vm63 = vcmask 999232
    %s64 = scalar_lea.vmem [#allocation0], 16
    %65 = vst.msk [vmem:[%s64] sm:$0x1] %vm63, %v62
    %s66 = scalar_lea.vmem %s0, 5
    %v67 = vld [vmem:[%s66] sm:$0x1]
    %68 = vrot.lane.b32.xlu0 %v67, 90
    %v69 = vpop.permute.xlu0 %68
    %vm70 = vcmask 884432
    %71 = vst.msk [vmem:[#allocation0] sm:$0x1] %vm70, %v69
    %s72 = scalar_lea.vmem %s0, 12
    %v73 = vld [vmem:[%s72] sm:$0x1]
    %74 = vrot.lane.b32.xlu0 %v73, 88
    %v75 = vpop.permute.xlu0 %74
    %vm76 = vcmask 868032
    %s77 = scalar_lea.vmem [#allocation0], 8
    %78 = vst.msk [vmem:[%s77] sm:$0x1] %vm76, %v75
    %s79 = scalar_lea.vmem %s0, 19
    %v80 = vld [vmem:[%s79] sm:$0x1]
    %81 = vrot.lane.b32.xlu0 %v80, 86
    %v82 = vpop.permute.xlu0 %81
    %vm83 = vcmask 851632
    %s84 = scalar_lea.vmem [#allocation0], 16
    %85 = vst.msk [vmem:[%s84] sm:$0x1] %vm83, %v82
    %s86 = scalar_lea.vmem %s0, 4
    %v87 = vld [vmem:[%s86] sm:$0x1]
    %88 = vrot.lane.b32.xlu0 %v87, 72
    %v89 = vpop.permute.xlu0 %88
    %vm90 = vcmask 736832
    %91 = vst.msk [vmem:[#allocation0] sm:$0x1] %vm90, %v89
    %s92 = scalar_lea.vmem %s0, 11
    %v93 = vld [vmem:[%s92] sm:$0x1]
    %94 = vrot.lane.b32.xlu0 %v93, 70
    %v95 = vpop.permute.xlu0 %94
    %vm96 = vcmask 720432
    %s97 = scalar_lea.vmem [#allocation0], 8
    %98 = vst.msk [vmem:[%s97] sm:$0x1] %vm96, %v95
    %s99 = scalar_lea.vmem %s0, 18
    %v100 = vld [vmem:[%s99] sm:$0x1]
    %101 = vrot.lane.b32.xlu0 %v100, 68
    %v102 = vpop.permute.xlu0 %101
    %vm103 = vcmask 704032
    %s104 = scalar_lea.vmem [#allocation0], 16
    %105 = vst.msk [vmem:[%s104] sm:$0x1] %vm103, %v102
    %s106 = scalar_lea.vmem %s0, 3
    %v107 = vld [vmem:[%s106] sm:$0x1]
    %108 = vrot.lane.b32.xlu0 %v107, 54
    %v109 = vpop.permute.xlu0 %108
    %vm110 = vcmask 589232
    %111 = vst.msk [vmem:[#allocation0] sm:$0x1] %vm110, %v109
    %s112 = scalar_lea.vmem %s0, 10
    %v113 = vld [vmem:[%s112] sm:$0x1]
    %114 = vrot.lane.b32.xlu0 %v113, 52
    %v115 = vpop.permute.xlu0 %114
    %vm116 = vcmask 572832
    %s117 = scalar_lea.vmem [#allocation0], 8
    %118 = vst.msk [vmem:[%s117] sm:$0x1] %vm116, %v115
    %s119 = scalar_lea.vmem %s0, 17
    %v120 = vld [vmem:[%s119] sm:$0x1]
    %121 = vrot.lane.b32.xlu0 %v120, 50
    %v122 = vpop.permute.xlu0 %121
    %vm123 = vcmask 556432
    %s124 = scalar_lea.vmem [#allocation0], 16
    %125 = vst.msk [vmem:[%s124] sm:$0x1] %vm123, %v122
    %s126 = scalar_lea.vmem %s0, 2
    %v127 = vld [vmem:[%s126] sm:$0x1]
    %128 = vrot.lane.b32.xlu0 %v127, 36
    %v129 = vpop.permute.xlu0 %128
    %vm130 = vcmask 441632
    %131 = vst.msk [vmem:[#allocation0] sm:$0x1] %vm130, %v129
    %s132 = scalar_lea.vmem %s0, 9
    %v133 = vld [vmem:[%s132] sm:$0x1]
    %134 = vrot.lane.b32.xlu0 %v133, 34
    %v135 = vpop.permute.xlu0 %134
    %vm136 = vcmask 425232
    %s137 = scalar_lea.vmem [#allocation0], 8
    %138 = vst.msk [vmem:[%s137] sm:$0x1] %vm136, %v135
    %s139 = scalar_lea.vmem %s0, 16
    %v140 = vld [vmem:[%s139] sm:$0x1]
    %141 = vrot.lane.b32.xlu0 %v140, 32
    %v142 = vpop.permute.xlu0 %141
    %vm143 = vcmask 408832
    %s144 = scalar_lea.vmem [#allocation0], 16
    %145 = vst.msk [vmem:[%s144] sm:$0x1] %vm143, %v142
    %s146 = scalar_lea.vmem %s0, 1
    %v147 = vld [vmem:[%s146] sm:$0x1]
    %148 = vrot.lane.b32.xlu0 %v147, 18
    %v149 = vpop.permute.xlu0 %148
    %vm150 = vcmask 294032
    %151 = vst.msk [vmem:[#allocation0] sm:$0x1] %vm150, %v149
    %s152 = scalar_lea.vmem %s0, 8
    %v153 = vld [vmem:[%s152] sm:$0x1]
    %154 = vrot.lane.b32.xlu0 %v153, 16
    %v155 = vpop.permute.xlu0 %154
    %vm156 = vcmask 277632
    %s157 = scalar_lea.vmem [#allocation0], 8
    %158 = vst.msk [vmem:[%s157] sm:$0x1] %vm156, %v155
    %s159 = scalar_lea.vmem %s0, 15
    %v160 = vld [vmem:[%s159] sm:$0x1]
    %161 = vrot.lane.b32.xlu0 %v160, 14
    %v162 = vpop.permute.xlu0 %161
    %vm163 = vcmask 261232
    %s164 = scalar_lea.vmem [#allocation0], 16
    %165 = vst.msk [vmem:[%s164] sm:$0x1] %vm163, %v162
    %s167 = sshll.u32 1, 1
    %s168 = ssub.s32 %s167, 1
    %v170 = vld [vmem:[#allocation0] sm:%s168]
    %s171 = sshll.u32 1, 1
    %s172 = ssub.s32 %s171, 1
    %173 = vst [vmem:[%s1] sm:%s172] %v170
    %s174 = scalar_lea.vmem [#allocation0], 8
    %v175 = vld [vmem:[%s174] sm:%s168]
    %s176 = sshll.u32 1, 1
    %s177 = ssub.s32 %s176, 1
    %s178 = scalar_lea.vmem %s1, 1
    %179 = vst [vmem:[%s178] sm:%s177] %v175
    %s180 = scalar_lea.vmem [#allocation0], 16
    %v181 = vld [vmem:[%s180] sm:%s168]
    %s182 = sshll.u32 1, 1
    %s183 = ssub.s32 %s182, 1
    %s184 = smul.addr 1, 2
    %s185 = scalar_lea.vmem %s1, %s184
    %186 = vst [vmem:[%s185] sm:%s183] %v181
    %s187 = scalar_lea.vmem [#allocation0], 24
    %v188 = vld [vmem:[%s187] sm:%s168]
    %s189 = sshll.u32 1, 1
    %s190 = ssub.s32 %s189, 1
    %s191 = smul.addr 1, 3
    %s192 = scalar_lea.vmem %s1, %s191
    %193 = vst [vmem:[%s192] sm:%s190] %v188

// kernel: smallnet_forward.1
$region0: #{smallnet_forward.1}
  #allocation0 [shape = 'u32[]', space=smem, size = 0x4, offset = 0x4, fixed_abs, tag = 'smem constant byte address 0x4 - core index']
  #allocation1 [shape = 'u32[144,128]{1,0:T(1,128)}', space=vmem, size = 0x12000, scoped, tag = 'internal scratch']
  %s0 = inlined_call_operand.vmem [shape: f32[400,110], index: 0, kind: input, shape index: {}]
  %s1 = inlined_call_operand.vmem [shape: f32[110,22], index: 1, kind: input, shape index: {}]
  %s2 = inlined_call_operand.vmem [shape: f32[16,400], index: 2, kind: input, shape index: {}]
  %s3 = inlined_call_operand.vmem [shape: f32[9,16,16], index: 3, kind: input, shape index: {}]
  %s4 = inlined_call_operand.vmem [shape: f32[9,22,396], index: 4, kind: input, shape index: {}]
  %s5 = inlined_call_operand.vmem [shape: f32[1,396], index: 5, kind: input, shape index: {}]
  %s6 = inlined_call_operand.vmem [shape: f32[4,4,16], index: 6, kind: input, shape index: {}]
  %s7 = inlined_call_operand.vmem [shape: f32[2,396,198], index: 7, kind: input, shape index: {}]
  %s8 = inlined_call_operand.vmem [shape: f32[2,2,4], index: 8, kind: input, shape index: {}]
  %s9 = inlined_call_operand.vmem [shape: f32[2,198,64], index: 9, kind: input, shape index: {}]
  %s10 = inlined_call_operand.vmem [shape: f32[1,64], index: 10, kind: input, shape index: {}]
  %s11 = inlined_call_operand.vmem [shape: f32[64,2], index: 11, kind: input, shape index: {}]
  %s12 = inlined_call_operand.vmem [shape: f32[1,2], index: 12, kind: input, shape index: {}]
  %s13 = inlined_call_operand.hbm [shape: f32[2,2], index: 13, kind: output, shape index: {}]
  %s14 = sld [smem:[#allocation0]]
  $region62: #{smallnet_forward.1} parent=0
    _
  %s16 = ssub.s32 1, %s14
  %s17 = scalar_select 0, %s16, %s14
  $region1: #{smallnet_forward.1} parent=0
    #allocation2 [shape = 'u8[1024]{0}', space=vmem, size = 0x400, scoped, tag = 'output window, operand 0, single buffered']
    #allocation3 [shape = 's32[1]{0}', space=sflag, size = 0x4, scoped, tag = 'scoped memory for smallnet_forward.1']
    %18 = vsyncpa [#allocation3], 0
    // Predicated region
    $region2: #{smallnet_forward.1} parent=1 // pred_check
      _
    $region3: #{smallnet_forward.1} parent=1 // pred_check_branch
      %20 = sbr.rel (0) target = $region5
    $region4: #{smallnet_forward.1} parent=1 // pred_region
      _
    $region5: #{smallnet_forward.1} parent=1 // pred_fallthru
      _
    // Predicated region
    $region6: #{smallnet_forward.1} parent=1 // pred_check
      _
    $region7: #{smallnet_forward.1} parent=1 // pred_check_branch
      %22 = sbr.rel (0) target = $region9
    $region8: #{smallnet_forward.1} parent=1 // pred_region
      _
    $region9: #{smallnet_forward.1} parent=1 // pred_fallthru
      _
    // Predicated region
    $region10: #{smallnet_forward.1} parent=1 // pred_check
      _
    $region11: #{smallnet_forward.1} parent=1 // pred_check_branch
      %24 = sbr.rel (0) target = $region13
    $region12: #{smallnet_forward.1} parent=1 // pred_region
      _
    $region13: #{smallnet_forward.1} parent=1 // pred_fallthru
      _
    // Predicated region
    $region14: #{smallnet_forward.1} parent=1 // pred_check
      _
    $region15: #{smallnet_forward.1} parent=1 // pred_check_branch
      %26 = sbr.rel (0) target = $region17
    $region16: #{smallnet_forward.1} parent=1 // pred_region
      _
    $region17: #{smallnet_forward.1} parent=1 // pred_fallthru
      _
    // Predicated region
    $region18: #{smallnet_forward.1} parent=1 // pred_check
      _
    $region19: #{smallnet_forward.1} parent=1 // pred_check_branch
      %28 = sbr.rel (0) target = $region21
    $region20: #{smallnet_forward.1} parent=1 // pred_region
      _
    $region21: #{smallnet_forward.1} parent=1 // pred_fallthru
      _
    // Predicated region
    $region22: #{smallnet_forward.1} parent=1 // pred_check
      _
    $region23: #{smallnet_forward.1} parent=1 // pred_check_branch
      %30 = sbr.rel (0) target = $region25
    $region24: #{smallnet_forward.1} parent=1 // pred_region
      _
    $region25: #{smallnet_forward.1} parent=1 // pred_fallthru
      _
    // Predicated region
    $region26: #{smallnet_forward.1} parent=1 // pred_check
      _
    $region27: #{smallnet_forward.1} parent=1 // pred_check_branch
      %32 = sbr.rel (0) target = $region29
    $region28: #{smallnet_forward.1} parent=1 // pred_region
      _
    $region29: #{smallnet_forward.1} parent=1 // pred_fallthru
      _
    // Predicated region
    $region30: #{smallnet_forward.1} parent=1 // pred_check
      _
    $region31: #{smallnet_forward.1} parent=1 // pred_check_branch
      %34 = sbr.rel (0) target = $region33
    $region32: #{smallnet_forward.1} parent=1 // pred_region
      _
    $region33: #{smallnet_forward.1} parent=1 // pred_fallthru
      _
    // Predicated region
    $region34: #{smallnet_forward.1} parent=1 // pred_check
      _
    $region35: #{smallnet_forward.1} parent=1 // pred_check_branch
      %36 = sbr.rel (0) target = $region37
    $region36: #{smallnet_forward.1} parent=1 // pred_region
      _
    $region37: #{smallnet_forward.1} parent=1 // pred_fallthru
      _
    // Predicated region
    $region38: #{smallnet_forward.1} parent=1 // pred_check
      _
    $region39: #{smallnet_forward.1} parent=1 // pred_check_branch
      %38 = sbr.rel (0) target = $region41
    $region40: #{smallnet_forward.1} parent=1 // pred_region
      _
    $region41: #{smallnet_forward.1} parent=1 // pred_fallthru
      _
    // Predicated region
    $region42: #{smallnet_forward.1} parent=1 // pred_check
      _
    $region43: #{smallnet_forward.1} parent=1 // pred_check_branch
      %40 = sbr.rel (0) target = $region45
    $region44: #{smallnet_forward.1} parent=1 // pred_region
      _
    $region45: #{smallnet_forward.1} parent=1 // pred_fallthru
      _
    // Predicated region
    $region46: #{smallnet_forward.1} parent=1 // pred_check
      _
    $region47: #{smallnet_forward.1} parent=1 // pred_check_branch
      %42 = sbr.rel (0) target = $region49
    $region48: #{smallnet_forward.1} parent=1 // pred_region
      _
    $region49: #{smallnet_forward.1} parent=1 // pred_fallthru
      _
    // Predicated region
    $region50: #{smallnet_forward.1} parent=1 // pred_check
      _
    $region51: #{smallnet_forward.1} parent=1 // pred_check_branch
      %44 = sbr.rel (0) target = $region53
    $region52: #{smallnet_forward.1} parent=1 // pred_region
      _
    $region53: #{smallnet_forward.1} parent=1 // pred_fallthru
      _
    %v45 = vld [vmem:[%s2] sm:$0xff]
    %v46 = vld [vmem:[%s2 + $0x8] sm:$0xff]
    %v47 = vld [vmem:[%s2 + $0x10] sm:$0xff]
    %v48 = vld [vmem:[%s2 + $0x18] sm:$0xff]
    %v49 = vld [vmem:[%s2 + $0x20] sm:$0xff]
    %v50 = vld [vmem:[%s2 + $0x28] sm:$0xff]
    %v51 = vld [vmem:[%s2 + $0x30] sm:$0xff]
    %v52 = vld [vmem:[%s2 + $0x38] sm:$0xff]
    %v53 = vld [vmem:[%s0] sm:$0xff]
    %v54 = vld [vmem:[%s0 + $0x8] sm:$0xff]
    %v55 = vld [vmem:[%s0 + $0x10] sm:$0xff]
    %v56 = vld [vmem:[%s0 + $0x18] sm:$0xff]
    %v57 = vld [vmem:[%s0 + $0x20] sm:$0xff]
    %v58 = vld [vmem:[%s0 + $0x28] sm:$0xff]
    %v59 = vld [vmem:[%s0 + $0x30] sm:$0xff]
    %v60 = vld [vmem:[%s0 + $0x38] sm:$0xff]
    %v61 = vld [vmem:[%s0 + $0x40] sm:$0xff]
    %v62 = vld [vmem:[%s0 + $0x48] sm:$0xff]
    %v63 = vld [vmem:[%s0 + $0x50] sm:$0xff]
    %v64 = vld [vmem:[%s0 + $0x58] sm:$0xff]
    %v65 = vld [vmem:[%s0 + $0x60] sm:$0xff]
    %v66 = vld [vmem:[%s0 + $0x68] sm:$0xff]
    %v67 = vld [vmem:[%s0 + $0x70] sm:$0xff]
    %v68 = vld [vmem:[%s0 + $0x78] sm:$0xff]
    %v69 = vld [vmem:[%s0 + $0x80] sm:$0xff]
    %v70 = vld [vmem:[%s0 + $0x88] sm:$0xff]
    %v71 = vld [vmem:[%s0 + $0x90] sm:$0xff]
    %v72 = vld [vmem:[%s0 + $0x98] sm:$0xff]
    %v73 = vld [vmem:[%s0 + $0xa0] sm:$0xff]
    %v74 = vld [vmem:[%s0 + $0xa8] sm:$0xff]
    %v75 = vld [vmem:[%s0 + $0xb0] sm:$0xff]
    %v76 = vld [vmem:[%s0 + $0xb8] sm:$0xff]
    %v77 = vld [vmem:[%s0 + $0xc0] sm:$0xff]
    %v78 = vld [vmem:[%s0 + $0xc8] sm:$0xff]
    %v79 = vld [vmem:[%s0 + $0xd0] sm:$0xff]
    %v80 = vld [vmem:[%s0 + $0xd8] sm:$0xff]
    %v81 = vld [vmem:[%s0 + $0xe0] sm:$0xff]
    %v82 = vld [vmem:[%s0 + $0xe8] sm:$0xff]
    %v83 = vld [vmem:[%s0 + $0xf0] sm:$0xff]
    %v84 = vld [vmem:[%s0 + $0xf8] sm:$0xff]
    %v85 = vld [vmem:[%s0 + $0x100] sm:$0xff]
    %v86 = vld [vmem:[%s0 + $0x108] sm:$0xff]
    %v87 = vld [vmem:[%s0 + $0x110] sm:$0xff]
    %v88 = vld [vmem:[%s0 + $0x118] sm:$0xff]
    %v89 = vld [vmem:[%s0 + $0x120] sm:$0xff]
    %v90 = vld [vmem:[%s0 + $0x128] sm:$0xff]
    %v91 = vld [vmem:[%s0 + $0x130] sm:$0xff]
    %v92 = vld [vmem:[%s0 + $0x138] sm:$0xff]
    %v93 = vld [vmem:[%s0 + $0x140] sm:$0xff]
    %v94 = vld [vmem:[%s0 + $0x148] sm:$0xff]
    %v95 = vld [vmem:[%s0 + $0x150] sm:$0xff]
    %v96 = vld [vmem:[%s0 + $0x158] sm:$0xff]
    %v97 = vld [vmem:[%s0 + $0x160] sm:$0xff]
    %v98 = vld [vmem:[%s0 + $0x168] sm:$0xff]
    %v99 = vld [vmem:[%s0 + $0x170] sm:$0xff]
    %v100 = vld [vmem:[%s0 + $0x178] sm:$0xff]
    %v101 = vld [vmem:[%s0 + $0x180] sm:$0xff]
    %v102 = vld [vmem:[%s0 + $0x188] sm:$0xff]
    %vm103 = vcmask 130048
    %v105 = vsel %vm103, %v48, 0
    %v108 = vsel %vm103, %v52, 0
    %110 = vmatprep.subr.mxu0 0.0
    %111 = vmatpush1.msra.mxu0 %v68
    %112 = vmatprep.subr.mxu0 0.0
    %113 = vmatpush1.msra.mxu0 %v67
    %114 = vmatprep.subr.mxu0 0.0
    %115 = vmatpush1.msra.mxu0 %v66
    %116 = vmatprep.subr.mxu0 0.0
    %117 = vmatpush1.msra.mxu0 %v65
    %118 = vmatprep.subr.mxu0 0.0
    %119 = vmatpush1.msra.mxu0 %v64
    %120 = vmatprep.subr.mxu0 0.0
    %121 = vmatpush1.msra.mxu0 %v63
    %122 = vmatprep.subr.mxu0 0.0
    %123 = vmatpush1.msra.mxu0 %v62
    %124 = vmatprep.subr.mxu0 0.0
    %125 = vmatpush1.msra.mxu0 %v61
    %126 = vmatprep.subr.mxu0 0.0
    %127 = vmatpush1.msra.mxu0 %v60
    %128 = vmatprep.subr.mxu0 0.0
    %129 = vmatpush1.msra.mxu0 %v59
    %130 = vmatprep.subr.mxu0 0.0
    %131 = vmatpush1.msra.mxu0 %v58
    %132 = vmatprep.subr.mxu0 0.0
    %133 = vmatpush1.msra.mxu0 %v57
    %134 = vmatprep.subr.mxu0 0.0
    %135 = vmatpush1.msra.mxu0 %v56
    %136 = vmatprep.subr.mxu0 0.0
    %137 = vmatpush1.msra.mxu0 %v55
    %138 = vmatprep.subr.mxu0 0.0
    %139 = vmatpush1.msra.mxu0 %v54
    %140 = vmatprep.subr.mxu0 0.0
    %141 = vmatpush1.msra.mxu0 %v53
    %142 = vmatprep.subr.mxu0 0.0
    %143 = vmatpush2.msra.mxu0 %v84
    %144 = vmatprep.subr.mxu0 0.0
    %145 = vmatpush2.msra.mxu0 %v83
    %146 = vmatprep.subr.mxu0 0.0
    %147 = vmatpush2.msra.mxu0 %v82
    %148 = vmatprep.subr.mxu0 0.0
    %149 = vmatpush2.msra.mxu0 %v81
    %150 = vmatprep.subr.mxu0 0.0
    %151 = vmatpush2.msra.mxu0 %v80
    %152 = vmatprep.subr.mxu0 0.0
    %153 = vmatpush2.msra.mxu0 %v79
    %154 = vmatprep.subr.mxu0 0.0
    %155 = vmatpush2.msra.mxu0 %v78
    %156 = vmatprep.subr.mxu0 0.0
    %157 = vmatpush2.msra.mxu0 %v77
    %158 = vmatprep.subr.mxu0 0.0
    %159 = vmatpush2.msra.mxu0 %v76
    %160 = vmatprep.subr.mxu0 0.0
    %161 = vmatpush2.msra.mxu0 %v75
    %162 = vmatprep.subr.mxu0 0.0
    %163 = vmatpush2.msra.mxu0 %v74
    %164 = vmatprep.subr.mxu0 0.0
    %165 = vmatpush2.msra.mxu0 %v73
    %166 = vmatprep.subr.mxu0 0.0
    %167 = vmatpush2.msra.mxu0 %v72
    %168 = vmatprep.subr.mxu0 0.0
    %169 = vmatpush2.msra.mxu0 %v71
    %170 = vmatprep.subr.mxu0 0.0
    %171 = vmatpush2.msra.mxu0 %v70
    %172 = vmatprep.subr.mxu0 0.0
    %173 = vmatpush2.msra.mxu0 %v69
    %174 = vmatprep.mubr.f32.mxu0 %v46
    %175 = vmatmul.mubr.f32.gmra.mxu0 %v45
    %v176 = vpop.f32.mrf.mxu0
    %v177 = vadd.f32 0.0, %v176
    %v178 = vpop.f32.mrf.mxu0
    %179 = vmatprep.mubr.f32.mxu0 %v50
    %180 = vmatmul.mubr.f32.gmra.mxu0 %v49
    %v181 = vpop.f32.mrf.mxu0
    %v182 = vadd.f32 0.0, %v181
    %v183 = vpop.f32.mrf.mxu0
    %184 = vdwg.mxu0
    %185 = vmatprep.subr.mxu0 0.0
    %186 = vmatpush1.msra.mxu0 %v100
    %187 = vmatprep.subr.mxu0 0.0
    %188 = vmatpush1.msra.mxu0 %v99
    %189 = vmatprep.subr.mxu0 0.0
    %190 = vmatpush1.msra.mxu0 %v98
    %191 = vmatprep.subr.mxu0 0.0
    %192 = vmatpush1.msra.mxu0 %v97
    %193 = vmatprep.subr.mxu0 0.0
    %194 = vmatpush1.msra.mxu0 %v96
    %195 = vmatprep.subr.mxu0 0.0
    %196 = vmatpush1.msra.mxu0 %v95
    %197 = vmatprep.subr.mxu0 0.0
    %198 = vmatpush1.msra.mxu0 %v94
    %199 = vmatprep.subr.mxu0 0.0
    %200 = vmatpush1.msra.mxu0 %v93
    %201 = vmatprep.subr.mxu0 0.0
    %202 = vmatpush1.msra.mxu0 %v92
    %203 = vmatprep.subr.mxu0 0.0
    %204 = vmatpush1.msra.mxu0 %v91
    %205 = vmatprep.subr.mxu0 0.0
    %206 = vmatpush1.msra.mxu0 %v90
    %207 = vmatprep.subr.mxu0 0.0
    %208 = vmatpush1.msra.mxu0 %v89
    %209 = vmatprep.subr.mxu0 0.0
    %210 = vmatpush1.msra.mxu0 %v88
    %211 = vmatprep.subr.mxu0 0.0
    %212 = vmatpush1.msra.mxu0 %v87
    %213 = vmatprep.subr.mxu0 0.0
    %214 = vmatpush1.msra.mxu0 %v86
    %215 = vmatprep.subr.mxu0 0.0
    %216 = vmatpush1.msra.mxu0 %v85
    %217 = vmatprep.subr.mxu0 0.0
    %218 = vmatpush2.msra.mxu0 0.0
    %219 = vmatprep.subr.mxu0 0.0
    %220 = vmatpush2.msra.mxu0 0.0
    %221 = vmatprep.subr.mxu0 0.0
    %222 = vmatpush2.msra.mxu0 0.0
    %223 = vmatprep.subr.mxu0 0.0
    %224 = vmatpush2.msra.mxu0 0.0
    %225 = vmatprep.subr.mxu0 0.0
    %226 = vmatpush2.msra.mxu0 0.0
    %227 = vmatprep.subr.mxu0 0.0
    %228 = vmatpush2.msra.mxu0 0.0
    %229 = vmatprep.subr.mxu0 0.0
    %230 = vmatpush2.msra.mxu0 0.0
    %231 = vmatprep.subr.mxu0 0.0
    %232 = vmatpush2.msra.mxu0 0.0
    %233 = vmatprep.subr.mxu0 0.0
    %234 = vmatpush2.msra.mxu0 0.0
    %235 = vmatprep.subr.mxu0 0.0
    %236 = vmatpush2.msra.mxu0 0.0
    %237 = vmatprep.subr.mxu0 0.0
    %238 = vmatpush2.msra.mxu0 0.0
    %239 = vmatprep.subr.mxu0 0.0
    %240 = vmatpush2.msra.mxu0 0.0
    %241 = vmatprep.subr.mxu0 0.0
    %242 = vmatpush2.msra.mxu0 0.0
    %243 = vmatprep.subr.mxu0 0.0
    %244 = vmatpush2.msra.mxu0 0.0
    %245 = vmatprep.subr.mxu0 0.0
    %246 = vmatpush2.msra.mxu0 %v102
    %247 = vmatprep.subr.mxu0 0.0
    %248 = vmatpush2.msra.mxu0 %v101
    %249 = vmatprep.mubr.f32.mxu0 %v105
    %250 = vmatmul.mubr.f32.gmra.mxu0 %v47
    %v251 = vpop.f32.mrf.mxu0
    %v252 = vadd.f32 %v177, %v251
    %v253 = vpop.f32.mrf.mxu0
    %254 = vmatprep.mubr.f32.mxu0 %v108
    %255 = vmatmul.mubr.f32.gmra.mxu0 %v51
    %v256 = vpop.f32.mrf.mxu0
    %v257 = vadd.f32 %v182, %v256
    %v258 = vpop.f32.mrf.mxu0
    %259 = vdwg.mxu0
    %v260 = vld [vmem:[%s1] sm:$0xff]
    %v261 = vld [vmem:[%s1 + $0x8] sm:$0xff]
    %v262 = vld [vmem:[%s1 + $0x10] sm:$0xff]
    %v263 = vld [vmem:[%s1 + $0x18] sm:$0xff]
    %v264 = vld [vmem:[%s1 + $0x20] sm:$0xff]
    %v265 = vld [vmem:[%s1 + $0x28] sm:$0xff]
    %v266 = vld [vmem:[%s1 + $0x30] sm:$0xff]
    %v267 = vld [vmem:[%s1 + $0x38] sm:$0xff]
    %v268 = vld [vmem:[%s1 + $0x40] sm:$0xff]
    %v269 = vld [vmem:[%s1 + $0x48] sm:$0xff]
    %v270 = vld [vmem:[%s1 + $0x50] sm:$0xff]
    %v271 = vld [vmem:[%s1 + $0x58] sm:$0xff]
    %v272 = vld [vmem:[%s1 + $0x60] sm:$0xff]
    %v273 = vld [vmem:[%s1 + $0x68] sm:$0x3f]
    %vm274 = vcmask 900096
    %v276 = vsel %vm274, %v252, 0
    %v279 = vsel %vm274, %v257, 0
    %vm281 = vcmask 1045504
    %v283 = vsel %vm281, %v273, 0
    %285 = vmatprep.subr.mxu0 0.0
    %286 = vmatpush1.msra.mxu0 0.0
    %287 = vmatprep.subr.mxu0 0.0
    %288 = vmatpush1.msra.mxu0 0.0
    %289 = vmatprep.subr.mxu0 0.0
    %290 = vmatpush1.msra.mxu0 %v283
    %291 = vmatprep.subr.mxu0 0.0
    %292 = vmatpush1.msra.mxu0 %v272
    %293 = vmatprep.subr.mxu0 0.0
    %294 = vmatpush1.msra.mxu0 %v271
    %295 = vmatprep.subr.mxu0 0.0
    %296 = vmatpush1.msra.mxu0 %v270
    %297 = vmatprep.subr.mxu0 0.0
    %298 = vmatpush1.msra.mxu0 %v269
    %299 = vmatprep.subr.mxu0 0.0
    %300 = vmatpush1.msra.mxu0 %v268
    %301 = vmatprep.subr.mxu0 0.0
    %302 = vmatpush1.msra.mxu0 %v267
    %303 = vmatprep.subr.mxu0 0.0
    %304 = vmatpush1.msra.mxu0 %v266
    %305 = vmatprep.subr.mxu0 0.0
    %306 = vmatpush1.msra.mxu0 %v265
    %307 = vmatprep.subr.mxu0 0.0
    %308 = vmatpush1.msra.mxu0 %v264
    %309 = vmatprep.subr.mxu0 0.0
    %310 = vmatpush1.msra.mxu0 %v263
    %311 = vmatprep.subr.mxu0 0.0
    %312 = vmatpush1.msra.mxu0 %v262
    %313 = vmatprep.subr.mxu0 0.0
    %314 = vmatpush1.msra.mxu0 %v261
    %315 = vmatprep.subr.mxu0 0.0
    %316 = vmatpush1.msra.mxu0 %v260
    %317 = vmatprep.subr.mxu0 0.0
    %318 = vmatpush2.msra.mxu0 0.0
    %319 = vmatprep.subr.mxu0 0.0
    %320 = vmatpush2.msra.mxu0 0.0
    %321 = vmatprep.subr.mxu0 0.0
    %322 = vmatpush2.msra.mxu0 0.0
    %323 = vmatprep.subr.mxu0 0.0
    %324 = vmatpush2.msra.mxu0 0.0
    %325 = vmatprep.subr.mxu0 0.0
    %326 = vmatpush2.msra.mxu0 0.0
    %327 = vmatprep.subr.mxu0 0.0
    %328 = vmatpush2.msra.mxu0 0.0
    %329 = vmatprep.subr.mxu0 0.0
    %330 = vmatpush2.msra.mxu0 0.0
    %331 = vmatprep.subr.mxu0 0.0
    %332 = vmatpush2.msra.mxu0 0.0
    %333 = vmatprep.subr.mxu0 0.0
    %334 = vmatpush2.msra.mxu0 0.0
    %335 = vmatprep.subr.mxu0 0.0
    %336 = vmatpush2.msra.mxu0 0.0
    %337 = vmatprep.subr.mxu0 0.0
    %338 = vmatpush2.msra.mxu0 0.0
    %339 = vmatprep.subr.mxu0 0.0
    %340 = vmatpush2.msra.mxu0 0.0
    %341 = vmatprep.subr.mxu0 0.0
    %342 = vmatpush2.msra.mxu0 0.0
    %343 = vmatprep.subr.mxu0 0.0
    %344 = vmatpush2.msra.mxu0 0.0
    %345 = vmatprep.subr.mxu0 0.0
    %346 = vmatpush2.msra.mxu0 0.0
    %347 = vmatprep.subr.mxu0 0.0
    %348 = vmatpush2.msra.mxu0 0.0
    %349 = vmatprep.mubr.f32.mxu0 0.0
    %350 = vmatmul.mubr.f32.gmra.mxu0 %v276
    %v351 = vpop.f32.mrf.mxu0
    %v352 = vadd.f32 0.0, %v351
    %v353 = vpop.f32.mrf.mxu0
    %354 = vmatprep.mubr.f32.mxu0 0.0
    %355 = vmatmul.mubr.f32.gmra.mxu0 %v279
    %v356 = vpop.f32.mrf.mxu0
    %v357 = vadd.f32 0.0, %v356
    %v358 = vpop.f32.mrf.mxu0
    %359 = vdwg.mxu0
    %v360 = vld [vmem:[%s3] sm:$0xff]
    %v361 = vld [vmem:[%s3 + $0x8] sm:$0xff]
    %v363 = vsel %vm103, %v360, 0
    %v366 = vsel %vm103, %v361, 0
    %368 = vmatprep.subr.mxu0 0.0
    %369 = vmatpush1.msra.mxu0 0.0
    %370 = vmatprep.subr.mxu0 0.0
    %371 = vmatpush1.msra.mxu0 0.0
    %372 = vmatprep.subr.mxu0 0.0
    %373 = vmatpush1.msra.mxu0 0.0
    %374 = vmatprep.subr.mxu0 0.0
    %375 = vmatpush1.msra.mxu0 0.0
    %376 = vmatprep.subr.mxu0 0.0
    %377 = vmatpush1.msra.mxu0 0.0
    %378 = vmatprep.subr.mxu0 0.0
    %379 = vmatpush1.msra.mxu0 0.0
    %380 = vmatprep.subr.mxu0 0.0
    %381 = vmatpush1.msra.mxu0 0.0
    %382 = vmatprep.subr.mxu0 0.0
    %383 = vmatpush1.msra.mxu0 0.0
    %384 = vmatprep.subr.mxu0 0.0
    %385 = vmatpush1.msra.mxu0 0.0
    %386 = vmatprep.subr.mxu0 0.0
    %387 = vmatpush1.msra.mxu0 0.0
    %388 = vmatprep.subr.mxu0 0.0
    %389 = vmatpush1.msra.mxu0 0.0
    %390 = vmatprep.subr.mxu0 0.0
    %391 = vmatpush1.msra.mxu0 0.0
    %392 = vmatprep.subr.mxu0 0.0
    %393 = vmatpush1.msra.mxu0 0.0
    %394 = vmatprep.subr.mxu0 0.0
    %395 = vmatpush1.msra.mxu0 0.0
    %396 = vmatprep.subr.mxu0 0.0
    %397 = vmatpush1.msra.mxu0 %v357
    %398 = vmatprep.subr.mxu0 0.0
    %399 = vmatpush1.msra.mxu0 %v352
    %400 = vmatprep.subr.mxu0 0.0
    %401 = vmatpush2.msra.mxu0 0.0
    %402 = vmatprep.subr.mxu0 0.0
    %403 = vmatpush2.msra.mxu0 0.0
    %404 = vmatprep.subr.mxu0 0.0
    %405 = vmatpush2.msra.mxu0 0.0
    %406 = vmatprep.subr.mxu0 0.0
    %407 = vmatpush2.msra.mxu0 0.0
    %408 = vmatprep.subr.mxu0 0.0
    %409 = vmatpush2.msra.mxu0 0.0
    %410 = vmatprep.subr.mxu0 0.0
    %411 = vmatpush2.msra.mxu0 0.0
    %412 = vmatprep.subr.mxu0 0.0
    %413 = vmatpush2.msra.mxu0 0.0
    %414 = vmatprep.subr.mxu0 0.0
    %415 = vmatpush2.msra.mxu0 0.0
    %416 = vmatprep.subr.mxu0 0.0
    %417 = vmatpush2.msra.mxu0 0.0
    %418 = vmatprep.subr.mxu0 0.0
    %419 = vmatpush2.msra.mxu0 0.0
    %420 = vmatprep.subr.mxu0 0.0
    %421 = vmatpush2.msra.mxu0 0.0
    %422 = vmatprep.subr.mxu0 0.0
    %423 = vmatpush2.msra.mxu0 0.0
    %424 = vmatprep.subr.mxu0 0.0
    %425 = vmatpush2.msra.mxu0 0.0
    %426 = vmatprep.subr.mxu0 0.0
    %427 = vmatpush2.msra.mxu0 0.0
    %428 = vmatprep.subr.mxu0 0.0
    %429 = vmatpush2.msra.mxu0 0.0
    %430 = vmatprep.subr.mxu0 0.0
    %431 = vmatpush2.msra.mxu0 0.0
    %432 = vmatprep.mubr.f32.mxu0 0.0
    %433 = vmatmul.mubr.f32.gmra.mxu0 %v363
    %v434 = vpop.f32.mrf.mxu0
    %v435 = vadd.f32 0.0, %v434
    %v436 = vpop.f32.mrf.mxu0
    %437 = vmatprep.mubr.f32.mxu0 0.0
    %438 = vmatmul.mubr.f32.gmra.mxu0 %v366
    %v439 = vpop.f32.mrf.mxu0
    %v440 = vadd.f32 0.0, %v439
    %v441 = vpop.f32.mrf.mxu0
    %442 = vdwg.mxu0
    %v443 = vld [vmem:[%s4] sm:$0xff]
    %v444 = vld [vmem:[%s4 + $0x8] sm:$0xff]
    %v445 = vld [vmem:[%s4 + $0x10] sm:$0xff]
    %v446 = vld [vmem:[%s4 + $0x18] sm:$0xff]
    %v447 = vld [vmem:[%s4 + $0x20] sm:$0xff]
    %v448 = vld [vmem:[%s4 + $0x28] sm:$0xff]
    %v449 = vld [vmem:[%s4 + $0x30] sm:$0xff]
    %v450 = vld [vmem:[%s4 + $0x38] sm:$0xff]
    %v451 = vld [vmem:[%s4 + $0x40] sm:$0x3f]
    %v452 = vld [vmem:[%s4 + $0x48] sm:$0x3f]
    %v453 = vld [vmem:[%s4 + $0x50] sm:$0x3f]
    %v454 = vld [vmem:[%s4 + $0x58] sm:$0x3f]
    %s455 = scalar_lea.vmem %s3, 16
    %v456 = vld [vmem:[%s455] sm:$0xff]
    %v457 = vld [vmem:[%s455 + $0x8] sm:$0xff]
    %v459 = vsel %vm103, %v456, 0
    %v462 = vsel %vm103, %v457, 0
    %464 = vmatprep.subr.mxu0 0.0
    %465 = vmatpush1.msra.mxu0 0.0
    %466 = vmatprep.subr.mxu0 0.0
    %467 = vmatpush1.msra.mxu0 0.0
    %468 = vmatprep.subr.mxu0 0.0
    %469 = vmatpush1.msra.mxu0 0.0
    %470 = vmatprep.subr.mxu0 0.0
    %471 = vmatpush1.msra.mxu0 0.0
    %472 = vmatprep.subr.mxu0 0.0
    %473 = vmatpush1.msra.mxu0 0.0
    %474 = vmatprep.subr.mxu0 0.0
    %475 = vmatpush1.msra.mxu0 0.0
    %476 = vmatprep.subr.mxu0 0.0
    %477 = vmatpush1.msra.mxu0 0.0
    %478 = vmatprep.subr.mxu0 0.0
    %479 = vmatpush1.msra.mxu0 0.0
    %480 = vmatprep.subr.mxu0 0.0
    %481 = vmatpush1.msra.mxu0 0.0
    %482 = vmatprep.subr.mxu0 0.0
    %483 = vmatpush1.msra.mxu0 0.0
    %484 = vmatprep.subr.mxu0 0.0
    %485 = vmatpush1.msra.mxu0 0.0
    %486 = vmatprep.subr.mxu0 0.0
    %487 = vmatpush1.msra.mxu0 0.0
    %488 = vmatprep.subr.mxu0 0.0
    %489 = vmatpush1.msra.mxu0 0.0
    %490 = vmatprep.subr.mxu0 0.0
    %491 = vmatpush1.msra.mxu0 0.0
    %492 = vmatprep.subr.mxu0 0.0
    %493 = vmatpush1.msra.mxu0 %v357
    %494 = vmatprep.subr.mxu0 0.0
    %495 = vmatpush1.msra.mxu0 %v352
    %496 = vmatprep.subr.mxu0 0.0
    %497 = vmatpush2.msra.mxu0 0.0
    %498 = vmatprep.subr.mxu0 0.0
    %499 = vmatpush2.msra.mxu0 0.0
    %500 = vmatprep.subr.mxu0 0.0
    %501 = vmatpush2.msra.mxu0 0.0
    %502 = vmatprep.subr.mxu0 0.0
    %503 = vmatpush2.msra.mxu0 0.0
    %504 = vmatprep.subr.mxu0 0.0
    %505 = vmatpush2.msra.mxu0 0.0
    %506 = vmatprep.subr.mxu0 0.0
    %507 = vmatpush2.msra.mxu0 0.0
    %508 = vmatprep.subr.mxu0 0.0
    %509 = vmatpush2.msra.mxu0 0.0
    %510 = vmatprep.subr.mxu0 0.0
    %511 = vmatpush2.msra.mxu0 0.0
    %512 = vmatprep.subr.mxu0 0.0
    %513 = vmatpush2.msra.mxu0 0.0
    %514 = vmatprep.subr.mxu0 0.0
    %515 = vmatpush2.msra.mxu0 0.0
    %516 = vmatprep.subr.mxu0 0.0
    %517 = vmatpush2.msra.mxu0 0.0
    %518 = vmatprep.subr.mxu0 0.0
    %519 = vmatpush2.msra.mxu0 0.0
    %520 = vmatprep.subr.mxu0 0.0
    %521 = vmatpush2.msra.mxu0 0.0
    %522 = vmatprep.subr.mxu0 0.0
    %523 = vmatpush2.msra.mxu0 0.0
    %524 = vmatprep.subr.mxu0 0.0
    %525 = vmatpush2.msra.mxu0 0.0
    %526 = vmatprep.subr.mxu0 0.0
    %527 = vmatpush2.msra.mxu0 0.0
    %528 = vmatprep.mubr.f32.mxu0 0.0
    %529 = vmatmul.mubr.f32.gmra.mxu0 %v459
    %v530 = vpop.f32.mrf.mxu0
    %v531 = vadd.f32 0.0, %v530
    %v532 = vpop.f32.mrf.mxu0
    %533 = vmatprep.mubr.f32.mxu0 0.0
    %534 = vmatmul.mubr.f32.gmra.mxu0 %v462
    %v535 = vpop.f32.mrf.mxu0
    %v536 = vadd.f32 0.0, %v535
    %v537 = vpop.f32.mrf.mxu0
    %538 = vdwg.mxu0
    %s539 = scalar_lea.vmem %s4, 96
    %v540 = vld [vmem:[%s539] sm:$0xff]
    %v541 = vld [vmem:[%s539 + $0x8] sm:$0xff]
    %v542 = vld [vmem:[%s539 + $0x10] sm:$0xff]
    %v543 = vld [vmem:[%s539 + $0x18] sm:$0xff]
    %v544 = vld [vmem:[%s539 + $0x20] sm:$0xff]
    %v545 = vld [vmem:[%s539 + $0x28] sm:$0xff]
    %v546 = vld [vmem:[%s539 + $0x30] sm:$0xff]
    %v547 = vld [vmem:[%s539 + $0x38] sm:$0xff]
    %v548 = vld [vmem:[%s539 + $0x40] sm:$0x3f]
    %v549 = vld [vmem:[%s539 + $0x48] sm:$0x3f]
    %v550 = vld [vmem:[%s539 + $0x50] sm:$0x3f]
    %v551 = vld [vmem:[%s539 + $0x58] sm:$0x3f]
    %vm552 = vcmask 179200
    %v554 = vsel %vm552, %v531, 0
    %v557 = vsel %vm552, %v536, 0
    %v560 = vsel %vm281, %v548, 0
    %v563 = vsel %vm281, %v549, 0
    %v566 = vsel %vm281, %v550, 0
    %v569 = vsel %vm281, %v551, 0
    %571 = vmatprep.subr.mxu0 0.0
    %572 = vmatpush1.msra.mxu0 0.0
    %573 = vmatprep.subr.mxu0 0.0
    %574 = vmatpush1.msra.mxu0 0.0
    %575 = vmatprep.subr.mxu0 0.0
    %576 = vmatpush1.msra.mxu0 0.0
    %577 = vmatprep.subr.mxu0 0.0
    %578 = vmatpush1.msra.mxu0 0.0
    %579 = vmatprep.subr.mxu0 0.0
    %580 = vmatpush1.msra.mxu0 0.0
    %581 = vmatprep.subr.mxu0 0.0
    %582 = vmatpush1.msra.mxu0 0.0
    %583 = vmatprep.subr.mxu0 0.0
    %584 = vmatpush1.msra.mxu0 0.0
    %585 = vmatprep.subr.mxu0 0.0
    %586 = vmatpush1.msra.mxu0 0.0
    %587 = vmatprep.subr.mxu0 0.0
    %588 = vmatpush1.msra.mxu0 0.0
    %589 = vmatprep.subr.mxu0 0.0
    %590 = vmatpush1.msra.mxu0 0.0
    %591 = vmatprep.subr.mxu0 0.0
    %592 = vmatpush1.msra.mxu0 0.0
    %593 = vmatprep.subr.mxu0 0.0
    %594 = vmatpush1.msra.mxu0 0.0
    %595 = vmatprep.subr.mxu0 0.0
    %596 = vmatpush1.msra.mxu0 0.0
    %597 = vmatprep.subr.mxu0 %v563
    %598 = vmatpush1.msra.mxu0 %v560
    %599 = vmatprep.subr.mxu0 %v545
    %600 = vmatpush1.msra.mxu0 %v544
    %601 = vmatprep.subr.mxu0 %v541
    %602 = vmatpush1.msra.mxu0 %v540
    %603 = vmatprep.subr.mxu0 0.0
    %604 = vmatpush2.msra.mxu0 0.0
    %605 = vmatprep.subr.mxu0 0.0
    %606 = vmatpush2.msra.mxu0 0.0
    %607 = vmatprep.subr.mxu0 0.0
    %608 = vmatpush2.msra.mxu0 0.0
    %609 = vmatprep.subr.mxu0 0.0
    %610 = vmatpush2.msra.mxu0 0.0
    %611 = vmatprep.subr.mxu0 0.0
    %612 = vmatpush2.msra.mxu0 0.0
    %613 = vmatprep.subr.mxu0 0.0
    %614 = vmatpush2.msra.mxu0 0.0
    %615 = vmatprep.subr.mxu0 0.0
    %616 = vmatpush2.msra.mxu0 0.0
    %617 = vmatprep.subr.mxu0 0.0
    %618 = vmatpush2.msra.mxu0 0.0
    %619 = vmatprep.subr.mxu0 0.0
    %620 = vmatpush2.msra.mxu0 0.0
    %621 = vmatprep.subr.mxu0 0.0
    %622 = vmatpush2.msra.mxu0 0.0
    %623 = vmatprep.subr.mxu0 0.0
    %624 = vmatpush2.msra.mxu0 0.0
    %625 = vmatprep.subr.mxu0 0.0
    %626 = vmatpush2.msra.mxu0 0.0
    %627 = vmatprep.subr.mxu0 0.0
    %628 = vmatpush2.msra.mxu0 0.0
    %629 = vmatprep.subr.mxu0 0.0
    %630 = vmatpush2.msra.mxu0 0.0
    %631 = vmatprep.subr.mxu0 0.0
    %632 = vmatpush2.msra.mxu0 0.0
    %633 = vmatprep.subr.mxu0 0.0
    %634 = vmatpush2.msra.mxu0 0.0
    %635 = vmatprep.mubr.f32.mxu0 0.0
    %636 = vmatmul.mubr.f32.gmra.mxu0 %v554
    %v637 = vpop.f32.mrf.mxu0
    %v638 = vadd.f32 0.0, %v637
    %v639 = vpop.f32.mrf.mxu0
    %v640 = vadd.f32 0.0, %v639
    %641 = vmatprep.mubr.f32.mxu0 0.0
    %642 = vmatmul.mubr.f32.gmra.mxu0 %v557
    %v643 = vpop.f32.mrf.mxu0
    %v644 = vadd.f32 0.0, %v643
    %v645 = vpop.f32.mrf.mxu0
    %v646 = vadd.f32 0.0, %v645
    %647 = vdwg.mxu0
    %648 = vmatprep.subr.mxu0 0.0
    %649 = vmatpush1.msra.mxu0 0.0
    %650 = vmatprep.subr.mxu0 0.0
    %651 = vmatpush1.msra.mxu0 0.0
    %652 = vmatprep.subr.mxu0 0.0
    %653 = vmatpush1.msra.mxu0 0.0
    %654 = vmatprep.subr.mxu0 0.0
    %655 = vmatpush1.msra.mxu0 0.0
    %656 = vmatprep.subr.mxu0 0.0
    %657 = vmatpush1.msra.mxu0 0.0
    %658 = vmatprep.subr.mxu0 0.0
    %659 = vmatpush1.msra.mxu0 0.0
    %660 = vmatprep.subr.mxu0 0.0
    %661 = vmatpush1.msra.mxu0 0.0
    %662 = vmatprep.subr.mxu0 0.0
    %663 = vmatpush1.msra.mxu0 0.0
    %664 = vmatprep.subr.mxu0 0.0
    %665 = vmatpush1.msra.mxu0 0.0
    %666 = vmatprep.subr.mxu0 0.0
    %667 = vmatpush1.msra.mxu0 0.0
    %668 = vmatprep.subr.mxu0 0.0
    %669 = vmatpush1.msra.mxu0 0.0
    %670 = vmatprep.subr.mxu0 0.0
    %671 = vmatpush1.msra.mxu0 0.0
    %672 = vmatprep.subr.mxu0 0.0
    %673 = vmatpush1.msra.mxu0 0.0
    %674 = vmatprep.subr.mxu0 %v569
    %675 = vmatpush1.msra.mxu0 %v566
    %676 = vmatprep.subr.mxu0 %v547
    %677 = vmatpush1.msra.mxu0 %v546
    %678 = vmatprep.subr.mxu0 %v543
    %679 = vmatpush1.msra.mxu0 %v542
    %680 = vmatprep.subr.mxu0 0.0
    %681 = vmatpush2.msra.mxu0 0.0
    %682 = vmatprep.subr.mxu0 0.0
    %683 = vmatpush2.msra.mxu0 0.0
    %684 = vmatprep.subr.mxu0 0.0
    %685 = vmatpush2.msra.mxu0 0.0
    %686 = vmatprep.subr.mxu0 0.0
    %687 = vmatpush2.msra.mxu0 0.0
    %688 = vmatprep.subr.mxu0 0.0
    %689 = vmatpush2.msra.mxu0 0.0
    %690 = vmatprep.subr.mxu0 0.0
    %691 = vmatpush2.msra.mxu0 0.0
    %692 = vmatprep.subr.mxu0 0.0
    %693 = vmatpush2.msra.mxu0 0.0
    %694 = vmatprep.subr.mxu0 0.0
    %695 = vmatpush2.msra.mxu0 0.0
    %696 = vmatprep.subr.mxu0 0.0
    %697 = vmatpush2.msra.mxu0 0.0
    %698 = vmatprep.subr.mxu0 0.0
    %699 = vmatpush2.msra.mxu0 0.0
    %700 = vmatprep.subr.mxu0 0.0
    %701 = vmatpush2.msra.mxu0 0.0
    %702 = vmatprep.subr.mxu0 0.0
    %703 = vmatpush2.msra.mxu0 0.0
    %704 = vmatprep.subr.mxu0 0.0
    %705 = vmatpush2.msra.mxu0 0.0
    %706 = vmatprep.subr.mxu0 0.0
    %707 = vmatpush2.msra.mxu0 0.0
    %708 = vmatprep.subr.mxu0 0.0
    %709 = vmatpush2.msra.mxu0 0.0
    %710 = vmatprep.subr.mxu0 0.0
    %711 = vmatpush2.msra.mxu0 0.0
    %712 = vmatprep.mubr.f32.mxu0 0.0
    %713 = vmatmul.mubr.f32.gmra.mxu0 %v554
    %v714 = vpop.f32.mrf.mxu0
    %v715 = vadd.f32 0.0, %v714
    %v716 = vpop.f32.mrf.mxu0
    %v717 = vadd.f32 0.0, %v716
    %718 = vmatprep.mubr.f32.mxu0 0.0
    %719 = vmatmul.mubr.f32.gmra.mxu0 %v557
    %v720 = vpop.f32.mrf.mxu0
    %v721 = vadd.f32 0.0, %v720
    %v722 = vpop.f32.mrf.mxu0
    %v723 = vadd.f32 0.0, %v722
    %724 = vdwg.mxu0
    %v726 = vsel %vm552, %v435, 0
    %v729 = vsel %vm552, %v440, 0
    %v732 = vsel %vm281, %v451, 0
    %v735 = vsel %vm281, %v452, 0
    %v738 = vsel %vm281, %v453, 0
    %v741 = vsel %vm281, %v454, 0
    %743 = vmatprep.subr.mxu0 0.0
    %744 = vmatpush1.msra.mxu0 0.0
    %745 = vmatprep.subr.mxu0 0.0
    %746 = vmatpush1.msra.mxu0 0.0
    %747 = vmatprep.subr.mxu0 0.0
    %748 = vmatpush1.msra.mxu0 0.0
    %749 = vmatprep.subr.mxu0 0.0
    %750 = vmatpush1.msra.mxu0 0.0
    %751 = vmatprep.subr.mxu0 0.0
    %752 = vmatpush1.msra.mxu0 0.0
    %753 = vmatprep.subr.mxu0 0.0
    %754 = vmatpush1.msra.mxu0 0.0
    %755 = vmatprep.subr.mxu0 0.0
    %756 = vmatpush1.msra.mxu0 0.0
    %757 = vmatprep.subr.mxu0 0.0
    %758 = vmatpush1.msra.mxu0 0.0
    %759 = vmatprep.subr.mxu0 0.0
    %760 = vmatpush1.msra.mxu0 0.0
    %761 = vmatprep.subr.mxu0 0.0
    %762 = vmatpush1.msra.mxu0 0.0
    %763 = vmatprep.subr.mxu0 0.0
    %764 = vmatpush1.msra.mxu0 0.0
    %765 = vmatprep.subr.mxu0 0.0
    %766 = vmatpush1.msra.mxu0 0.0
    %767 = vmatprep.subr.mxu0 0.0
    %768 = vmatpush1.msra.mxu0 0.0
    %769 = vmatprep.subr.mxu0 %v735
    %770 = vmatpush1.msra.mxu0 %v732
    %771 = vmatprep.subr.mxu0 %v448
    %772 = vmatpush1.msra.mxu0 %v447
    %773 = vmatprep.subr.mxu0 %v444
    %774 = vmatpush1.msra.mxu0 %v443
    %775 = vmatprep.subr.mxu0 0.0
    %776 = vmatpush2.msra.mxu0 0.0
    %777 = vmatprep.subr.mxu0 0.0
    %778 = vmatpush2.msra.mxu0 0.0
    %779 = vmatprep.subr.mxu0 0.0
    %780 = vmatpush2.msra.mxu0 0.0
    %781 = vmatprep.subr.mxu0 0.0
    %782 = vmatpush2.msra.mxu0 0.0
    %783 = vmatprep.subr.mxu0 0.0
    %784 = vmatpush2.msra.mxu0 0.0
    %785 = vmatprep.subr.mxu0 0.0
    %786 = vmatpush2.msra.mxu0 0.0
    %787 = vmatprep.subr.mxu0 0.0
    %788 = vmatpush2.msra.mxu0 0.0
    %789 = vmatprep.subr.mxu0 0.0
    %790 = vmatpush2.msra.mxu0 0.0
    %791 = vmatprep.subr.mxu0 0.0
    %792 = vmatpush2.msra.mxu0 0.0
    %793 = vmatprep.subr.mxu0 0.0
    %794 = vmatpush2.msra.mxu0 0.0
    %795 = vmatprep.subr.mxu0 0.0
    %796 = vmatpush2.msra.mxu0 0.0
    %797 = vmatprep.subr.mxu0 0.0
    %798 = vmatpush2.msra.mxu0 0.0
    %799 = vmatprep.subr.mxu0 0.0
    %800 = vmatpush2.msra.mxu0 0.0
    %801 = vmatprep.subr.mxu0 0.0
    %802 = vmatpush2.msra.mxu0 0.0
    %803 = vmatprep.subr.mxu0 0.0
    %804 = vmatpush2.msra.mxu0 0.0
    %805 = vmatprep.subr.mxu0 0.0
    %806 = vmatpush2.msra.mxu0 0.0
    %807 = vmatprep.mubr.f32.mxu0 0.0
    %808 = vmatmul.mubr.f32.gmra.mxu0 %v726
    %v809 = vpop.f32.mrf.mxu0
    %v810 = vadd.f32 %v638, %v809
    %v811 = vpop.f32.mrf.mxu0
    %v812 = vadd.f32 %v640, %v811
    %813 = vmatprep.mubr.f32.mxu0 0.0
    %814 = vmatmul.mubr.f32.gmra.mxu0 %v729
    %v815 = vpop.f32.mrf.mxu0
    %v816 = vadd.f32 %v644, %v815
    %v817 = vpop.f32.mrf.mxu0
    %v818 = vadd.f32 %v646, %v817
    %819 = vdwg.mxu0
    %820 = vmatprep.subr.mxu0 0.0
    %821 = vmatpush1.msra.mxu0 0.0
    %822 = vmatprep.subr.mxu0 0.0
    %823 = vmatpush1.msra.mxu0 0.0
    %824 = vmatprep.subr.mxu0 0.0
    %825 = vmatpush1.msra.mxu0 0.0
    %826 = vmatprep.subr.mxu0 0.0
    %827 = vmatpush1.msra.mxu0 0.0
    %828 = vmatprep.subr.mxu0 0.0
    %829 = vmatpush1.msra.mxu0 0.0
    %830 = vmatprep.subr.mxu0 0.0
    %831 = vmatpush1.msra.mxu0 0.0
    %832 = vmatprep.subr.mxu0 0.0
    %833 = vmatpush1.msra.mxu0 0.0
    %834 = vmatprep.subr.mxu0 0.0
    %835 = vmatpush1.msra.mxu0 0.0
    %836 = vmatprep.subr.mxu0 0.0
    %837 = vmatpush1.msra.mxu0 0.0
    %838 = vmatprep.subr.mxu0 0.0
    %839 = vmatpush1.msra.mxu0 0.0
    %840 = vmatprep.subr.mxu0 0.0
    %841 = vmatpush1.msra.mxu0 0.0
    %842 = vmatprep.subr.mxu0 0.0
    %843 = vmatpush1.msra.mxu0 0.0
    %844 = vmatprep.subr.mxu0 0.0
    %845 = vmatpush1.msra.mxu0 0.0
    %846 = vmatprep.subr.mxu0 %v741
    %847 = vmatpush1.msra.mxu0 %v738
    %848 = vmatprep.subr.mxu0 %v450
    %849 = vmatpush1.msra.mxu0 %v449
    %850 = vmatprep.subr.mxu0 %v446
    %851 = vmatpush1.msra.mxu0 %v445
    %852 = vmatprep.subr.mxu0 0.0
    %853 = vmatpush2.msra.mxu0 0.0
    %854 = vmatprep.subr.mxu0 0.0
    %855 = vmatpush2.msra.mxu0 0.0
    %856 = vmatprep.subr.mxu0 0.0
    %857 = vmatpush2.msra.mxu0 0.0
    %858 = vmatprep.subr.mxu0 0.0
    %859 = vmatpush2.msra.mxu0 0.0
    %860 = vmatprep.subr.mxu0 0.0
    %861 = vmatpush2.msra.mxu0 0.0
    %862 = vmatprep.subr.mxu0 0.0
    %863 = vmatpush2.msra.mxu0 0.0
    %864 = vmatprep.subr.mxu0 0.0
    %865 = vmatpush2.msra.mxu0 0.0
    %866 = vmatprep.subr.mxu0 0.0
    %867 = vmatpush2.msra.mxu0 0.0
    %868 = vmatprep.subr.mxu0 0.0
    %869 = vmatpush2.msra.mxu0 0.0
    %870 = vmatprep.subr.mxu0 0.0
    %871 = vmatpush2.msra.mxu0 0.0
    %872 = vmatprep.subr.mxu0 0.0
    %873 = vmatpush2.msra.mxu0 0.0
    %874 = vmatprep.subr.mxu0 0.0
    %875 = vmatpush2.msra.mxu0 0.0
    %876 = vmatprep.subr.mxu0 0.0
    %877 = vmatpush2.msra.mxu0 0.0
    %878 = vmatprep.subr.mxu0 0.0
    %879 = vmatpush2.msra.mxu0 0.0
    %880 = vmatprep.subr.mxu0 0.0
    %881 = vmatpush2.msra.mxu0 0.0
    %882 = vmatprep.subr.mxu0 0.0
    %883 = vmatpush2.msra.mxu0 0.0
    %884 = vmatprep.mubr.f32.mxu0 0.0
    %885 = vmatmul.mubr.f32.gmra.mxu0 %v726
    %v886 = vpop.f32.mrf.mxu0
    %v887 = vadd.f32 %v715, %v886
    %v888 = vpop.f32.mrf.mxu0
    %v889 = vadd.f32 %v717, %v888
    %890 = vmatprep.mubr.f32.mxu0 0.0
    %891 = vmatmul.mubr.f32.gmra.mxu0 %v729
    %v892 = vpop.f32.mrf.mxu0
    %v893 = vadd.f32 %v721, %v892
    %v894 = vpop.f32.mrf.mxu0
    %v895 = vadd.f32 %v723, %v894
    %896 = vdwg.mxu0
    %s897 = scalar_lea.vmem %s3, 32
    %v898 = vld [vmem:[%s897] sm:$0xff]
    %v899 = vld [vmem:[%s897 + $0x8] sm:$0xff]
    %v901 = vsel %vm103, %v898, 0
    %v904 = vsel %vm103, %v899, 0
    %906 = vmatprep.subr.mxu0 0.0
    %907 = vmatpush1.msra.mxu0 0.0
    %908 = vmatprep.subr.mxu0 0.0
    %909 = vmatpush1.msra.mxu0 0.0
    %910 = vmatprep.subr.mxu0 0.0
    %911 = vmatpush1.msra.mxu0 0.0
    %912 = vmatprep.subr.mxu0 0.0
    %913 = vmatpush1.msra.mxu0 0.0
    %914 = vmatprep.subr.mxu0 0.0
    %915 = vmatpush1.msra.mxu0 0.0
    %916 = vmatprep.subr.mxu0 0.0
    %917 = vmatpush1.msra.mxu0 0.0
    %918 = vmatprep.subr.mxu0 0.0
    %919 = vmatpush1.msra.mxu0 0.0
    %920 = vmatprep.subr.mxu0 0.0
    %921 = vmatpush1.msra.mxu0 0.0
    %922 = vmatprep.subr.mxu0 0.0
    %923 = vmatpush1.msra.mxu0 0.0
    %924 = vmatprep.subr.mxu0 0.0
    %925 = vmatpush1.msra.mxu0 0.0
    %926 = vmatprep.subr.mxu0 0.0
    %927 = vmatpush1.msra.mxu0 0.0
    %928 = vmatprep.subr.mxu0 0.0
    %929 = vmatpush1.msra.mxu0 0.0
    %930 = vmatprep.subr.mxu0 0.0
    %931 = vmatpush1.msra.mxu0 0.0
    %932 = vmatprep.subr.mxu0 0.0
    %933 = vmatpush1.msra.mxu0 0.0
    %934 = vmatprep.subr.mxu0 0.0
    %935 = vmatpush1.msra.mxu0 %v357
    %936 = vmatprep.subr.mxu0 0.0
    %937 = vmatpush1.msra.mxu0 %v352
    %938 = vmatprep.subr.mxu0 0.0
    %939 = vmatpush2.msra.mxu0 0.0
    %940 = vmatprep.subr.mxu0 0.0
    %941 = vmatpush2.msra.mxu0 0.0
    %942 = vmatprep.subr.mxu0 0.0
    %943 = vmatpush2.msra.mxu0 0.0
    %944 = vmatprep.subr.mxu0 0.0
    %945 = vmatpush2.msra.mxu0 0.0
    %946 = vmatprep.subr.mxu0 0.0
    %947 = vmatpush2.msra.mxu0 0.0
    %948 = vmatprep.subr.mxu0 0.0
    %949 = vmatpush2.msra.mxu0 0.0
    %950 = vmatprep.subr.mxu0 0.0
    %951 = vmatpush2.msra.mxu0 0.0
    %952 = vmatprep.subr.mxu0 0.0
    %953 = vmatpush2.msra.mxu0 0.0
    %954 = vmatprep.subr.mxu0 0.0
    %955 = vmatpush2.msra.mxu0 0.0
    %956 = vmatprep.subr.mxu0 0.0
    %957 = vmatpush2.msra.mxu0 0.0
    %958 = vmatprep.subr.mxu0 0.0
    %959 = vmatpush2.msra.mxu0 0.0
    %960 = vmatprep.subr.mxu0 0.0
    %961 = vmatpush2.msra.mxu0 0.0
    %962 = vmatprep.subr.mxu0 0.0
    %963 = vmatpush2.msra.mxu0 0.0
    %964 = vmatprep.subr.mxu0 0.0
    %965 = vmatpush2.msra.mxu0 0.0
    %966 = vmatprep.subr.mxu0 0.0
    %967 = vmatpush2.msra.mxu0 0.0
    %968 = vmatprep.subr.mxu0 0.0
    %969 = vmatpush2.msra.mxu0 0.0
    %970 = vmatprep.mubr.f32.mxu0 0.0
    %971 = vmatmul.mubr.f32.gmra.mxu0 %v901
    %v972 = vpop.f32.mrf.mxu0
    %v973 = vadd.f32 0.0, %v972
    %v974 = vpop.f32.mrf.mxu0
    %975 = vmatprep.mubr.f32.mxu0 0.0
    %976 = vmatmul.mubr.f32.gmra.mxu0 %v904
    %v977 = vpop.f32.mrf.mxu0
    %v978 = vadd.f32 0.0, %v977
    %v979 = vpop.f32.mrf.mxu0
    %980 = vdwg.mxu0
    %s981 = scalar_lea.vmem %s4, 192
    %v982 = vld [vmem:[%s981] sm:$0xff]
    %v983 = vld [vmem:[%s981 + $0x8] sm:$0xff]
    %v984 = vld [vmem:[%s981 + $0x10] sm:$0xff]
    %v985 = vld [vmem:[%s981 + $0x18] sm:$0xff]
    %v986 = vld [vmem:[%s981 + $0x20] sm:$0xff]
    %v987 = vld [vmem:[%s981 + $0x28] sm:$0xff]
    %v988 = vld [vmem:[%s981 + $0x30] sm:$0xff]
    %v989 = vld [vmem:[%s981 + $0x38] sm:$0xff]
    %v990 = vld [vmem:[%s981 + $0x40] sm:$0x3f]
    %v991 = vld [vmem:[%s981 + $0x48] sm:$0x3f]
    %v992 = vld [vmem:[%s981 + $0x50] sm:$0x3f]
    %v993 = vld [vmem:[%s981 + $0x58] sm:$0x3f]
    %v995 = vsel %vm552, %v973, 0
    %v998 = vsel %vm552, %v978, 0
    %v1001 = vsel %vm281, %v990, 0
    %v1004 = vsel %vm281, %v991, 0
    %v1007 = vsel %vm281, %v992, 0
    %v1010 = vsel %vm281, %v993, 0
    %1012 = vmatprep.subr.mxu0 0.0
    %1013 = vmatpush1.msra.mxu0 0.0
    %1014 = vmatprep.subr.mxu0 0.0
    %1015 = vmatpush1.msra.mxu0 0.0
    %1016 = vmatprep.subr.mxu0 0.0
    %1017 = vmatpush1.msra.mxu0 0.0
    %1018 = vmatprep.subr.mxu0 0.0
    %1019 = vmatpush1.msra.mxu0 0.0
    %1020 = vmatprep.subr.mxu0 0.0
    %1021 = vmatpush1.msra.mxu0 0.0
    %1022 = vmatprep.subr.mxu0 0.0
    %1023 = vmatpush1.msra.mxu0 0.0
    %1024 = vmatprep.subr.mxu0 0.0
    %1025 = vmatpush1.msra.mxu0 0.0
    %1026 = vmatprep.subr.mxu0 0.0
    %1027 = vmatpush1.msra.mxu0 0.0
    %1028 = vmatprep.subr.mxu0 0.0
    %1029 = vmatpush1.msra.mxu0 0.0
    %1030 = vmatprep.subr.mxu0 0.0
    %1031 = vmatpush1.msra.mxu0 0.0
    %1032 = vmatprep.subr.mxu0 0.0
    %1033 = vmatpush1.msra.mxu0 0.0
    %1034 = vmatprep.subr.mxu0 0.0
    %1035 = vmatpush1.msra.mxu0 0.0
    %1036 = vmatprep.subr.mxu0 0.0
    %1037 = vmatpush1.msra.mxu0 0.0
    %1038 = vmatprep.subr.mxu0 %v1004
    %1039 = vmatpush1.msra.mxu0 %v1001
    %1040 = vmatprep.subr.mxu0 %v987
    %1041 = vmatpush1.msra.mxu0 %v986
    %1042 = vmatprep.subr.mxu0 %v983
    %1043 = vmatpush1.msra.mxu0 %v982
    %1044 = vmatprep.subr.mxu0 0.0
    %1045 = vmatpush2.msra.mxu0 0.0
    %1046 = vmatprep.subr.mxu0 0.0
    %1047 = vmatpush2.msra.mxu0 0.0
    %1048 = vmatprep.subr.mxu0 0.0
    %1049 = vmatpush2.msra.mxu0 0.0
    %1050 = vmatprep.subr.mxu0 0.0
    %1051 = vmatpush2.msra.mxu0 0.0
    %1052 = vmatprep.subr.mxu0 0.0
    %1053 = vmatpush2.msra.mxu0 0.0
    %1054 = vmatprep.subr.mxu0 0.0
    %1055 = vmatpush2.msra.mxu0 0.0
    %1056 = vmatprep.subr.mxu0 0.0
    %1057 = vmatpush2.msra.mxu0 0.0
    %1058 = vmatprep.subr.mxu0 0.0
    %1059 = vmatpush2.msra.mxu0 0.0
    %1060 = vmatprep.subr.mxu0 0.0
    %1061 = vmatpush2.msra.mxu0 0.0
    %1062 = vmatprep.subr.mxu0 0.0
    %1063 = vmatpush2.msra.mxu0 0.0
    %1064 = vmatprep.subr.mxu0 0.0
    %1065 = vmatpush2.msra.mxu0 0.0
    %1066 = vmatprep.subr.mxu0 0.0
    %1067 = vmatpush2.msra.mxu0 0.0
    %1068 = vmatprep.subr.mxu0 0.0
    %1069 = vmatpush2.msra.mxu0 0.0
    %1070 = vmatprep.subr.mxu0 0.0
    %1071 = vmatpush2.msra.mxu0 0.0
    %1072 = vmatprep.subr.mxu0 0.0
    %1073 = vmatpush2.msra.mxu0 0.0
    %1074 = vmatprep.subr.mxu0 0.0
    %1075 = vmatpush2.msra.mxu0 0.0
    %1076 = vmatprep.mubr.f32.mxu0 0.0
    %1077 = vmatmul.mubr.f32.gmra.mxu0 %v995
    %v1078 = vpop.f32.mrf.mxu0
    %v1079 = vadd.f32 0.0, %v1078
    %v1080 = vpop.f32.mrf.mxu0
    %v1081 = vadd.f32 0.0, %v1080
    %1082 = vmatprep.mubr.f32.mxu0 0.0
    %1083 = vmatmul.mubr.f32.gmra.mxu0 %v998
    %v1084 = vpop.f32.mrf.mxu0
    %v1085 = vadd.f32 0.0, %v1084
    %v1086 = vpop.f32.mrf.mxu0
    %v1087 = vadd.f32 0.0, %v1086
    %1088 = vdwg.mxu0
    %1089 = vmatprep.subr.mxu0 0.0
    %1090 = vmatpush1.msra.mxu0 0.0
    %1091 = vmatprep.subr.mxu0 0.0
    %1092 = vmatpush1.msra.mxu0 0.0
    %1093 = vmatprep.subr.mxu0 0.0
    %1094 = vmatpush1.msra.mxu0 0.0
    %1095 = vmatprep.subr.mxu0 0.0
    %1096 = vmatpush1.msra.mxu0 0.0
    %1097 = vmatprep.subr.mxu0 0.0
    %1098 = vmatpush1.msra.mxu0 0.0
    %1099 = vmatprep.subr.mxu0 0.0
    %1100 = vmatpush1.msra.mxu0 0.0
    %1101 = vmatprep.subr.mxu0 0.0
    %1102 = vmatpush1.msra.mxu0 0.0
    %1103 = vmatprep.subr.mxu0 0.0
    %1104 = vmatpush1.msra.mxu0 0.0
    %1105 = vmatprep.subr.mxu0 0.0
    %1106 = vmatpush1.msra.mxu0 0.0
    %1107 = vmatprep.subr.mxu0 0.0
    %1108 = vmatpush1.msra.mxu0 0.0
    %1109 = vmatprep.subr.mxu0 0.0
    %1110 = vmatpush1.msra.mxu0 0.0
    %1111 = vmatprep.subr.mxu0 0.0
    %1112 = vmatpush1.msra.mxu0 0.0
    %1113 = vmatprep.subr.mxu0 0.0
    %1114 = vmatpush1.msra.mxu0 0.0
    %1115 = vmatprep.subr.mxu0 %v1010
    %1116 = vmatpush1.msra.mxu0 %v1007
    %1117 = vmatprep.subr.mxu0 %v989
    %1118 = vmatpush1.msra.mxu0 %v988
    %1119 = vmatprep.subr.mxu0 %v985
    %1120 = vmatpush1.msra.mxu0 %v984
    %1121 = vmatprep.subr.mxu0 0.0
    %1122 = vmatpush2.msra.mxu0 0.0
    %1123 = vmatprep.subr.mxu0 0.0
    %1124 = vmatpush2.msra.mxu0 0.0
    %1125 = vmatprep.subr.mxu0 0.0
    %1126 = vmatpush2.msra.mxu0 0.0
    %1127 = vmatprep.subr.mxu0 0.0
    %1128 = vmatpush2.msra.mxu0 0.0
    %1129 = vmatprep.subr.mxu0 0.0
    %1130 = vmatpush2.msra.mxu0 0.0
    %1131 = vmatprep.subr.mxu0 0.0
    %1132 = vmatpush2.msra.mxu0 0.0
    %1133 = vmatprep.subr.mxu0 0.0
    %1134 = vmatpush2.msra.mxu0 0.0
    %1135 = vmatprep.subr.mxu0 0.0
    %1136 = vmatpush2.msra.mxu0 0.0
    %1137 = vmatprep.subr.mxu0 0.0
    %1138 = vmatpush2.msra.mxu0 0.0
    %1139 = vmatprep.subr.mxu0 0.0
    %1140 = vmatpush2.msra.mxu0 0.0
    %1141 = vmatprep.subr.mxu0 0.0
    %1142 = vmatpush2.msra.mxu0 0.0
    %1143 = vmatprep.subr.mxu0 0.0
    %1144 = vmatpush2.msra.mxu0 0.0
    %1145 = vmatprep.subr.mxu0 0.0
    %1146 = vmatpush2.msra.mxu0 0.0
    %1147 = vmatprep.subr.mxu0 0.0
    %1148 = vmatpush2.msra.mxu0 0.0
    %1149 = vmatprep.subr.mxu0 0.0
    %1150 = vmatpush2.msra.mxu0 0.0
    %1151 = vmatprep.subr.mxu0 0.0
    %1152 = vmatpush2.msra.mxu0 0.0
    %1153 = vmatprep.mubr.f32.mxu0 0.0
    %1154 = vmatmul.mubr.f32.gmra.mxu0 %v995
    %v1155 = vpop.f32.mrf.mxu0
    %v1156 = vadd.f32 0.0, %v1155
    %v1157 = vpop.f32.mrf.mxu0
    %v1158 = vadd.f32 0.0, %v1157
    %1159 = vmatprep.mubr.f32.mxu0 0.0
    %1160 = vmatmul.mubr.f32.gmra.mxu0 %v998
    %v1161 = vpop.f32.mrf.mxu0
    %v1162 = vadd.f32 0.0, %v1161
    %v1163 = vpop.f32.mrf.mxu0
    %v1164 = vadd.f32 0.0, %v1163
    %1165 = vdwg.mxu0
    %v1166 = vadd.f32 %v810, %v1079
    %v1167 = vadd.f32 %v812, %v1081
    %v1168 = vadd.f32 %v887, %v1156
    %v1169 = vadd.f32 %v889, %v1158
    %v1170 = vadd.f32 %v816, %v1085
    %v1171 = vadd.f32 %v818, %v1087
    %v1172 = vadd.f32 %v893, %v1162
    %v1173 = vadd.f32 %v895, %v1164
    %s1174 = scalar_lea.vmem %s3, 48
    %v1175 = vld [vmem:[%s1174] sm:$0xff]
    %v1176 = vld [vmem:[%s1174 + $0x8] sm:$0xff]
    %v1178 = vsel %vm103, %v1175, 0
    %v1181 = vsel %vm103, %v1176, 0
    %1183 = vmatprep.subr.mxu0 0.0
    %1184 = vmatpush1.msra.mxu0 0.0
    %1185 = vmatprep.subr.mxu0 0.0
    %1186 = vmatpush1.msra.mxu0 0.0
    %1187 = vmatprep.subr.mxu0 0.0
    %1188 = vmatpush1.msra.mxu0 0.0
    %1189 = vmatprep.subr.mxu0 0.0
    %1190 = vmatpush1.msra.mxu0 0.0
    %1191 = vmatprep.subr.mxu0 0.0
    %1192 = vmatpush1.msra.mxu0 0.0
    %1193 = vmatprep.subr.mxu0 0.0
    %1194 = vmatpush1.msra.mxu0 0.0
    %1195 = vmatprep.subr.mxu0 0.0
    %1196 = vmatpush1.msra.mxu0 0.0
    %1197 = vmatprep.subr.mxu0 0.0
    %1198 = vmatpush1.msra.mxu0 0.0
    %1199 = vmatprep.subr.mxu0 0.0
    %1200 = vmatpush1.msra.mxu0 0.0
    %1201 = vmatprep.subr.mxu0 0.0
    %1202 = vmatpush1.msra.mxu0 0.0
    %1203 = vmatprep.subr.mxu0 0.0
    %1204 = vmatpush1.msra.mxu0 0.0
    %1205 = vmatprep.subr.mxu0 0.0
    %1206 = vmatpush1.msra.mxu0 0.0
    %1207 = vmatprep.subr.mxu0 0.0
    %1208 = vmatpush1.msra.mxu0 0.0
    %1209 = vmatprep.subr.mxu0 0.0
    %1210 = vmatpush1.msra.mxu0 0.0
    %1211 = vmatprep.subr.mxu0 0.0
    %1212 = vmatpush1.msra.mxu0 %v357
    %1213 = vmatprep.subr.mxu0 0.0
    %1214 = vmatpush1.msra.mxu0 %v352
    %1215 = vmatprep.subr.mxu0 0.0
    %1216 = vmatpush2.msra.mxu0 0.0
    %1217 = vmatprep.subr.mxu0 0.0
    %1218 = vmatpush2.msra.mxu0 0.0
    %1219 = vmatprep.subr.mxu0 0.0
    %1220 = vmatpush2.msra.mxu0 0.0
    %1221 = vmatprep.subr.mxu0 0.0
    %1222 = vmatpush2.msra.mxu0 0.0
    %1223 = vmatprep.subr.mxu0 0.0
    %1224 = vmatpush2.msra.mxu0 0.0
    %1225 = vmatprep.subr.mxu0 0.0
    %1226 = vmatpush2.msra.mxu0 0.0
    %1227 = vmatprep.subr.mxu0 0.0
    %1228 = vmatpush2.msra.mxu0 0.0
    %1229 = vmatprep.subr.mxu0 0.0
    %1230 = vmatpush2.msra.mxu0 0.0
    %1231 = vmatprep.subr.mxu0 0.0
    %1232 = vmatpush2.msra.mxu0 0.0
    %1233 = vmatprep.subr.mxu0 0.0
    %1234 = vmatpush2.msra.mxu0 0.0
    %1235 = vmatprep.subr.mxu0 0.0
    %1236 = vmatpush2.msra.mxu0 0.0
    %1237 = vmatprep.subr.mxu0 0.0
    %1238 = vmatpush2.msra.mxu0 0.0
    %1239 = vmatprep.subr.mxu0 0.0
    %1240 = vmatpush2.msra.mxu0 0.0
    %1241 = vmatprep.subr.mxu0 0.0
    %1242 = vmatpush2.msra.mxu0 0.0
    %1243 = vmatprep.subr.mxu0 0.0
    %1244 = vmatpush2.msra.mxu0 0.0
    %1245 = vmatprep.subr.mxu0 0.0
    %1246 = vmatpush2.msra.mxu0 0.0
    %1247 = vmatprep.mubr.f32.mxu0 0.0
    %1248 = vmatmul.mubr.f32.gmra.mxu0 %v1178
    %v1249 = vpop.f32.mrf.mxu0
    %v1250 = vadd.f32 0.0, %v1249
    %v1251 = vpop.f32.mrf.mxu0
    %1252 = vmatprep.mubr.f32.mxu0 0.0
    %1253 = vmatmul.mubr.f32.gmra.mxu0 %v1181
    %v1254 = vpop.f32.mrf.mxu0
    %v1255 = vadd.f32 0.0, %v1254
    %v1256 = vpop.f32.mrf.mxu0
    %1257 = vdwg.mxu0
    %s1258 = scalar_lea.vmem %s4, 288
    %v1259 = vld [vmem:[%s1258] sm:$0xff]
    %v1260 = vld [vmem:[%s1258 + $0x8] sm:$0xff]
    %v1261 = vld [vmem:[%s1258 + $0x10] sm:$0xff]
    %v1262 = vld [vmem:[%s1258 + $0x18] sm:$0xff]
    %v1263 = vld [vmem:[%s1258 + $0x20] sm:$0xff]
    %v1264 = vld [vmem:[%s1258 + $0x28] sm:$0xff]
    %v1265 = vld [vmem:[%s1258 + $0x30] sm:$0xff]
    %v1266 = vld [vmem:[%s1258 + $0x38] sm:$0xff]
    %v1267 = vld [vmem:[%s1258 + $0x40] sm:$0x3f]
    %v1268 = vld [vmem:[%s1258 + $0x48] sm:$0x3f]
    %v1269 = vld [vmem:[%s1258 + $0x50] sm:$0x3f]
    %v1270 = vld [vmem:[%s1258 + $0x58] sm:$0x3f]
    %v1272 = vsel %vm552, %v1250, 0
    %v1275 = vsel %vm552, %v1255, 0
    %v1278 = vsel %vm281, %v1267, 0
    %v1281 = vsel %vm281, %v1268, 0
    %v1284 = vsel %vm281, %v1269, 0
    %v1287 = vsel %vm281, %v1270, 0
    %1289 = vmatprep.subr.mxu0 0.0
    %1290 = vmatpush1.msra.mxu0 0.0
    %1291 = vmatprep.subr.mxu0 0.0
    %1292 = vmatpush1.msra.mxu0 0.0
    %1293 = vmatprep.subr.mxu0 0.0
    %1294 = vmatpush1.msra.mxu0 0.0
    %1295 = vmatprep.subr.mxu0 0.0
    %1296 = vmatpush1.msra.mxu0 0.0
    %1297 = vmatprep.subr.mxu0 0.0
    %1298 = vmatpush1.msra.mxu0 0.0
    %1299 = vmatprep.subr.mxu0 0.0
    %1300 = vmatpush1.msra.mxu0 0.0
    %1301 = vmatprep.subr.mxu0 0.0
    %1302 = vmatpush1.msra.mxu0 0.0
    %1303 = vmatprep.subr.mxu0 0.0
    %1304 = vmatpush1.msra.mxu0 0.0
    %1305 = vmatprep.subr.mxu0 0.0
    %1306 = vmatpush1.msra.mxu0 0.0
    %1307 = vmatprep.subr.mxu0 0.0
    %1308 = vmatpush1.msra.mxu0 0.0
    %1309 = vmatprep.subr.mxu0 0.0
    %1310 = vmatpush1.msra.mxu0 0.0
    %1311 = vmatprep.subr.mxu0 0.0
    %1312 = vmatpush1.msra.mxu0 0.0
    %1313 = vmatprep.subr.mxu0 0.0
    %1314 = vmatpush1.msra.mxu0 0.0
    %1315 = vmatprep.subr.mxu0 %v1281
    %1316 = vmatpush1.msra.mxu0 %v1278
    %1317 = vmatprep.subr.mxu0 %v1264
    %1318 = vmatpush1.msra.mxu0 %v1263
    %1319 = vmatprep.subr.mxu0 %v1260
    %1320 = vmatpush1.msra.mxu0 %v1259
    %1321 = vmatprep.subr.mxu0 0.0
    %1322 = vmatpush2.msra.mxu0 0.0
    %1323 = vmatprep.subr.mxu0 0.0
    %1324 = vmatpush2.msra.mxu0 0.0
    %1325 = vmatprep.subr.mxu0 0.0
    %1326 = vmatpush2.msra.mxu0 0.0
    %1327 = vmatprep.subr.mxu0 0.0
    %1328 = vmatpush2.msra.mxu0 0.0
    %1329 = vmatprep.subr.mxu0 0.0
    %1330 = vmatpush2.msra.mxu0 0.0
    %1331 = vmatprep.subr.mxu0 0.0
    %1332 = vmatpush2.msra.mxu0 0.0
    %1333 = vmatprep.subr.mxu0 0.0
    %1334 = vmatpush2.msra.mxu0 0.0
    %1335 = vmatprep.subr.mxu0 0.0
    %1336 = vmatpush2.msra.mxu0 0.0
    %1337 = vmatprep.subr.mxu0 0.0
    %1338 = vmatpush2.msra.mxu0 0.0
    %1339 = vmatprep.subr.mxu0 0.0
    %1340 = vmatpush2.msra.mxu0 0.0
    %1341 = vmatprep.subr.mxu0 0.0
    %1342 = vmatpush2.msra.mxu0 0.0
    %1343 = vmatprep.subr.mxu0 0.0
    %1344 = vmatpush2.msra.mxu0 0.0
    %1345 = vmatprep.subr.mxu0 0.0
    %1346 = vmatpush2.msra.mxu0 0.0
    %1347 = vmatprep.subr.mxu0 0.0
    %1348 = vmatpush2.msra.mxu0 0.0
    %1349 = vmatprep.subr.mxu0 0.0
    %1350 = vmatpush2.msra.mxu0 0.0
    %1351 = vmatprep.subr.mxu0 0.0
    %1352 = vmatpush2.msra.mxu0 0.0
    %1353 = vmatprep.mubr.f32.mxu0 0.0
    %1354 = vmatmul.mubr.f32.gmra.mxu0 %v1272
    %v1355 = vpop.f32.mrf.mxu0
    %v1356 = vadd.f32 0.0, %v1355
    %v1357 = vpop.f32.mrf.mxu0
    %v1358 = vadd.f32 0.0, %v1357
    %1359 = vmatprep.mubr.f32.mxu0 0.0
    %1360 = vmatmul.mubr.f32.gmra.mxu0 %v1275
    %v1361 = vpop.f32.mrf.mxu0
    %v1362 = vadd.f32 0.0, %v1361
    %v1363 = vpop.f32.mrf.mxu0
    %v1364 = vadd.f32 0.0, %v1363
    %1365 = vdwg.mxu0
    %1366 = vmatprep.subr.mxu0 0.0
    %1367 = vmatpush1.msra.mxu0 0.0
    %1368 = vmatprep.subr.mxu0 0.0
    %1369 = vmatpush1.msra.mxu0 0.0
    %1370 = vmatprep.subr.mxu0 0.0
    %1371 = vmatpush1.msra.mxu0 0.0
    %1372 = vmatprep.subr.mxu0 0.0
    %1373 = vmatpush1.msra.mxu0 0.0
    %1374 = vmatprep.subr.mxu0 0.0
    %1375 = vmatpush1.msra.mxu0 0.0
    %1376 = vmatprep.subr.mxu0 0.0
    %1377 = vmatpush1.msra.mxu0 0.0
    %1378 = vmatprep.subr.mxu0 0.0
    %1379 = vmatpush1.msra.mxu0 0.0
    %1380 = vmatprep.subr.mxu0 0.0
    %1381 = vmatpush1.msra.mxu0 0.0
    %1382 = vmatprep.subr.mxu0 0.0
    %1383 = vmatpush1.msra.mxu0 0.0
    %1384 = vmatprep.subr.mxu0 0.0
    %1385 = vmatpush1.msra.mxu0 0.0
    %1386 = vmatprep.subr.mxu0 0.0
    %1387 = vmatpush1.msra.mxu0 0.0
    %1388 = vmatprep.subr.mxu0 0.0
    %1389 = vmatpush1.msra.mxu0 0.0
    %1390 = vmatprep.subr.mxu0 0.0
    %1391 = vmatpush1.msra.mxu0 0.0
    %1392 = vmatprep.subr.mxu0 %v1287
    %1393 = vmatpush1.msra.mxu0 %v1284
    %1394 = vmatprep.subr.mxu0 %v1266
    %1395 = vmatpush1.msra.mxu0 %v1265
    %1396 = vmatprep.subr.mxu0 %v1262
    %1397 = vmatpush1.msra.mxu0 %v1261
    %1398 = vmatprep.subr.mxu0 0.0
    %1399 = vmatpush2.msra.mxu0 0.0
    %1400 = vmatprep.subr.mxu0 0.0
    %1401 = vmatpush2.msra.mxu0 0.0
    %1402 = vmatprep.subr.mxu0 0.0
    %1403 = vmatpush2.msra.mxu0 0.0
    %1404 = vmatprep.subr.mxu0 0.0
    %1405 = vmatpush2.msra.mxu0 0.0
    %1406 = vmatprep.subr.mxu0 0.0
    %1407 = vmatpush2.msra.mxu0 0.0
    %1408 = vmatprep.subr.mxu0 0.0
    %1409 = vmatpush2.msra.mxu0 0.0
    %1410 = vmatprep.subr.mxu0 0.0
    %1411 = vmatpush2.msra.mxu0 0.0
    %1412 = vmatprep.subr.mxu0 0.0
    %1413 = vmatpush2.msra.mxu0 0.0
    %1414 = vmatprep.subr.mxu0 0.0
    %1415 = vmatpush2.msra.mxu0 0.0
    %1416 = vmatprep.subr.mxu0 0.0
    %1417 = vmatpush2.msra.mxu0 0.0
    %1418 = vmatprep.subr.mxu0 0.0
    %1419 = vmatpush2.msra.mxu0 0.0
    %1420 = vmatprep.subr.mxu0 0.0
    %1421 = vmatpush2.msra.mxu0 0.0
    %1422 = vmatprep.subr.mxu0 0.0
    %1423 = vmatpush2.msra.mxu0 0.0
    %1424 = vmatprep.subr.mxu0 0.0
    %1425 = vmatpush2.msra.mxu0 0.0
    %1426 = vmatprep.subr.mxu0 0.0
    %1427 = vmatpush2.msra.mxu0 0.0
    %1428 = vmatprep.subr.mxu0 0.0
    %1429 = vmatpush2.msra.mxu0 0.0
    %1430 = vmatprep.mubr.f32.mxu0 0.0
    %1431 = vmatmul.mubr.f32.gmra.mxu0 %v1272
    %v1432 = vpop.f32.mrf.mxu0
    %v1433 = vadd.f32 0.0, %v1432
    %v1434 = vpop.f32.mrf.mxu0
    %v1435 = vadd.f32 0.0, %v1434
    %1436 = vmatprep.mubr.f32.mxu0 0.0
    %1437 = vmatmul.mubr.f32.gmra.mxu0 %v1275
    %v1438 = vpop.f32.mrf.mxu0
    %v1439 = vadd.f32 0.0, %v1438
    %v1440 = vpop.f32.mrf.mxu0
    %v1441 = vadd.f32 0.0, %v1440
    %1442 = vdwg.mxu0
    %v1443 = vadd.f32 %v1166, %v1356
    %v1444 = vadd.f32 %v1167, %v1358
    %v1445 = vadd.f32 %v1168, %v1433
    %v1446 = vadd.f32 %v1169, %v1435
    %v1447 = vadd.f32 %v1170, %v1362
    %v1448 = vadd.f32 %v1171, %v1364
    %v1449 = vadd.f32 %v1172, %v1439
    %v1450 = vadd.f32 %v1173, %v1441
    %s1451 = scalar_lea.vmem %s3, 64
    %v1452 = vld [vmem:[%s1451] sm:$0xff]
    %v1453 = vld [vmem:[%s1451 + $0x8] sm:$0xff]
    %v1455 = vsel %vm103, %v1452, 0
    %v1458 = vsel %vm103, %v1453, 0
    %1460 = vmatprep.subr.mxu0 0.0
    %1461 = vmatpush1.msra.mxu0 0.0
    %1462 = vmatprep.subr.mxu0 0.0
    %1463 = vmatpush1.msra.mxu0 0.0
    %1464 = vmatprep.subr.mxu0 0.0
    %1465 = vmatpush1.msra.mxu0 0.0
    %1466 = vmatprep.subr.mxu0 0.0
    %1467 = vmatpush1.msra.mxu0 0.0
    %1468 = vmatprep.subr.mxu0 0.0
    %1469 = vmatpush1.msra.mxu0 0.0
    %1470 = vmatprep.subr.mxu0 0.0
    %1471 = vmatpush1.msra.mxu0 0.0
    %1472 = vmatprep.subr.mxu0 0.0
    %1473 = vmatpush1.msra.mxu0 0.0
    %1474 = vmatprep.subr.mxu0 0.0
    %1475 = vmatpush1.msra.mxu0 0.0
    %1476 = vmatprep.subr.mxu0 0.0
    %1477 = vmatpush1.msra.mxu0 0.0
    %1478 = vmatprep.subr.mxu0 0.0
    %1479 = vmatpush1.msra.mxu0 0.0
    %1480 = vmatprep.subr.mxu0 0.0
    %1481 = vmatpush1.msra.mxu0 0.0
    %1482 = vmatprep.subr.mxu0 0.0
    %1483 = vmatpush1.msra.mxu0 0.0
    %1484 = vmatprep.subr.mxu0 0.0
    %1485 = vmatpush1.msra.mxu0 0.0
    %1486 = vmatprep.subr.mxu0 0.0
    %1487 = vmatpush1.msra.mxu0 0.0
    %1488 = vmatprep.subr.mxu0 0.0
    %1489 = vmatpush1.msra.mxu0 %v357
    %1490 = vmatprep.subr.mxu0 0.0
    %1491 = vmatpush1.msra.mxu0 %v352
    %1492 = vmatprep.subr.mxu0 0.0
    %1493 = vmatpush2.msra.mxu0 0.0
    %1494 = vmatprep.subr.mxu0 0.0
    %1495 = vmatpush2.msra.mxu0 0.0
    %1496 = vmatprep.subr.mxu0 0.0
    %1497 = vmatpush2.msra.mxu0 0.0
    %1498 = vmatprep.subr.mxu0 0.0
    %1499 = vmatpush2.msra.mxu0 0.0
    %1500 = vmatprep.subr.mxu0 0.0
    %1501 = vmatpush2.msra.mxu0 0.0
    %1502 = vmatprep.subr.mxu0 0.0
    %1503 = vmatpush2.msra.mxu0 0.0
    %1504 = vmatprep.subr.mxu0 0.0
    %1505 = vmatpush2.msra.mxu0 0.0
    %1506 = vmatprep.subr.mxu0 0.0
    %1507 = vmatpush2.msra.mxu0 0.0
    %1508 = vmatprep.subr.mxu0 0.0
    %1509 = vmatpush2.msra.mxu0 0.0
    %1510 = vmatprep.subr.mxu0 0.0
    %1511 = vmatpush2.msra.mxu0 0.0
    %1512 = vmatprep.subr.mxu0 0.0
    %1513 = vmatpush2.msra.mxu0 0.0
    %1514 = vmatprep.subr.mxu0 0.0
    %1515 = vmatpush2.msra.mxu0 0.0
    %1516 = vmatprep.subr.mxu0 0.0
    %1517 = vmatpush2.msra.mxu0 0.0
    %1518 = vmatprep.subr.mxu0 0.0
    %1519 = vmatpush2.msra.mxu0 0.0
    %1520 = vmatprep.subr.mxu0 0.0
    %1521 = vmatpush2.msra.mxu0 0.0
    %1522 = vmatprep.subr.mxu0 0.0
    %1523 = vmatpush2.msra.mxu0 0.0
    %1524 = vmatprep.mubr.f32.mxu0 0.0
    %1525 = vmatmul.mubr.f32.gmra.mxu0 %v1455
    %v1526 = vpop.f32.mrf.mxu0
    %v1527 = vadd.f32 0.0, %v1526
    %v1528 = vpop.f32.mrf.mxu0
    %1529 = vmatprep.mubr.f32.mxu0 0.0
    %1530 = vmatmul.mubr.f32.gmra.mxu0 %v1458
    %v1531 = vpop.f32.mrf.mxu0
    %v1532 = vadd.f32 0.0, %v1531
    %v1533 = vpop.f32.mrf.mxu0
    %1534 = vdwg.mxu0
    %s1535 = scalar_lea.vmem %s4, 384
    %v1536 = vld [vmem:[%s1535] sm:$0xff]
    %v1537 = vld [vmem:[%s1535 + $0x8] sm:$0xff]
    %v1538 = vld [vmem:[%s1535 + $0x10] sm:$0xff]
    %v1539 = vld [vmem:[%s1535 + $0x18] sm:$0xff]
    %v1540 = vld [vmem:[%s1535 + $0x20] sm:$0xff]
    %v1541 = vld [vmem:[%s1535 + $0x28] sm:$0xff]
    %v1542 = vld [vmem:[%s1535 + $0x30] sm:$0xff]
    %v1543 = vld [vmem:[%s1535 + $0x38] sm:$0xff]
    %v1544 = vld [vmem:[%s1535 + $0x40] sm:$0x3f]
    %v1545 = vld [vmem:[%s1535 + $0x48] sm:$0x3f]
    %v1546 = vld [vmem:[%s1535 + $0x50] sm:$0x3f]
    %v1547 = vld [vmem:[%s1535 + $0x58] sm:$0x3f]
    %v1549 = vsel %vm552, %v1527, 0
    %v1552 = vsel %vm552, %v1532, 0
    %v1555 = vsel %vm281, %v1544, 0
    %v1558 = vsel %vm281, %v1545, 0
    %v1561 = vsel %vm281, %v1546, 0
    %v1564 = vsel %vm281, %v1547, 0
    %1566 = vmatprep.subr.mxu0 0.0
    %1567 = vmatpush1.msra.mxu0 0.0
    %1568 = vmatprep.subr.mxu0 0.0
    %1569 = vmatpush1.msra.mxu0 0.0
    %1570 = vmatprep.subr.mxu0 0.0
    %1571 = vmatpush1.msra.mxu0 0.0
    %1572 = vmatprep.subr.mxu0 0.0
    %1573 = vmatpush1.msra.mxu0 0.0
    %1574 = vmatprep.subr.mxu0 0.0
    %1575 = vmatpush1.msra.mxu0 0.0
    %1576 = vmatprep.subr.mxu0 0.0
    %1577 = vmatpush1.msra.mxu0 0.0
    %1578 = vmatprep.subr.mxu0 0.0
    %1579 = vmatpush1.msra.mxu0 0.0
    %1580 = vmatprep.subr.mxu0 0.0
    %1581 = vmatpush1.msra.mxu0 0.0
    %1582 = vmatprep.subr.mxu0 0.0
    %1583 = vmatpush1.msra.mxu0 0.0
    %1584 = vmatprep.subr.mxu0 0.0
    %1585 = vmatpush1.msra.mxu0 0.0
    %1586 = vmatprep.subr.mxu0 0.0
    %1587 = vmatpush1.msra.mxu0 0.0
    %1588 = vmatprep.subr.mxu0 0.0
    %1589 = vmatpush1.msra.mxu0 0.0
    %1590 = vmatprep.subr.mxu0 0.0
    %1591 = vmatpush1.msra.mxu0 0.0
    %1592 = vmatprep.subr.mxu0 %v1558
    %1593 = vmatpush1.msra.mxu0 %v1555
    %1594 = vmatprep.subr.mxu0 %v1541
    %1595 = vmatpush1.msra.mxu0 %v1540
    %1596 = vmatprep.subr.mxu0 %v1537
    %1597 = vmatpush1.msra.mxu0 %v1536
    %1598 = vmatprep.subr.mxu0 0.0
    %1599 = vmatpush2.msra.mxu0 0.0
    %1600 = vmatprep.subr.mxu0 0.0
    %1601 = vmatpush2.msra.mxu0 0.0
    %1602 = vmatprep.subr.mxu0 0.0
    %1603 = vmatpush2.msra.mxu0 0.0
    %1604 = vmatprep.subr.mxu0 0.0
    %1605 = vmatpush2.msra.mxu0 0.0
    %1606 = vmatprep.subr.mxu0 0.0
    %1607 = vmatpush2.msra.mxu0 0.0
    %1608 = vmatprep.subr.mxu0 0.0
    %1609 = vmatpush2.msra.mxu0 0.0
    %1610 = vmatprep.subr.mxu0 0.0
    %1611 = vmatpush2.msra.mxu0 0.0
    %1612 = vmatprep.subr.mxu0 0.0
    %1613 = vmatpush2.msra.mxu0 0.0
    %1614 = vmatprep.subr.mxu0 0.0
    %1615 = vmatpush2.msra.mxu0 0.0
    %1616 = vmatprep.subr.mxu0 0.0
    %1617 = vmatpush2.msra.mxu0 0.0
    %1618 = vmatprep.subr.mxu0 0.0
    %1619 = vmatpush2.msra.mxu0 0.0
    %1620 = vmatprep.subr.mxu0 0.0
    %1621 = vmatpush2.msra.mxu0 0.0
    %1622 = vmatprep.subr.mxu0 0.0
    %1623 = vmatpush2.msra.mxu0 0.0
    %1624 = vmatprep.subr.mxu0 0.0
    %1625 = vmatpush2.msra.mxu0 0.0
    %1626 = vmatprep.subr.mxu0 0.0
    %1627 = vmatpush2.msra.mxu0 0.0
    %1628 = vmatprep.subr.mxu0 0.0
    %1629 = vmatpush2.msra.mxu0 0.0
    %1630 = vmatprep.mubr.f32.mxu0 0.0
    %1631 = vmatmul.mubr.f32.gmra.mxu0 %v1549
    %v1632 = vpop.f32.mrf.mxu0
    %v1633 = vadd.f32 0.0, %v1632
    %v1634 = vpop.f32.mrf.mxu0
    %v1635 = vadd.f32 0.0, %v1634
    %1636 = vmatprep.mubr.f32.mxu0 0.0
    %1637 = vmatmul.mubr.f32.gmra.mxu0 %v1552
    %v1638 = vpop.f32.mrf.mxu0
    %v1639 = vadd.f32 0.0, %v1638
    %v1640 = vpop.f32.mrf.mxu0
    %v1641 = vadd.f32 0.0, %v1640
    %1642 = vdwg.mxu0
    %1643 = vmatprep.subr.mxu0 0.0
    %1644 = vmatpush1.msra.mxu0 0.0
    %1645 = vmatprep.subr.mxu0 0.0
    %1646 = vmatpush1.msra.mxu0 0.0
    %1647 = vmatprep.subr.mxu0 0.0
    %1648 = vmatpush1.msra.mxu0 0.0
    %1649 = vmatprep.subr.mxu0 0.0
    %1650 = vmatpush1.msra.mxu0 0.0
    %1651 = vmatprep.subr.mxu0 0.0
    %1652 = vmatpush1.msra.mxu0 0.0
    %1653 = vmatprep.subr.mxu0 0.0
    %1654 = vmatpush1.msra.mxu0 0.0
    %1655 = vmatprep.subr.mxu0 0.0
    %1656 = vmatpush1.msra.mxu0 0.0
    %1657 = vmatprep.subr.mxu0 0.0
    %1658 = vmatpush1.msra.mxu0 0.0
    %1659 = vmatprep.subr.mxu0 0.0
    %1660 = vmatpush1.msra.mxu0 0.0
    %1661 = vmatprep.subr.mxu0 0.0
    %1662 = vmatpush1.msra.mxu0 0.0
    %1663 = vmatprep.subr.mxu0 0.0
    %1664 = vmatpush1.msra.mxu0 0.0
    %1665 = vmatprep.subr.mxu0 0.0
    %1666 = vmatpush1.msra.mxu0 0.0
    %1667 = vmatprep.subr.mxu0 0.0
    %1668 = vmatpush1.msra.mxu0 0.0
    %1669 = vmatprep.subr.mxu0 %v1564
    %1670 = vmatpush1.msra.mxu0 %v1561
    %1671 = vmatprep.subr.mxu0 %v1543
    %1672 = vmatpush1.msra.mxu0 %v1542
    %1673 = vmatprep.subr.mxu0 %v1539
    %1674 = vmatpush1.msra.mxu0 %v1538
    %1675 = vmatprep.subr.mxu0 0.0
    %1676 = vmatpush2.msra.mxu0 0.0
    %1677 = vmatprep.subr.mxu0 0.0
    %1678 = vmatpush2.msra.mxu0 0.0
    %1679 = vmatprep.subr.mxu0 0.0
    %1680 = vmatpush2.msra.mxu0 0.0
    %1681 = vmatprep.subr.mxu0 0.0
    %1682 = vmatpush2.msra.mxu0 0.0
    %1683 = vmatprep.subr.mxu0 0.0
    %1684 = vmatpush2.msra.mxu0 0.0
    %1685 = vmatprep.subr.mxu0 0.0
    %1686 = vmatpush2.msra.mxu0 0.0
    %1687 = vmatprep.subr.mxu0 0.0
    %1688 = vmatpush2.msra.mxu0 0.0
    %1689 = vmatprep.subr.mxu0 0.0
    %1690 = vmatpush2.msra.mxu0 0.0
    %1691 = vmatprep.subr.mxu0 0.0
    %1692 = vmatpush2.msra.mxu0 0.0
    %1693 = vmatprep.subr.mxu0 0.0
    %1694 = vmatpush2.msra.mxu0 0.0
    %1695 = vmatprep.subr.mxu0 0.0
    %1696 = vmatpush2.msra.mxu0 0.0
    %1697 = vmatprep.subr.mxu0 0.0
    %1698 = vmatpush2.msra.mxu0 0.0
    %1699 = vmatprep.subr.mxu0 0.0
    %1700 = vmatpush2.msra.mxu0 0.0
    %1701 = vmatprep.subr.mxu0 0.0
    %1702 = vmatpush2.msra.mxu0 0.0
    %1703 = vmatprep.subr.mxu0 0.0
    %1704 = vmatpush2.msra.mxu0 0.0
    %1705 = vmatprep.subr.mxu0 0.0
    %1706 = vmatpush2.msra.mxu0 0.0
    %1707 = vmatprep.mubr.f32.mxu0 0.0
    %1708 = vmatmul.mubr.f32.gmra.mxu0 %v1549
    %v1709 = vpop.f32.mrf.mxu0
    %v1710 = vadd.f32 0.0, %v1709
    %v1711 = vpop.f32.mrf.mxu0
    %v1712 = vadd.f32 0.0, %v1711
    %1713 = vmatprep.mubr.f32.mxu0 0.0
    %1714 = vmatmul.mubr.f32.gmra.mxu0 %v1552
    %v1715 = vpop.f32.mrf.mxu0
    %v1716 = vadd.f32 0.0, %v1715
    %v1717 = vpop.f32.mrf.mxu0
    %v1718 = vadd.f32 0.0, %v1717
    %1719 = vdwg.mxu0
    %v1720 = vadd.f32 %v1443, %v1633
    %v1721 = vadd.f32 %v1444, %v1635
    %v1722 = vadd.f32 %v1445, %v1710
    %v1723 = vadd.f32 %v1446, %v1712
    %v1724 = vadd.f32 %v1447, %v1639
    %v1725 = vadd.f32 %v1448, %v1641
    %v1726 = vadd.f32 %v1449, %v1716
    %v1727 = vadd.f32 %v1450, %v1718
    %s1728 = scalar_lea.vmem %s3, 80
    %v1729 = vld [vmem:[%s1728] sm:$0xff]
    %v1730 = vld [vmem:[%s1728 + $0x8] sm:$0xff]
    %v1732 = vsel %vm103, %v1729, 0
    %v1735 = vsel %vm103, %v1730, 0
    %1737 = vmatprep.subr.mxu0 0.0
    %1738 = vmatpush1.msra.mxu0 0.0
    %1739 = vmatprep.subr.mxu0 0.0
    %1740 = vmatpush1.msra.mxu0 0.0
    %1741 = vmatprep.subr.mxu0 0.0
    %1742 = vmatpush1.msra.mxu0 0.0
    %1743 = vmatprep.subr.mxu0 0.0
    %1744 = vmatpush1.msra.mxu0 0.0
    %1745 = vmatprep.subr.mxu0 0.0
    %1746 = vmatpush1.msra.mxu0 0.0
    %1747 = vmatprep.subr.mxu0 0.0
    %1748 = vmatpush1.msra.mxu0 0.0
    %1749 = vmatprep.subr.mxu0 0.0
    %1750 = vmatpush1.msra.mxu0 0.0
    %1751 = vmatprep.subr.mxu0 0.0
    %1752 = vmatpush1.msra.mxu0 0.0
    %1753 = vmatprep.subr.mxu0 0.0
    %1754 = vmatpush1.msra.mxu0 0.0
    %1755 = vmatprep.subr.mxu0 0.0
    %1756 = vmatpush1.msra.mxu0 0.0
    %1757 = vmatprep.subr.mxu0 0.0
    %1758 = vmatpush1.msra.mxu0 0.0
    %1759 = vmatprep.subr.mxu0 0.0
    %1760 = vmatpush1.msra.mxu0 0.0
    %1761 = vmatprep.subr.mxu0 0.0
    %1762 = vmatpush1.msra.mxu0 0.0
    %1763 = vmatprep.subr.mxu0 0.0
    %1764 = vmatpush1.msra.mxu0 0.0
    %1765 = vmatprep.subr.mxu0 0.0
    %1766 = vmatpush1.msra.mxu0 %v357
    %1767 = vmatprep.subr.mxu0 0.0
    %1768 = vmatpush1.msra.mxu0 %v352
    %1769 = vmatprep.subr.mxu0 0.0
    %1770 = vmatpush2.msra.mxu0 0.0
    %1771 = vmatprep.subr.mxu0 0.0
    %1772 = vmatpush2.msra.mxu0 0.0
    %1773 = vmatprep.subr.mxu0 0.0
    %1774 = vmatpush2.msra.mxu0 0.0
    %1775 = vmatprep.subr.mxu0 0.0
    %1776 = vmatpush2.msra.mxu0 0.0
    %1777 = vmatprep.subr.mxu0 0.0
    %1778 = vmatpush2.msra.mxu0 0.0
    %1779 = vmatprep.subr.mxu0 0.0
    %1780 = vmatpush2.msra.mxu0 0.0
    %1781 = vmatprep.subr.mxu0 0.0
    %1782 = vmatpush2.msra.mxu0 0.0
    %1783 = vmatprep.subr.mxu0 0.0
    %1784 = vmatpush2.msra.mxu0 0.0
    %1785 = vmatprep.subr.mxu0 0.0
    %1786 = vmatpush2.msra.mxu0 0.0
    %1787 = vmatprep.subr.mxu0 0.0
    %1788 = vmatpush2.msra.mxu0 0.0
    %1789 = vmatprep.subr.mxu0 0.0
    %1790 = vmatpush2.msra.mxu0 0.0
    %1791 = vmatprep.subr.mxu0 0.0
    %1792 = vmatpush2.msra.mxu0 0.0
    %1793 = vmatprep.subr.mxu0 0.0
    %1794 = vmatpush2.msra.mxu0 0.0
    %1795 = vmatprep.subr.mxu0 0.0
    %1796 = vmatpush2.msra.mxu0 0.0
    %1797 = vmatprep.subr.mxu0 0.0
    %1798 = vmatpush2.msra.mxu0 0.0
    %1799 = vmatprep.subr.mxu0 0.0
    %1800 = vmatpush2.msra.mxu0 0.0
    %1801 = vmatprep.mubr.f32.mxu0 0.0
    %1802 = vmatmul.mubr.f32.gmra.mxu0 %v1732
    %v1803 = vpop.f32.mrf.mxu0
    %v1804 = vadd.f32 0.0, %v1803
    %v1805 = vpop.f32.mrf.mxu0
    %1806 = vmatprep.mubr.f32.mxu0 0.0
    %1807 = vmatmul.mubr.f32.gmra.mxu0 %v1735
    %v1808 = vpop.f32.mrf.mxu0
    %v1809 = vadd.f32 0.0, %v1808
    %v1810 = vpop.f32.mrf.mxu0
    %1811 = vdwg.mxu0
    %s1812 = scalar_lea.vmem %s4, 480
    %v1813 = vld [vmem:[%s1812] sm:$0xff]
    %v1814 = vld [vmem:[%s1812 + $0x8] sm:$0xff]
    %v1815 = vld [vmem:[%s1812 + $0x10] sm:$0xff]
    %v1816 = vld [vmem:[%s1812 + $0x18] sm:$0xff]
    %v1817 = vld [vmem:[%s1812 + $0x20] sm:$0xff]
    %v1818 = vld [vmem:[%s1812 + $0x28] sm:$0xff]
    %v1819 = vld [vmem:[%s1812 + $0x30] sm:$0xff]
    %v1820 = vld [vmem:[%s1812 + $0x38] sm:$0xff]
    %v1821 = vld [vmem:[%s1812 + $0x40] sm:$0x3f]
    %v1822 = vld [vmem:[%s1812 + $0x48] sm:$0x3f]
    %v1823 = vld [vmem:[%s1812 + $0x50] sm:$0x3f]
    %v1824 = vld [vmem:[%s1812 + $0x58] sm:$0x3f]
    %v1826 = vsel %vm552, %v1804, 0
    %v1829 = vsel %vm552, %v1809, 0
    %v1832 = vsel %vm281, %v1821, 0
    %v1835 = vsel %vm281, %v1822, 0
    %v1838 = vsel %vm281, %v1823, 0
    %v1841 = vsel %vm281, %v1824, 0
    %1843 = vmatprep.subr.mxu0 0.0
    %1844 = vmatpush1.msra.mxu0 0.0
    %1845 = vmatprep.subr.mxu0 0.0
    %1846 = vmatpush1.msra.mxu0 0.0
    %1847 = vmatprep.subr.mxu0 0.0
    %1848 = vmatpush1.msra.mxu0 0.0
    %1849 = vmatprep.subr.mxu0 0.0
    %1850 = vmatpush1.msra.mxu0 0.0
    %1851 = vmatprep.subr.mxu0 0.0
    %1852 = vmatpush1.msra.mxu0 0.0
    %1853 = vmatprep.subr.mxu0 0.0
    %1854 = vmatpush1.msra.mxu0 0.0
    %1855 = vmatprep.subr.mxu0 0.0
    %1856 = vmatpush1.msra.mxu0 0.0
    %1857 = vmatprep.subr.mxu0 0.0
    %1858 = vmatpush1.msra.mxu0 0.0
    %1859 = vmatprep.subr.mxu0 0.0
    %1860 = vmatpush1.msra.mxu0 0.0
    %1861 = vmatprep.subr.mxu0 0.0
    %1862 = vmatpush1.msra.mxu0 0.0
    %1863 = vmatprep.subr.mxu0 0.0
    %1864 = vmatpush1.msra.mxu0 0.0
    %1865 = vmatprep.subr.mxu0 0.0
    %1866 = vmatpush1.msra.mxu0 0.0
    %1867 = vmatprep.subr.mxu0 0.0
    %1868 = vmatpush1.msra.mxu0 0.0
    %1869 = vmatprep.subr.mxu0 %v1835
    %1870 = vmatpush1.msra.mxu0 %v1832
    %1871 = vmatprep.subr.mxu0 %v1818
    %1872 = vmatpush1.msra.mxu0 %v1817
    %1873 = vmatprep.subr.mxu0 %v1814
    %1874 = vmatpush1.msra.mxu0 %v1813
    %1875 = vmatprep.subr.mxu0 0.0
    %1876 = vmatpush2.msra.mxu0 0.0
    %1877 = vmatprep.subr.mxu0 0.0
    %1878 = vmatpush2.msra.mxu0 0.0
    %1879 = vmatprep.subr.mxu0 0.0
    %1880 = vmatpush2.msra.mxu0 0.0
    %1881 = vmatprep.subr.mxu0 0.0
    %1882 = vmatpush2.msra.mxu0 0.0
    %1883 = vmatprep.subr.mxu0 0.0
    %1884 = vmatpush2.msra.mxu0 0.0
    %1885 = vmatprep.subr.mxu0 0.0
    %1886 = vmatpush2.msra.mxu0 0.0
    %1887 = vmatprep.subr.mxu0 0.0
    %1888 = vmatpush2.msra.mxu0 0.0
    %1889 = vmatprep.subr.mxu0 0.0
    %1890 = vmatpush2.msra.mxu0 0.0
    %1891 = vmatprep.subr.mxu0 0.0
    %1892 = vmatpush2.msra.mxu0 0.0
    %1893 = vmatprep.subr.mxu0 0.0
    %1894 = vmatpush2.msra.mxu0 0.0
    %1895 = vmatprep.subr.mxu0 0.0
    %1896 = vmatpush2.msra.mxu0 0.0
    %1897 = vmatprep.subr.mxu0 0.0
    %1898 = vmatpush2.msra.mxu0 0.0
    %1899 = vmatprep.subr.mxu0 0.0
    %1900 = vmatpush2.msra.mxu0 0.0
    %1901 = vmatprep.subr.mxu0 0.0
    %1902 = vmatpush2.msra.mxu0 0.0
    %1903 = vmatprep.subr.mxu0 0.0
    %1904 = vmatpush2.msra.mxu0 0.0
    %1905 = vmatprep.subr.mxu0 0.0
    %1906 = vmatpush2.msra.mxu0 0.0
    %1907 = vmatprep.mubr.f32.mxu0 0.0
    %1908 = vmatmul.mubr.f32.gmra.mxu0 %v1826
    %v1909 = vpop.f32.mrf.mxu0
    %v1910 = vadd.f32 0.0, %v1909
    %v1911 = vpop.f32.mrf.mxu0
    %v1912 = vadd.f32 0.0, %v1911
    %1913 = vmatprep.mubr.f32.mxu0 0.0
    %1914 = vmatmul.mubr.f32.gmra.mxu0 %v1829
    %v1915 = vpop.f32.mrf.mxu0
    %v1916 = vadd.f32 0.0, %v1915
    %v1917 = vpop.f32.mrf.mxu0
    %v1918 = vadd.f32 0.0, %v1917
    %1919 = vdwg.mxu0
    %1920 = vmatprep.subr.mxu0 0.0
    %1921 = vmatpush1.msra.mxu0 0.0
    %1922 = vmatprep.subr.mxu0 0.0
    %1923 = vmatpush1.msra.mxu0 0.0
    %1924 = vmatprep.subr.mxu0 0.0
    %1925 = vmatpush1.msra.mxu0 0.0
    %1926 = vmatprep.subr.mxu0 0.0
    %1927 = vmatpush1.msra.mxu0 0.0
    %1928 = vmatprep.subr.mxu0 0.0
    %1929 = vmatpush1.msra.mxu0 0.0
    %1930 = vmatprep.subr.mxu0 0.0
    %1931 = vmatpush1.msra.mxu0 0.0
    %1932 = vmatprep.subr.mxu0 0.0
    %1933 = vmatpush1.msra.mxu0 0.0
    %1934 = vmatprep.subr.mxu0 0.0
    %1935 = vmatpush1.msra.mxu0 0.0
    %1936 = vmatprep.subr.mxu0 0.0
    %1937 = vmatpush1.msra.mxu0 0.0
    %1938 = vmatprep.subr.mxu0 0.0
    %1939 = vmatpush1.msra.mxu0 0.0
    %1940 = vmatprep.subr.mxu0 0.0
    %1941 = vmatpush1.msra.mxu0 0.0
    %1942 = vmatprep.subr.mxu0 0.0
    %1943 = vmatpush1.msra.mxu0 0.0
    %1944 = vmatprep.subr.mxu0 0.0
    %1945 = vmatpush1.msra.mxu0 0.0
    %1946 = vmatprep.subr.mxu0 %v1841
    %1947 = vmatpush1.msra.mxu0 %v1838
    %1948 = vmatprep.subr.mxu0 %v1820
    %1949 = vmatpush1.msra.mxu0 %v1819
    %1950 = vmatprep.subr.mxu0 %v1816
    %1951 = vmatpush1.msra.mxu0 %v1815
    %1952 = vmatprep.subr.mxu0 0.0
    %1953 = vmatpush2.msra.mxu0 0.0
    %1954 = vmatprep.subr.mxu0 0.0
    %1955 = vmatpush2.msra.mxu0 0.0
    %1956 = vmatprep.subr.mxu0 0.0
    %1957 = vmatpush2.msra.mxu0 0.0
    %1958 = vmatprep.subr.mxu0 0.0
    %1959 = vmatpush2.msra.mxu0 0.0
    %1960 = vmatprep.subr.mxu0 0.0
    %1961 = vmatpush2.msra.mxu0 0.0
    %1962 = vmatprep.subr.mxu0 0.0
    %1963 = vmatpush2.msra.mxu0 0.0
    %1964 = vmatprep.subr.mxu0 0.0
    %1965 = vmatpush2.msra.mxu0 0.0
    %1966 = vmatprep.subr.mxu0 0.0
    %1967 = vmatpush2.msra.mxu0 0.0
    %1968 = vmatprep.subr.mxu0 0.0
    %1969 = vmatpush2.msra.mxu0 0.0
    %1970 = vmatprep.subr.mxu0 0.0
    %1971 = vmatpush2.msra.mxu0 0.0
    %1972 = vmatprep.subr.mxu0 0.0
    %1973 = vmatpush2.msra.mxu0 0.0
    %1974 = vmatprep.subr.mxu0 0.0
    %1975 = vmatpush2.msra.mxu0 0.0
    %1976 = vmatprep.subr.mxu0 0.0
    %1977 = vmatpush2.msra.mxu0 0.0
    %1978 = vmatprep.subr.mxu0 0.0
    %1979 = vmatpush2.msra.mxu0 0.0
    %1980 = vmatprep.subr.mxu0 0.0
    %1981 = vmatpush2.msra.mxu0 0.0
    %1982 = vmatprep.subr.mxu0 0.0
    %1983 = vmatpush2.msra.mxu0 0.0
    %1984 = vmatprep.mubr.f32.mxu0 0.0
    %1985 = vmatmul.mubr.f32.gmra.mxu0 %v1826
    %v1986 = vpop.f32.mrf.mxu0
    %v1987 = vadd.f32 0.0, %v1986
    %v1988 = vpop.f32.mrf.mxu0
    %v1989 = vadd.f32 0.0, %v1988
    %1990 = vmatprep.mubr.f32.mxu0 0.0
    %1991 = vmatmul.mubr.f32.gmra.mxu0 %v1829
    %v1992 = vpop.f32.mrf.mxu0
    %v1993 = vadd.f32 0.0, %v1992
    %v1994 = vpop.f32.mrf.mxu0
    %v1995 = vadd.f32 0.0, %v1994
    %1996 = vdwg.mxu0
    %v1997 = vadd.f32 %v1720, %v1910
    %v1998 = vadd.f32 %v1721, %v1912
    %v1999 = vadd.f32 %v1722, %v1987
    %v2000 = vadd.f32 %v1723, %v1989
    %v2001 = vadd.f32 %v1724, %v1916
    %v2002 = vadd.f32 %v1725, %v1918
    %v2003 = vadd.f32 %v1726, %v1993
    %v2004 = vadd.f32 %v1727, %v1995
    %s2005 = scalar_lea.vmem %s3, 96
    %v2006 = vld [vmem:[%s2005] sm:$0xff]
    %v2007 = vld [vmem:[%s2005 + $0x8] sm:$0xff]
    %v2009 = vsel %vm103, %v2006, 0
    %v2012 = vsel %vm103, %v2007, 0
    %2014 = vmatprep.subr.mxu0 0.0
    %2015 = vmatpush1.msra.mxu0 0.0
    %2016 = vmatprep.subr.mxu0 0.0
    %2017 = vmatpush1.msra.mxu0 0.0
    %2018 = vmatprep.subr.mxu0 0.0
    %2019 = vmatpush1.msra.mxu0 0.0
    %2020 = vmatprep.subr.mxu0 0.0
    %2021 = vmatpush1.msra.mxu0 0.0
    %2022 = vmatprep.subr.mxu0 0.0
    %2023 = vmatpush1.msra.mxu0 0.0
    %2024 = vmatprep.subr.mxu0 0.0
    %2025 = vmatpush1.msra.mxu0 0.0
    %2026 = vmatprep.subr.mxu0 0.0
    %2027 = vmatpush1.msra.mxu0 0.0
    %2028 = vmatprep.subr.mxu0 0.0
    %2029 = vmatpush1.msra.mxu0 0.0
    %2030 = vmatprep.subr.mxu0 0.0
    %2031 = vmatpush1.msra.mxu0 0.0
    %2032 = vmatprep.subr.mxu0 0.0
    %2033 = vmatpush1.msra.mxu0 0.0
    %2034 = vmatprep.subr.mxu0 0.0
    %2035 = vmatpush1.msra.mxu0 0.0
    %2036 = vmatprep.subr.mxu0 0.0
    %2037 = vmatpush1.msra.mxu0 0.0
    %2038 = vmatprep.subr.mxu0 0.0
    %2039 = vmatpush1.msra.mxu0 0.0
    %2040 = vmatprep.subr.mxu0 0.0
    %2041 = vmatpush1.msra.mxu0 0.0
    %2042 = vmatprep.subr.mxu0 0.0
    %2043 = vmatpush1.msra.mxu0 %v357
    %2044 = vmatprep.subr.mxu0 0.0
    %2045 = vmatpush1.msra.mxu0 %v352
    %2046 = vmatprep.subr.mxu0 0.0
    %2047 = vmatpush2.msra.mxu0 0.0
    %2048 = vmatprep.subr.mxu0 0.0
    %2049 = vmatpush2.msra.mxu0 0.0
    %2050 = vmatprep.subr.mxu0 0.0
    %2051 = vmatpush2.msra.mxu0 0.0
    %2052 = vmatprep.subr.mxu0 0.0
    %2053 = vmatpush2.msra.mxu0 0.0
    %2054 = vmatprep.subr.mxu0 0.0
    %2055 = vmatpush2.msra.mxu0 0.0
    %2056 = vmatprep.subr.mxu0 0.0
    %2057 = vmatpush2.msra.mxu0 0.0
    %2058 = vmatprep.subr.mxu0 0.0
    %2059 = vmatpush2.msra.mxu0 0.0
    %2060 = vmatprep.subr.mxu0 0.0
    %2061 = vmatpush2.msra.mxu0 0.0
    %2062 = vmatprep.subr.mxu0 0.0
    %2063 = vmatpush2.msra.mxu0 0.0
    %2064 = vmatprep.subr.mxu0 0.0
    %2065 = vmatpush2.msra.mxu0 0.0
    %2066 = vmatprep.subr.mxu0 0.0
    %2067 = vmatpush2.msra.mxu0 0.0
    %2068 = vmatprep.subr.mxu0 0.0
    %2069 = vmatpush2.msra.mxu0 0.0
    %2070 = vmatprep.subr.mxu0 0.0
    %2071 = vmatpush2.msra.mxu0 0.0
    %2072 = vmatprep.subr.mxu0 0.0
    %2073 = vmatpush2.msra.mxu0 0.0
    %2074 = vmatprep.subr.mxu0 0.0
    %2075 = vmatpush2.msra.mxu0 0.0
    %2076 = vmatprep.subr.mxu0 0.0
    %2077 = vmatpush2.msra.mxu0 0.0
    %2078 = vmatprep.mubr.f32.mxu0 0.0
    %2079 = vmatmul.mubr.f32.gmra.mxu0 %v2009
    %v2080 = vpop.f32.mrf.mxu0
    %v2081 = vadd.f32 0.0, %v2080
    %v2082 = vpop.f32.mrf.mxu0
    %2083 = vmatprep.mubr.f32.mxu0 0.0
    %2084 = vmatmul.mubr.f32.gmra.mxu0 %v2012
    %v2085 = vpop.f32.mrf.mxu0
    %v2086 = vadd.f32 0.0, %v2085
    %v2087 = vpop.f32.mrf.mxu0
    %2088 = vdwg.mxu0
    %s2089 = scalar_lea.vmem %s4, 576
    %v2090 = vld [vmem:[%s2089] sm:$0xff]
    %v2091 = vld [vmem:[%s2089 + $0x8] sm:$0xff]
    %v2092 = vld [vmem:[%s2089 + $0x10] sm:$0xff]
    %v2093 = vld [vmem:[%s2089 + $0x18] sm:$0xff]
    %v2094 = vld [vmem:[%s2089 + $0x20] sm:$0xff]
    %v2095 = vld [vmem:[%s2089 + $0x28] sm:$0xff]
    %v2096 = vld [vmem:[%s2089 + $0x30] sm:$0xff]
    %v2097 = vld [vmem:[%s2089 + $0x38] sm:$0xff]
    %v2098 = vld [vmem:[%s2089 + $0x40] sm:$0x3f]
    %v2099 = vld [vmem:[%s2089 + $0x48] sm:$0x3f]
    %v2100 = vld [vmem:[%s2089 + $0x50] sm:$0x3f]
    %v2101 = vld [vmem:[%s2089 + $0x58] sm:$0x3f]
    %v2103 = vsel %vm552, %v2081, 0
    %v2106 = vsel %vm552, %v2086, 0
    %v2109 = vsel %vm281, %v2098, 0
    %v2112 = vsel %vm281, %v2099, 0
    %v2115 = vsel %vm281, %v2100, 0
    %v2118 = vsel %vm281, %v2101, 0
    %2120 = vmatprep.subr.mxu0 0.0
    %2121 = vmatpush1.msra.mxu0 0.0
    %2122 = vmatprep.subr.mxu0 0.0
    %2123 = vmatpush1.msra.mxu0 0.0
    %2124 = vmatprep.subr.mxu0 0.0
    %2125 = vmatpush1.msra.mxu0 0.0
    %2126 = vmatprep.subr.mxu0 0.0
    %2127 = vmatpush1.msra.mxu0 0.0
    %2128 = vmatprep.subr.mxu0 0.0
    %2129 = vmatpush1.msra.mxu0 0.0
    %2130 = vmatprep.subr.mxu0 0.0
    %2131 = vmatpush1.msra.mxu0 0.0
    %2132 = vmatprep.subr.mxu0 0.0
    %2133 = vmatpush1.msra.mxu0 0.0
    %2134 = vmatprep.subr.mxu0 0.0
    %2135 = vmatpush1.msra.mxu0 0.0
    %2136 = vmatprep.subr.mxu0 0.0
    %2137 = vmatpush1.msra.mxu0 0.0
    %2138 = vmatprep.subr.mxu0 0.0
    %2139 = vmatpush1.msra.mxu0 0.0
    %2140 = vmatprep.subr.mxu0 0.0
    %2141 = vmatpush1.msra.mxu0 0.0
    %2142 = vmatprep.subr.mxu0 0.0
    %2143 = vmatpush1.msra.mxu0 0.0
    %2144 = vmatprep.subr.mxu0 0.0
    %2145 = vmatpush1.msra.mxu0 0.0
    %2146 = vmatprep.subr.mxu0 %v2112
    %2147 = vmatpush1.msra.mxu0 %v2109
    %2148 = vmatprep.subr.mxu0 %v2095
    %2149 = vmatpush1.msra.mxu0 %v2094
    %2150 = vmatprep.subr.mxu0 %v2091
    %2151 = vmatpush1.msra.mxu0 %v2090
    %2152 = vmatprep.subr.mxu0 0.0
    %2153 = vmatpush2.msra.mxu0 0.0
    %2154 = vmatprep.subr.mxu0 0.0
    %2155 = vmatpush2.msra.mxu0 0.0
    %2156 = vmatprep.subr.mxu0 0.0
    %2157 = vmatpush2.msra.mxu0 0.0
    %2158 = vmatprep.subr.mxu0 0.0
    %2159 = vmatpush2.msra.mxu0 0.0
    %2160 = vmatprep.subr.mxu0 0.0
    %2161 = vmatpush2.msra.mxu0 0.0
    %2162 = vmatprep.subr.mxu0 0.0
    %2163 = vmatpush2.msra.mxu0 0.0
    %2164 = vmatprep.subr.mxu0 0.0
    %2165 = vmatpush2.msra.mxu0 0.0
    %2166 = vmatprep.subr.mxu0 0.0
    %2167 = vmatpush2.msra.mxu0 0.0
    %2168 = vmatprep.subr.mxu0 0.0
    %2169 = vmatpush2.msra.mxu0 0.0
    %2170 = vmatprep.subr.mxu0 0.0
    %2171 = vmatpush2.msra.mxu0 0.0
    %2172 = vmatprep.subr.mxu0 0.0
    %2173 = vmatpush2.msra.mxu0 0.0
    %2174 = vmatprep.subr.mxu0 0.0
    %2175 = vmatpush2.msra.mxu0 0.0
    %2176 = vmatprep.subr.mxu0 0.0
    %2177 = vmatpush2.msra.mxu0 0.0
    %2178 = vmatprep.subr.mxu0 0.0
    %2179 = vmatpush2.msra.mxu0 0.0
    %2180 = vmatprep.subr.mxu0 0.0
    %2181 = vmatpush2.msra.mxu0 0.0
    %2182 = vmatprep.subr.mxu0 0.0
    %2183 = vmatpush2.msra.mxu0 0.0
    %2184 = vmatprep.mubr.f32.mxu0 0.0
    %2185 = vmatmul.mubr.f32.gmra.mxu0 %v2103
    %v2186 = vpop.f32.mrf.mxu0
    %v2187 = vadd.f32 0.0, %v2186
    %v2188 = vpop.f32.mrf.mxu0
    %v2189 = vadd.f32 0.0, %v2188
    %2190 = vmatprep.mubr.f32.mxu0 0.0
    %2191 = vmatmul.mubr.f32.gmra.mxu0 %v2106
    %v2192 = vpop.f32.mrf.mxu0
    %v2193 = vadd.f32 0.0, %v2192
    %v2194 = vpop.f32.mrf.mxu0
    %v2195 = vadd.f32 0.0, %v2194
    %2196 = vdwg.mxu0
    %2197 = vmatprep.subr.mxu0 0.0
    %2198 = vmatpush1.msra.mxu0 0.0
    %2199 = vmatprep.subr.mxu0 0.0
    %2200 = vmatpush1.msra.mxu0 0.0
    %2201 = vmatprep.subr.mxu0 0.0
    %2202 = vmatpush1.msra.mxu0 0.0
    %2203 = vmatprep.subr.mxu0 0.0
    %2204 = vmatpush1.msra.mxu0 0.0
    %2205 = vmatprep.subr.mxu0 0.0
    %2206 = vmatpush1.msra.mxu0 0.0
    %2207 = vmatprep.subr.mxu0 0.0
    %2208 = vmatpush1.msra.mxu0 0.0
    %2209 = vmatprep.subr.mxu0 0.0
    %2210 = vmatpush1.msra.mxu0 0.0
    %2211 = vmatprep.subr.mxu0 0.0
    %2212 = vmatpush1.msra.mxu0 0.0
    %2213 = vmatprep.subr.mxu0 0.0
    %2214 = vmatpush1.msra.mxu0 0.0
    %2215 = vmatprep.subr.mxu0 0.0
    %2216 = vmatpush1.msra.mxu0 0.0
    %2217 = vmatprep.subr.mxu0 0.0
    %2218 = vmatpush1.msra.mxu0 0.0
    %2219 = vmatprep.subr.mxu0 0.0
    %2220 = vmatpush1.msra.mxu0 0.0
    %2221 = vmatprep.subr.mxu0 0.0
    %2222 = vmatpush1.msra.mxu0 0.0
    %2223 = vmatprep.subr.mxu0 %v2118
    %2224 = vmatpush1.msra.mxu0 %v2115
    %2225 = vmatprep.subr.mxu0 %v2097
    %2226 = vmatpush1.msra.mxu0 %v2096
    %2227 = vmatprep.subr.mxu0 %v2093
    %2228 = vmatpush1.msra.mxu0 %v2092
    %2229 = vmatprep.subr.mxu0 0.0
    %2230 = vmatpush2.msra.mxu0 0.0
    %2231 = vmatprep.subr.mxu0 0.0
    %2232 = vmatpush2.msra.mxu0 0.0
    %2233 = vmatprep.subr.mxu0 0.0
    %2234 = vmatpush2.msra.mxu0 0.0
    %2235 = vmatprep.subr.mxu0 0.0
    %2236 = vmatpush2.msra.mxu0 0.0
    %2237 = vmatprep.subr.mxu0 0.0
    %2238 = vmatpush2.msra.mxu0 0.0
    %2239 = vmatprep.subr.mxu0 0.0
    %2240 = vmatpush2.msra.mxu0 0.0
    %2241 = vmatprep.subr.mxu0 0.0
    %2242 = vmatpush2.msra.mxu0 0.0
    %2243 = vmatprep.subr.mxu0 0.0
    %2244 = vmatpush2.msra.mxu0 0.0
    %2245 = vmatprep.subr.mxu0 0.0
    %2246 = vmatpush2.msra.mxu0 0.0
    %2247 = vmatprep.subr.mxu0 0.0
    %2248 = vmatpush2.msra.mxu0 0.0
    %2249 = vmatprep.subr.mxu0 0.0
    %2250 = vmatpush2.msra.mxu0 0.0
    %2251 = vmatprep.subr.mxu0 0.0
    %2252 = vmatpush2.msra.mxu0 0.0
    %2253 = vmatprep.subr.mxu0 0.0
    %2254 = vmatpush2.msra.mxu0 0.0
    %2255 = vmatprep.subr.mxu0 0.0
    %2256 = vmatpush2.msra.mxu0 0.0
    %2257 = vmatprep.subr.mxu0 0.0
    %2258 = vmatpush2.msra.mxu0 0.0
    %2259 = vmatprep.subr.mxu0 0.0
    %2260 = vmatpush2.msra.mxu0 0.0
    %2261 = vmatprep.mubr.f32.mxu0 0.0
    %2262 = vmatmul.mubr.f32.gmra.mxu0 %v2103
    %v2263 = vpop.f32.mrf.mxu0
    %v2264 = vadd.f32 0.0, %v2263
    %v2265 = vpop.f32.mrf.mxu0
    %v2266 = vadd.f32 0.0, %v2265
    %2267 = vmatprep.mubr.f32.mxu0 0.0
    %2268 = vmatmul.mubr.f32.gmra.mxu0 %v2106
    %v2269 = vpop.f32.mrf.mxu0
    %v2270 = vadd.f32 0.0, %v2269
    %v2271 = vpop.f32.mrf.mxu0
    %v2272 = vadd.f32 0.0, %v2271
    %2273 = vdwg.mxu0
    %v2274 = vadd.f32 %v1997, %v2187
    %v2275 = vadd.f32 %v1998, %v2189
    %v2276 = vadd.f32 %v1999, %v2264
    %v2277 = vadd.f32 %v2000, %v2266
    %v2278 = vadd.f32 %v2001, %v2193
    %v2279 = vadd.f32 %v2002, %v2195
    %v2280 = vadd.f32 %v2003, %v2270
    %v2281 = vadd.f32 %v2004, %v2272
    %s2282 = scalar_lea.vmem %s3, 112
    %v2283 = vld [vmem:[%s2282] sm:$0xff]
    %v2284 = vld [vmem:[%s2282 + $0x8] sm:$0xff]
    %v2286 = vsel %vm103, %v2283, 0
    %v2289 = vsel %vm103, %v2284, 0
    %2291 = vmatprep.subr.mxu0 0.0
    %2292 = vmatpush1.msra.mxu0 0.0
    %2293 = vmatprep.subr.mxu0 0.0
    %2294 = vmatpush1.msra.mxu0 0.0
    %2295 = vmatprep.subr.mxu0 0.0
    %2296 = vmatpush1.msra.mxu0 0.0
    %2297 = vmatprep.subr.mxu0 0.0
    %2298 = vmatpush1.msra.mxu0 0.0
    %2299 = vmatprep.subr.mxu0 0.0
    %2300 = vmatpush1.msra.mxu0 0.0
    %2301 = vmatprep.subr.mxu0 0.0
    %2302 = vmatpush1.msra.mxu0 0.0
    %2303 = vmatprep.subr.mxu0 0.0
    %2304 = vmatpush1.msra.mxu0 0.0
    %2305 = vmatprep.subr.mxu0 0.0
    %2306 = vmatpush1.msra.mxu0 0.0
    %2307 = vmatprep.subr.mxu0 0.0
    %2308 = vmatpush1.msra.mxu0 0.0
    %2309 = vmatprep.subr.mxu0 0.0
    %2310 = vmatpush1.msra.mxu0 0.0
    %2311 = vmatprep.subr.mxu0 0.0
    %2312 = vmatpush1.msra.mxu0 0.0
    %2313 = vmatprep.subr.mxu0 0.0
    %2314 = vmatpush1.msra.mxu0 0.0
    %2315 = vmatprep.subr.mxu0 0.0
    %2316 = vmatpush1.msra.mxu0 0.0
    %2317 = vmatprep.subr.mxu0 0.0
    %2318 = vmatpush1.msra.mxu0 0.0
    %2319 = vmatprep.subr.mxu0 0.0
    %2320 = vmatpush1.msra.mxu0 %v357
    %2321 = vmatprep.subr.mxu0 0.0
    %2322 = vmatpush1.msra.mxu0 %v352
    %2323 = vmatprep.subr.mxu0 0.0
    %2324 = vmatpush2.msra.mxu0 0.0
    %2325 = vmatprep.subr.mxu0 0.0
    %2326 = vmatpush2.msra.mxu0 0.0
    %2327 = vmatprep.subr.mxu0 0.0
    %2328 = vmatpush2.msra.mxu0 0.0
    %2329 = vmatprep.subr.mxu0 0.0
    %2330 = vmatpush2.msra.mxu0 0.0
    %2331 = vmatprep.subr.mxu0 0.0
    %2332 = vmatpush2.msra.mxu0 0.0
    %2333 = vmatprep.subr.mxu0 0.0
    %2334 = vmatpush2.msra.mxu0 0.0
    %2335 = vmatprep.subr.mxu0 0.0
    %2336 = vmatpush2.msra.mxu0 0.0
    %2337 = vmatprep.subr.mxu0 0.0
    %2338 = vmatpush2.msra.mxu0 0.0
    %2339 = vmatprep.subr.mxu0 0.0
    %2340 = vmatpush2.msra.mxu0 0.0
    %2341 = vmatprep.subr.mxu0 0.0
    %2342 = vmatpush2.msra.mxu0 0.0
    %2343 = vmatprep.subr.mxu0 0.0
    %2344 = vmatpush2.msra.mxu0 0.0
    %2345 = vmatprep.subr.mxu0 0.0
    %2346 = vmatpush2.msra.mxu0 0.0
    %2347 = vmatprep.subr.mxu0 0.0
    %2348 = vmatpush2.msra.mxu0 0.0
    %2349 = vmatprep.subr.mxu0 0.0
    %2350 = vmatpush2.msra.mxu0 0.0
    %2351 = vmatprep.subr.mxu0 0.0
    %2352 = vmatpush2.msra.mxu0 0.0
    %2353 = vmatprep.subr.mxu0 0.0
    %2354 = vmatpush2.msra.mxu0 0.0
    %2355 = vmatprep.mubr.f32.mxu0 0.0
    %2356 = vmatmul.mubr.f32.gmra.mxu0 %v2286
    %v2357 = vpop.f32.mrf.mxu0
    %v2358 = vadd.f32 0.0, %v2357
    %v2359 = vpop.f32.mrf.mxu0
    %2360 = vmatprep.mubr.f32.mxu0 0.0
    %2361 = vmatmul.mubr.f32.gmra.mxu0 %v2289
    %v2362 = vpop.f32.mrf.mxu0
    %v2363 = vadd.f32 0.0, %v2362
    %v2364 = vpop.f32.mrf.mxu0
    %2365 = vdwg.mxu0
    %s2366 = scalar_lea.vmem %s4, 672
    %v2367 = vld [vmem:[%s2366] sm:$0xff]
    %v2368 = vld [vmem:[%s2366 + $0x8] sm:$0xff]
    %v2369 = vld [vmem:[%s2366 + $0x10] sm:$0xff]
    %v2370 = vld [vmem:[%s2366 + $0x18] sm:$0xff]
    %v2371 = vld [vmem:[%s2366 + $0x20] sm:$0xff]
    %v2372 = vld [vmem:[%s2366 + $0x28] sm:$0xff]
    %v2373 = vld [vmem:[%s2366 + $0x30] sm:$0xff]
    %v2374 = vld [vmem:[%s2366 + $0x38] sm:$0xff]
    %v2375 = vld [vmem:[%s2366 + $0x40] sm:$0x3f]
    %v2376 = vld [vmem:[%s2366 + $0x48] sm:$0x3f]
    %v2377 = vld [vmem:[%s2366 + $0x50] sm:$0x3f]
    %v2378 = vld [vmem:[%s2366 + $0x58] sm:$0x3f]
    %v2380 = vsel %vm552, %v2358, 0
    %v2383 = vsel %vm552, %v2363, 0
    %v2386 = vsel %vm281, %v2375, 0
    %v2389 = vsel %vm281, %v2376, 0
    %v2392 = vsel %vm281, %v2377, 0
    %v2395 = vsel %vm281, %v2378, 0
    %2397 = vmatprep.subr.mxu0 0.0
    %2398 = vmatpush1.msra.mxu0 0.0
    %2399 = vmatprep.subr.mxu0 0.0
    %2400 = vmatpush1.msra.mxu0 0.0
    %2401 = vmatprep.subr.mxu0 0.0
    %2402 = vmatpush1.msra.mxu0 0.0
    %2403 = vmatprep.subr.mxu0 0.0
    %2404 = vmatpush1.msra.mxu0 0.0
    %2405 = vmatprep.subr.mxu0 0.0
    %2406 = vmatpush1.msra.mxu0 0.0
    %2407 = vmatprep.subr.mxu0 0.0
    %2408 = vmatpush1.msra.mxu0 0.0
    %2409 = vmatprep.subr.mxu0 0.0
    %2410 = vmatpush1.msra.mxu0 0.0
    %2411 = vmatprep.subr.mxu0 0.0
    %2412 = vmatpush1.msra.mxu0 0.0
    %2413 = vmatprep.subr.mxu0 0.0
    %2414 = vmatpush1.msra.mxu0 0.0
    %2415 = vmatprep.subr.mxu0 0.0
    %2416 = vmatpush1.msra.mxu0 0.0
    %2417 = vmatprep.subr.mxu0 0.0
    %2418 = vmatpush1.msra.mxu0 0.0
    %2419 = vmatprep.subr.mxu0 0.0
    %2420 = vmatpush1.msra.mxu0 0.0
    %2421 = vmatprep.subr.mxu0 0.0
    %2422 = vmatpush1.msra.mxu0 0.0
    %2423 = vmatprep.subr.mxu0 %v2389
    %2424 = vmatpush1.msra.mxu0 %v2386
    %2425 = vmatprep.subr.mxu0 %v2372
    %2426 = vmatpush1.msra.mxu0 %v2371
    %2427 = vmatprep.subr.mxu0 %v2368
    %2428 = vmatpush1.msra.mxu0 %v2367
    %2429 = vmatprep.subr.mxu0 0.0
    %2430 = vmatpush2.msra.mxu0 0.0
    %2431 = vmatprep.subr.mxu0 0.0
    %2432 = vmatpush2.msra.mxu0 0.0
    %2433 = vmatprep.subr.mxu0 0.0
    %2434 = vmatpush2.msra.mxu0 0.0
    %2435 = vmatprep.subr.mxu0 0.0
    %2436 = vmatpush2.msra.mxu0 0.0
    %2437 = vmatprep.subr.mxu0 0.0
    %2438 = vmatpush2.msra.mxu0 0.0
    %2439 = vmatprep.subr.mxu0 0.0
    %2440 = vmatpush2.msra.mxu0 0.0
    %2441 = vmatprep.subr.mxu0 0.0
    %2442 = vmatpush2.msra.mxu0 0.0
    %2443 = vmatprep.subr.mxu0 0.0
    %2444 = vmatpush2.msra.mxu0 0.0
    %2445 = vmatprep.subr.mxu0 0.0
    %2446 = vmatpush2.msra.mxu0 0.0
    %2447 = vmatprep.subr.mxu0 0.0
    %2448 = vmatpush2.msra.mxu0 0.0
    %2449 = vmatprep.subr.mxu0 0.0
    %2450 = vmatpush2.msra.mxu0 0.0
    %2451 = vmatprep.subr.mxu0 0.0
    %2452 = vmatpush2.msra.mxu0 0.0
    %2453 = vmatprep.subr.mxu0 0.0
    %2454 = vmatpush2.msra.mxu0 0.0
    %2455 = vmatprep.subr.mxu0 0.0
    %2456 = vmatpush2.msra.mxu0 0.0
    %2457 = vmatprep.subr.mxu0 0.0
    %2458 = vmatpush2.msra.mxu0 0.0
    %2459 = vmatprep.subr.mxu0 0.0
    %2460 = vmatpush2.msra.mxu0 0.0
    %2461 = vmatprep.mubr.f32.mxu0 0.0
    %2462 = vmatmul.mubr.f32.gmra.mxu0 %v2380
    %v2463 = vpop.f32.mrf.mxu0
    %v2464 = vadd.f32 0.0, %v2463
    %v2465 = vpop.f32.mrf.mxu0
    %v2466 = vadd.f32 0.0, %v2465
    %2467 = vmatprep.mubr.f32.mxu0 0.0
    %2468 = vmatmul.mubr.f32.gmra.mxu0 %v2383
    %v2469 = vpop.f32.mrf.mxu0
    %v2470 = vadd.f32 0.0, %v2469
    %v2471 = vpop.f32.mrf.mxu0
    %v2472 = vadd.f32 0.0, %v2471
    %2473 = vdwg.mxu0
    %2474 = vmatprep.subr.mxu0 0.0
    %2475 = vmatpush1.msra.mxu0 0.0
    %2476 = vmatprep.subr.mxu0 0.0
    %2477 = vmatpush1.msra.mxu0 0.0
    %2478 = vmatprep.subr.mxu0 0.0
    %2479 = vmatpush1.msra.mxu0 0.0
    %2480 = vmatprep.subr.mxu0 0.0
    %2481 = vmatpush1.msra.mxu0 0.0
    %2482 = vmatprep.subr.mxu0 0.0
    %2483 = vmatpush1.msra.mxu0 0.0
    %2484 = vmatprep.subr.mxu0 0.0
    %2485 = vmatpush1.msra.mxu0 0.0
    %2486 = vmatprep.subr.mxu0 0.0
    %2487 = vmatpush1.msra.mxu0 0.0
    %2488 = vmatprep.subr.mxu0 0.0
    %2489 = vmatpush1.msra.mxu0 0.0
    %2490 = vmatprep.subr.mxu0 0.0
    %2491 = vmatpush1.msra.mxu0 0.0
    %2492 = vmatprep.subr.mxu0 0.0
    %2493 = vmatpush1.msra.mxu0 0.0
    %2494 = vmatprep.subr.mxu0 0.0
    %2495 = vmatpush1.msra.mxu0 0.0
    %2496 = vmatprep.subr.mxu0 0.0
    %2497 = vmatpush1.msra.mxu0 0.0
    %2498 = vmatprep.subr.mxu0 0.0
    %2499 = vmatpush1.msra.mxu0 0.0
    %2500 = vmatprep.subr.mxu0 %v2395
    %2501 = vmatpush1.msra.mxu0 %v2392
    %2502 = vmatprep.subr.mxu0 %v2374
    %2503 = vmatpush1.msra.mxu0 %v2373
    %2504 = vmatprep.subr.mxu0 %v2370
    %2505 = vmatpush1.msra.mxu0 %v2369
    %2506 = vmatprep.subr.mxu0 0.0
    %2507 = vmatpush2.msra.mxu0 0.0
    %2508 = vmatprep.subr.mxu0 0.0
    %2509 = vmatpush2.msra.mxu0 0.0
    %2510 = vmatprep.subr.mxu0 0.0
    %2511 = vmatpush2.msra.mxu0 0.0
    %2512 = vmatprep.subr.mxu0 0.0
    %2513 = vmatpush2.msra.mxu0 0.0
    %2514 = vmatprep.subr.mxu0 0.0
    %2515 = vmatpush2.msra.mxu0 0.0
    %2516 = vmatprep.subr.mxu0 0.0
    %2517 = vmatpush2.msra.mxu0 0.0
    %2518 = vmatprep.subr.mxu0 0.0
    %2519 = vmatpush2.msra.mxu0 0.0
    %2520 = vmatprep.subr.mxu0 0.0
    %2521 = vmatpush2.msra.mxu0 0.0
    %2522 = vmatprep.subr.mxu0 0.0
    %2523 = vmatpush2.msra.mxu0 0.0
    %2524 = vmatprep.subr.mxu0 0.0
    %2525 = vmatpush2.msra.mxu0 0.0
    %2526 = vmatprep.subr.mxu0 0.0
    %2527 = vmatpush2.msra.mxu0 0.0
    %2528 = vmatprep.subr.mxu0 0.0
    %2529 = vmatpush2.msra.mxu0 0.0
    %2530 = vmatprep.subr.mxu0 0.0
    %2531 = vmatpush2.msra.mxu0 0.0
    %2532 = vmatprep.subr.mxu0 0.0
    %2533 = vmatpush2.msra.mxu0 0.0
    %2534 = vmatprep.subr.mxu0 0.0
    %2535 = vmatpush2.msra.mxu0 0.0
    %2536 = vmatprep.subr.mxu0 0.0
    %2537 = vmatpush2.msra.mxu0 0.0
    %2538 = vmatprep.mubr.f32.mxu0 0.0
    %2539 = vmatmul.mubr.f32.gmra.mxu0 %v2380
    %v2540 = vpop.f32.mrf.mxu0
    %v2541 = vadd.f32 0.0, %v2540
    %v2542 = vpop.f32.mrf.mxu0
    %v2543 = vadd.f32 0.0, %v2542
    %2544 = vmatprep.mubr.f32.mxu0 0.0
    %2545 = vmatmul.mubr.f32.gmra.mxu0 %v2383
    %v2546 = vpop.f32.mrf.mxu0
    %v2547 = vadd.f32 0.0, %v2546
    %v2548 = vpop.f32.mrf.mxu0
    %v2549 = vadd.f32 0.0, %v2548
    %2550 = vdwg.mxu0
    %v2551 = vadd.f32 %v2274, %v2464
    %v2552 = vadd.f32 %v2275, %v2466
    %v2553 = vadd.f32 %v2276, %v2541
    %v2554 = vadd.f32 %v2277, %v2543
    %v2555 = vadd.f32 %v2278, %v2470
    %v2556 = vadd.f32 %v2279, %v2472
    %v2557 = vadd.f32 %v2280, %v2547
    %v2558 = vadd.f32 %v2281, %v2549
    %s2559 = scalar_lea.vmem %s3, 128
    %v2560 = vld [vmem:[%s2559] sm:$0xff]
    %v2561 = vld [vmem:[%s2559 + $0x8] sm:$0xff]
    %v2563 = vsel %vm103, %v2560, 0
    %v2566 = vsel %vm103, %v2561, 0
    %2568 = vmatprep.subr.mxu0 0.0
    %2569 = vmatpush1.msra.mxu0 0.0
    %2570 = vmatprep.subr.mxu0 0.0
    %2571 = vmatpush1.msra.mxu0 0.0
    %2572 = vmatprep.subr.mxu0 0.0
    %2573 = vmatpush1.msra.mxu0 0.0
    %2574 = vmatprep.subr.mxu0 0.0
    %2575 = vmatpush1.msra.mxu0 0.0
    %2576 = vmatprep.subr.mxu0 0.0
    %2577 = vmatpush1.msra.mxu0 0.0
    %2578 = vmatprep.subr.mxu0 0.0
    %2579 = vmatpush1.msra.mxu0 0.0
    %2580 = vmatprep.subr.mxu0 0.0
    %2581 = vmatpush1.msra.mxu0 0.0
    %2582 = vmatprep.subr.mxu0 0.0
    %2583 = vmatpush1.msra.mxu0 0.0
    %2584 = vmatprep.subr.mxu0 0.0
    %2585 = vmatpush1.msra.mxu0 0.0
    %2586 = vmatprep.subr.mxu0 0.0
    %2587 = vmatpush1.msra.mxu0 0.0
    %2588 = vmatprep.subr.mxu0 0.0
    %2589 = vmatpush1.msra.mxu0 0.0
    %2590 = vmatprep.subr.mxu0 0.0
    %2591 = vmatpush1.msra.mxu0 0.0
    %2592 = vmatprep.subr.mxu0 0.0
    %2593 = vmatpush1.msra.mxu0 0.0
    %2594 = vmatprep.subr.mxu0 0.0
    %2595 = vmatpush1.msra.mxu0 0.0
    %2596 = vmatprep.subr.mxu0 0.0
    %2597 = vmatpush1.msra.mxu0 %v357
    %2598 = vmatprep.subr.mxu0 0.0
    %2599 = vmatpush1.msra.mxu0 %v352
    %2600 = vmatprep.subr.mxu0 0.0
    %2601 = vmatpush2.msra.mxu0 0.0
    %2602 = vmatprep.subr.mxu0 0.0
    %2603 = vmatpush2.msra.mxu0 0.0
    %2604 = vmatprep.subr.mxu0 0.0
    %2605 = vmatpush2.msra.mxu0 0.0
    %2606 = vmatprep.subr.mxu0 0.0
    %2607 = vmatpush2.msra.mxu0 0.0
    %2608 = vmatprep.subr.mxu0 0.0
    %2609 = vmatpush2.msra.mxu0 0.0
    %2610 = vmatprep.subr.mxu0 0.0
    %2611 = vmatpush2.msra.mxu0 0.0
    %2612 = vmatprep.subr.mxu0 0.0
    %2613 = vmatpush2.msra.mxu0 0.0
    %2614 = vmatprep.subr.mxu0 0.0
    %2615 = vmatpush2.msra.mxu0 0.0
    %2616 = vmatprep.subr.mxu0 0.0
    %2617 = vmatpush2.msra.mxu0 0.0
    %2618 = vmatprep.subr.mxu0 0.0
    %2619 = vmatpush2.msra.mxu0 0.0
    %2620 = vmatprep.subr.mxu0 0.0
    %2621 = vmatpush2.msra.mxu0 0.0
    %2622 = vmatprep.subr.mxu0 0.0
    %2623 = vmatpush2.msra.mxu0 0.0
    %2624 = vmatprep.subr.mxu0 0.0
    %2625 = vmatpush2.msra.mxu0 0.0
    %2626 = vmatprep.subr.mxu0 0.0
    %2627 = vmatpush2.msra.mxu0 0.0
    %2628 = vmatprep.subr.mxu0 0.0
    %2629 = vmatpush2.msra.mxu0 0.0
    %2630 = vmatprep.subr.mxu0 0.0
    %2631 = vmatpush2.msra.mxu0 0.0
    %2632 = vmatprep.mubr.f32.mxu0 0.0
    %2633 = vmatmul.mubr.f32.gmra.mxu0 %v2563
    %v2634 = vpop.f32.mrf.mxu0
    %v2635 = vadd.f32 0.0, %v2634
    %v2636 = vpop.f32.mrf.mxu0
    %2637 = vmatprep.mubr.f32.mxu0 0.0
    %2638 = vmatmul.mubr.f32.gmra.mxu0 %v2566
    %v2639 = vpop.f32.mrf.mxu0
    %v2640 = vadd.f32 0.0, %v2639
    %v2641 = vpop.f32.mrf.mxu0
    %2642 = vdwg.mxu0
    %s2643 = scalar_lea.vmem %s4, 768
    %v2644 = vld [vmem:[%s2643] sm:$0xff]
    %v2645 = vld [vmem:[%s2643 + $0x8] sm:$0xff]
    %v2646 = vld [vmem:[%s2643 + $0x10] sm:$0xff]
    %v2647 = vld [vmem:[%s2643 + $0x18] sm:$0xff]
    %v2648 = vld [vmem:[%s2643 + $0x20] sm:$0xff]
    %v2649 = vld [vmem:[%s2643 + $0x28] sm:$0xff]
    %v2650 = vld [vmem:[%s2643 + $0x30] sm:$0xff]
    %v2651 = vld [vmem:[%s2643 + $0x38] sm:$0xff]
    %v2652 = vld [vmem:[%s2643 + $0x40] sm:$0x3f]
    %v2653 = vld [vmem:[%s2643 + $0x48] sm:$0x3f]
    %v2654 = vld [vmem:[%s2643 + $0x50] sm:$0x3f]
    %v2655 = vld [vmem:[%s2643 + $0x58] sm:$0x3f]
    %v2657 = vsel %vm552, %v2635, 0
    %v2660 = vsel %vm552, %v2640, 0
    %v2663 = vsel %vm281, %v2652, 0
    %v2666 = vsel %vm281, %v2653, 0
    %v2669 = vsel %vm281, %v2654, 0
    %v2672 = vsel %vm281, %v2655, 0
    %2674 = vmatprep.subr.mxu0 0.0
    %2675 = vmatpush1.msra.mxu0 0.0
    %2676 = vmatprep.subr.mxu0 0.0
    %2677 = vmatpush1.msra.mxu0 0.0
    %2678 = vmatprep.subr.mxu0 0.0
    %2679 = vmatpush1.msra.mxu0 0.0
    %2680 = vmatprep.subr.mxu0 0.0
    %2681 = vmatpush1.msra.mxu0 0.0
    %2682 = vmatprep.subr.mxu0 0.0
    %2683 = vmatpush1.msra.mxu0 0.0
    %2684 = vmatprep.subr.mxu0 0.0
    %2685 = vmatpush1.msra.mxu0 0.0
    %2686 = vmatprep.subr.mxu0 0.0
    %2687 = vmatpush1.msra.mxu0 0.0
    %2688 = vmatprep.subr.mxu0 0.0
    %2689 = vmatpush1.msra.mxu0 0.0
    %2690 = vmatprep.subr.mxu0 0.0
    %2691 = vmatpush1.msra.mxu0 0.0
    %2692 = vmatprep.subr.mxu0 0.0
    %2693 = vmatpush1.msra.mxu0 0.0
    %2694 = vmatprep.subr.mxu0 0.0
    %2695 = vmatpush1.msra.mxu0 0.0
    %2696 = vmatprep.subr.mxu0 0.0
    %2697 = vmatpush1.msra.mxu0 0.0
    %2698 = vmatprep.subr.mxu0 0.0
    %2699 = vmatpush1.msra.mxu0 0.0
    %2700 = vmatprep.subr.mxu0 %v2666
    %2701 = vmatpush1.msra.mxu0 %v2663
    %2702 = vmatprep.subr.mxu0 %v2649
    %2703 = vmatpush1.msra.mxu0 %v2648
    %2704 = vmatprep.subr.mxu0 %v2645
    %2705 = vmatpush1.msra.mxu0 %v2644
    %2706 = vmatprep.subr.mxu0 0.0
    %2707 = vmatpush2.msra.mxu0 0.0
    %2708 = vmatprep.subr.mxu0 0.0
    %2709 = vmatpush2.msra.mxu0 0.0
    %2710 = vmatprep.subr.mxu0 0.0
    %2711 = vmatpush2.msra.mxu0 0.0
    %2712 = vmatprep.subr.mxu0 0.0
    %2713 = vmatpush2.msra.mxu0 0.0
    %2714 = vmatprep.subr.mxu0 0.0
    %2715 = vmatpush2.msra.mxu0 0.0
    %2716 = vmatprep.subr.mxu0 0.0
    %2717 = vmatpush2.msra.mxu0 0.0
    %2718 = vmatprep.subr.mxu0 0.0
    %2719 = vmatpush2.msra.mxu0 0.0
    %2720 = vmatprep.subr.mxu0 0.0
    %2721 = vmatpush2.msra.mxu0 0.0
    %2722 = vmatprep.subr.mxu0 0.0
    %2723 = vmatpush2.msra.mxu0 0.0
    %2724 = vmatprep.subr.mxu0 0.0
    %2725 = vmatpush2.msra.mxu0 0.0
    %2726 = vmatprep.subr.mxu0 0.0
    %2727 = vmatpush2.msra.mxu0 0.0
    %2728 = vmatprep.subr.mxu0 0.0
    %2729 = vmatpush2.msra.mxu0 0.0
    %2730 = vmatprep.subr.mxu0 0.0
    %2731 = vmatpush2.msra.mxu0 0.0
    %2732 = vmatprep.subr.mxu0 0.0
    %2733 = vmatpush2.msra.mxu0 0.0
    %2734 = vmatprep.subr.mxu0 0.0
    %2735 = vmatpush2.msra.mxu0 0.0
    %2736 = vmatprep.subr.mxu0 0.0
    %2737 = vmatpush2.msra.mxu0 0.0
    %2738 = vmatprep.mubr.f32.mxu0 0.0
    %2739 = vmatmul.mubr.f32.gmra.mxu0 %v2657
    %v2740 = vpop.f32.mrf.mxu0
    %v2741 = vadd.f32 0.0, %v2740
    %v2742 = vpop.f32.mrf.mxu0
    %v2743 = vadd.f32 0.0, %v2742
    %2744 = vmatprep.mubr.f32.mxu0 0.0
    %2745 = vmatmul.mubr.f32.gmra.mxu0 %v2660
    %v2746 = vpop.f32.mrf.mxu0
    %v2747 = vadd.f32 0.0, %v2746
    %v2748 = vpop.f32.mrf.mxu0
    %v2749 = vadd.f32 0.0, %v2748
    %2750 = vdwg.mxu0
    %2751 = vmatprep.subr.mxu0 0.0
    %2752 = vmatpush1.msra.mxu0 0.0
    %2753 = vmatprep.subr.mxu0 0.0
    %2754 = vmatpush1.msra.mxu0 0.0
    %2755 = vmatprep.subr.mxu0 0.0
    %2756 = vmatpush1.msra.mxu0 0.0
    %2757 = vmatprep.subr.mxu0 0.0
    %2758 = vmatpush1.msra.mxu0 0.0
    %2759 = vmatprep.subr.mxu0 0.0
    %2760 = vmatpush1.msra.mxu0 0.0
    %2761 = vmatprep.subr.mxu0 0.0
    %2762 = vmatpush1.msra.mxu0 0.0
    %2763 = vmatprep.subr.mxu0 0.0
    %2764 = vmatpush1.msra.mxu0 0.0
    %2765 = vmatprep.subr.mxu0 0.0
    %2766 = vmatpush1.msra.mxu0 0.0
    %2767 = vmatprep.subr.mxu0 0.0
    %2768 = vmatpush1.msra.mxu0 0.0
    %2769 = vmatprep.subr.mxu0 0.0
    %2770 = vmatpush1.msra.mxu0 0.0
    %2771 = vmatprep.subr.mxu0 0.0
    %2772 = vmatpush1.msra.mxu0 0.0
    %2773 = vmatprep.subr.mxu0 0.0
    %2774 = vmatpush1.msra.mxu0 0.0
    %2775 = vmatprep.subr.mxu0 0.0
    %2776 = vmatpush1.msra.mxu0 0.0
    %2777 = vmatprep.subr.mxu0 %v2672
    %2778 = vmatpush1.msra.mxu0 %v2669
    %2779 = vmatprep.subr.mxu0 %v2651
    %2780 = vmatpush1.msra.mxu0 %v2650
    %2781 = vmatprep.subr.mxu0 %v2647
    %2782 = vmatpush1.msra.mxu0 %v2646
    %2783 = vmatprep.subr.mxu0 0.0
    %2784 = vmatpush2.msra.mxu0 0.0
    %2785 = vmatprep.subr.mxu0 0.0
    %2786 = vmatpush2.msra.mxu0 0.0
    %2787 = vmatprep.subr.mxu0 0.0
    %2788 = vmatpush2.msra.mxu0 0.0
    %2789 = vmatprep.subr.mxu0 0.0
    %2790 = vmatpush2.msra.mxu0 0.0
    %2791 = vmatprep.subr.mxu0 0.0
    %2792 = vmatpush2.msra.mxu0 0.0
    %2793 = vmatprep.subr.mxu0 0.0
    %2794 = vmatpush2.msra.mxu0 0.0
    %2795 = vmatprep.subr.mxu0 0.0
    %2796 = vmatpush2.msra.mxu0 0.0
    %2797 = vmatprep.subr.mxu0 0.0
    %2798 = vmatpush2.msra.mxu0 0.0
    %2799 = vmatprep.subr.mxu0 0.0
    %2800 = vmatpush2.msra.mxu0 0.0
    %2801 = vmatprep.subr.mxu0 0.0
    %2802 = vmatpush2.msra.mxu0 0.0
    %2803 = vmatprep.subr.mxu0 0.0
    %2804 = vmatpush2.msra.mxu0 0.0
    %2805 = vmatprep.subr.mxu0 0.0
    %2806 = vmatpush2.msra.mxu0 0.0
    %2807 = vmatprep.subr.mxu0 0.0
    %2808 = vmatpush2.msra.mxu0 0.0
    %2809 = vmatprep.subr.mxu0 0.0
    %2810 = vmatpush2.msra.mxu0 0.0
    %2811 = vmatprep.subr.mxu0 0.0
    %2812 = vmatpush2.msra.mxu0 0.0
    %2813 = vmatprep.subr.mxu0 0.0
    %2814 = vmatpush2.msra.mxu0 0.0
    %2815 = vmatprep.mubr.f32.mxu0 0.0
    %2816 = vmatmul.mubr.f32.gmra.mxu0 %v2657
    %v2817 = vpop.f32.mrf.mxu0
    %v2818 = vadd.f32 0.0, %v2817
    %v2819 = vpop.f32.mrf.mxu0
    %v2820 = vadd.f32 0.0, %v2819
    %2821 = vmatprep.mubr.f32.mxu0 0.0
    %2822 = vmatmul.mubr.f32.gmra.mxu0 %v2660
    %v2823 = vpop.f32.mrf.mxu0
    %v2824 = vadd.f32 0.0, %v2823
    %v2825 = vpop.f32.mrf.mxu0
    %v2826 = vadd.f32 0.0, %v2825
    %2827 = vdwg.mxu0
    %v2828 = vadd.f32 %v2551, %v2741
    %v2829 = vadd.f32 %v2552, %v2743
    %v2830 = vadd.f32 %v2553, %v2818
    %v2831 = vadd.f32 %v2554, %v2820
    %v2832 = vadd.f32 %v2555, %v2747
    %v2833 = vadd.f32 %v2556, %v2749
    %v2834 = vadd.f32 %v2557, %v2824
    %v2835 = vadd.f32 %v2558, %v2826
    %v2836 = vld [vmem:[%s5] sm:$0xf]
    %v2838 = vlaneseq
    %v2839 = vshrl.u32 %v2838, 7
    %v2840 = vsub.s32 0, %v2839
    %v2841 = vrot.slane %v2836, %v2840
    %v2842 = vlaneseq
    %v2843 = vshrl.u32 %v2842, 7
    %v2844 = vsub.s32 1, %v2843
    %v2845 = vrot.slane %v2836, %v2844
    %v2846 = vlaneseq
    %v2847 = vshrl.u32 %v2846, 7
    %v2848 = vsub.s32 2, %v2847
    %v2849 = vrot.slane %v2836, %v2848
    %v2850 = vlaneseq
    %v2851 = vshrl.u32 %v2850, 7
    %v2852 = vsub.s32 3, %v2851
    %v2853 = vrot.slane %v2836, %v2852
    %v2858 = vadd.f32 %v2828, %v2841
    %v2859 = vadd.f32 %v2829, %v2845
    %v2860 = vadd.f32 %v2830, %v2849
    %v2861 = vadd.f32 %v2831, %v2853
    %v2862 = vadd.f32 %v2832, %v2841
    %v2863 = vadd.f32 %v2833, %v2845
    %v2864 = vadd.f32 %v2834, %v2849
    %v2865 = vadd.f32 %v2835, %v2853
    %v2866 = vmax.f32 %v2858, 0.0
    %v2867 = vmax.f32 %v2859, 0.0
    %v2868 = vmax.f32 %v2860, 0.0
    %v2869 = vmax.f32 %v2861, 0.0
    %v2870 = vmax.f32 %v2862, 0.0
    %v2871 = vmax.f32 %v2863, 0.0
    %v2872 = vmax.f32 %v2864, 0.0
    %v2873 = vmax.f32 %v2865, 0.0
    %v2874 = vld [vmem:[%s6] sm:$0xf]
    %v2876 = vsel %vm103, %v2874, 0
    %2878 = vmatprep.subr.mxu0 0.0
    %2879 = vmatpush1.msra.mxu0 0.0
    %2880 = vmatprep.subr.mxu0 0.0
    %2881 = vmatpush1.msra.mxu0 0.0
    %2882 = vmatprep.subr.mxu0 0.0
    %2883 = vmatpush1.msra.mxu0 0.0
    %2884 = vmatprep.subr.mxu0 0.0
    %2885 = vmatpush1.msra.mxu0 0.0
    %2886 = vmatprep.subr.mxu0 0.0
    %2887 = vmatpush1.msra.mxu0 0.0
    %2888 = vmatprep.subr.mxu0 0.0
    %2889 = vmatpush1.msra.mxu0 0.0
    %2890 = vmatprep.subr.mxu0 0.0
    %2891 = vmatpush1.msra.mxu0 0.0
    %2892 = vmatprep.subr.mxu0 0.0
    %2893 = vmatpush1.msra.mxu0 0.0
    %2894 = vmatprep.subr.mxu0 0.0
    %2895 = vmatpush1.msra.mxu0 0.0
    %2896 = vmatprep.subr.mxu0 0.0
    %2897 = vmatpush1.msra.mxu0 0.0
    %2898 = vmatprep.subr.mxu0 0.0
    %2899 = vmatpush1.msra.mxu0 0.0
    %2900 = vmatprep.subr.mxu0 0.0
    %2901 = vmatpush1.msra.mxu0 0.0
    %2902 = vmatprep.subr.mxu0 0.0
    %2903 = vmatpush1.msra.mxu0 0.0
    %2904 = vmatprep.subr.mxu0 0.0
    %2905 = vmatpush1.msra.mxu0 0.0
    %2906 = vmatprep.subr.mxu0 %v2871
    %2907 = vmatpush1.msra.mxu0 %v2870
    %2908 = vmatprep.subr.mxu0 %v2867
    %2909 = vmatpush1.msra.mxu0 %v2866
    %2910 = vmatprep.subr.mxu0 0.0
    %2911 = vmatpush2.msra.mxu0 0.0
    %2912 = vmatprep.subr.mxu0 0.0
    %2913 = vmatpush2.msra.mxu0 0.0
    %2914 = vmatprep.subr.mxu0 0.0
    %2915 = vmatpush2.msra.mxu0 0.0
    %2916 = vmatprep.subr.mxu0 0.0
    %2917 = vmatpush2.msra.mxu0 0.0
    %2918 = vmatprep.subr.mxu0 0.0
    %2919 = vmatpush2.msra.mxu0 0.0
    %2920 = vmatprep.subr.mxu0 0.0
    %2921 = vmatpush2.msra.mxu0 0.0
    %2922 = vmatprep.subr.mxu0 0.0
    %2923 = vmatpush2.msra.mxu0 0.0
    %2924 = vmatprep.subr.mxu0 0.0
    %2925 = vmatpush2.msra.mxu0 0.0
    %2926 = vmatprep.subr.mxu0 0.0
    %2927 = vmatpush2.msra.mxu0 0.0
    %2928 = vmatprep.subr.mxu0 0.0
    %2929 = vmatpush2.msra.mxu0 0.0
    %2930 = vmatprep.subr.mxu0 0.0
    %2931 = vmatpush2.msra.mxu0 0.0
    %2932 = vmatprep.subr.mxu0 0.0
    %2933 = vmatpush2.msra.mxu0 0.0
    %2934 = vmatprep.subr.mxu0 0.0
    %2935 = vmatpush2.msra.mxu0 0.0
    %2936 = vmatprep.subr.mxu0 0.0
    %2937 = vmatpush2.msra.mxu0 0.0
    %2938 = vmatprep.subr.mxu0 0.0
    %2939 = vmatpush2.msra.mxu0 0.0
    %2940 = vmatprep.subr.mxu0 0.0
    %2941 = vmatpush2.msra.mxu0 0.0
    %2942 = vmatprep.mubr.f32.mxu0 0.0
    %2943 = vmatmul.mubr.f32.gmra.mxu0 %v2876
    %v2944 = vpop.f32.mrf.mxu0
    %v2945 = vadd.f32 0.0, %v2944
    %v2946 = vpop.f32.mrf.mxu0
    %v2947 = vadd.f32 0.0, %v2946
    %2948 = vdwg.mxu0
    %2949 = vmatprep.subr.mxu0 0.0
    %2950 = vmatpush1.msra.mxu0 0.0
    %2951 = vmatprep.subr.mxu0 0.0
    %2952 = vmatpush1.msra.mxu0 0.0
    %2953 = vmatprep.subr.mxu0 0.0
    %2954 = vmatpush1.msra.mxu0 0.0
    %2955 = vmatprep.subr.mxu0 0.0
    %2956 = vmatpush1.msra.mxu0 0.0
    %2957 = vmatprep.subr.mxu0 0.0
    %2958 = vmatpush1.msra.mxu0 0.0
    %2959 = vmatprep.subr.mxu0 0.0
    %2960 = vmatpush1.msra.mxu0 0.0
    %2961 = vmatprep.subr.mxu0 0.0
    %2962 = vmatpush1.msra.mxu0 0.0
    %2963 = vmatprep.subr.mxu0 0.0
    %2964 = vmatpush1.msra.mxu0 0.0
    %2965 = vmatprep.subr.mxu0 0.0
    %2966 = vmatpush1.msra.mxu0 0.0
    %2967 = vmatprep.subr.mxu0 0.0
    %2968 = vmatpush1.msra.mxu0 0.0
    %2969 = vmatprep.subr.mxu0 0.0
    %2970 = vmatpush1.msra.mxu0 0.0
    %2971 = vmatprep.subr.mxu0 0.0
    %2972 = vmatpush1.msra.mxu0 0.0
    %2973 = vmatprep.subr.mxu0 0.0
    %2974 = vmatpush1.msra.mxu0 0.0
    %2975 = vmatprep.subr.mxu0 0.0
    %2976 = vmatpush1.msra.mxu0 0.0
    %2977 = vmatprep.subr.mxu0 %v2873
    %2978 = vmatpush1.msra.mxu0 %v2872
    %2979 = vmatprep.subr.mxu0 %v2869
    %2980 = vmatpush1.msra.mxu0 %v2868
    %2981 = vmatprep.subr.mxu0 0.0
    %2982 = vmatpush2.msra.mxu0 0.0
    %2983 = vmatprep.subr.mxu0 0.0
    %2984 = vmatpush2.msra.mxu0 0.0
    %2985 = vmatprep.subr.mxu0 0.0
    %2986 = vmatpush2.msra.mxu0 0.0
    %2987 = vmatprep.subr.mxu0 0.0
    %2988 = vmatpush2.msra.mxu0 0.0
    %2989 = vmatprep.subr.mxu0 0.0
    %2990 = vmatpush2.msra.mxu0 0.0
    %2991 = vmatprep.subr.mxu0 0.0
    %2992 = vmatpush2.msra.mxu0 0.0
    %2993 = vmatprep.subr.mxu0 0.0
    %2994 = vmatpush2.msra.mxu0 0.0
    %2995 = vmatprep.subr.mxu0 0.0
    %2996 = vmatpush2.msra.mxu0 0.0
    %2997 = vmatprep.subr.mxu0 0.0
    %2998 = vmatpush2.msra.mxu0 0.0
    %2999 = vmatprep.subr.mxu0 0.0
    %3000 = vmatpush2.msra.mxu0 0.0
    %3001 = vmatprep.subr.mxu0 0.0
    %3002 = vmatpush2.msra.mxu0 0.0
    %3003 = vmatprep.subr.mxu0 0.0
    %3004 = vmatpush2.msra.mxu0 0.0
    %3005 = vmatprep.subr.mxu0 0.0
    %3006 = vmatpush2.msra.mxu0 0.0
    %3007 = vmatprep.subr.mxu0 0.0
    %3008 = vmatpush2.msra.mxu0 0.0
    %3009 = vmatprep.subr.mxu0 0.0
    %3010 = vmatpush2.msra.mxu0 0.0
    %3011 = vmatprep.subr.mxu0 0.0
    %3012 = vmatpush2.msra.mxu0 0.0
    %3013 = vmatprep.mubr.f32.mxu0 0.0
    %3014 = vmatmul.mubr.f32.gmra.mxu0 %v2876
    %v3015 = vpop.f32.mrf.mxu0
    %v3016 = vadd.f32 0.0, %v3015
    %v3017 = vpop.f32.mrf.mxu0
    %v3018 = vadd.f32 0.0, %v3017
    %3019 = vdwg.mxu0
    %v3020 = vld [vmem:[%s7] sm:$0xff]
    %v3021 = vld [vmem:[%s7 + $0x8] sm:$0xff]
    %v3022 = vld [vmem:[%s7 + $0x10] sm:$0xff]
    %v3023 = vld [vmem:[%s7 + $0x18] sm:$0xff]
    %v3024 = vld [vmem:[%s7 + $0x20] sm:$0xff]
    %v3025 = vld [vmem:[%s7 + $0x28] sm:$0xff]
    %v3026 = vld [vmem:[%s7 + $0x30] sm:$0xff]
    %v3027 = vld [vmem:[%s7 + $0x38] sm:$0xff]
    %v3028 = vld [vmem:[%s7 + $0x40] sm:$0xff]
    %v3029 = vld [vmem:[%s7 + $0x48] sm:$0xff]
    %v3030 = vld [vmem:[%s7 + $0x50] sm:$0xff]
    %v3031 = vld [vmem:[%s7 + $0x58] sm:$0xff]
    %v3032 = vld [vmem:[%s7 + $0x60] sm:$0xff]
    %v3033 = vld [vmem:[%s7 + $0x68] sm:$0xff]
    %v3034 = vld [vmem:[%s7 + $0x70] sm:$0xff]
    %v3035 = vld [vmem:[%s7 + $0x78] sm:$0xff]
    %v3036 = vld [vmem:[%s7 + $0x80] sm:$0xff]
    %v3037 = vld [vmem:[%s7 + $0x88] sm:$0xff]
    %v3038 = vld [vmem:[%s7 + $0x90] sm:$0xff]
    %v3039 = vld [vmem:[%s7 + $0x98] sm:$0xff]
    %v3040 = vld [vmem:[%s7 + $0xa0] sm:$0xff]
    %v3041 = vld [vmem:[%s7 + $0xa8] sm:$0xff]
    %v3042 = vld [vmem:[%s7 + $0xb0] sm:$0xff]
    %v3043 = vld [vmem:[%s7 + $0xb8] sm:$0xff]
    %v3044 = vld [vmem:[%s7 + $0xc0] sm:$0xff]
    %v3045 = vld [vmem:[%s7 + $0xc8] sm:$0xff]
    %v3046 = vld [vmem:[%s7 + $0xd0] sm:$0xff]
    %v3047 = vld [vmem:[%s7 + $0xd8] sm:$0xff]
    %v3048 = vld [vmem:[%s7 + $0xe0] sm:$0xff]
    %v3049 = vld [vmem:[%s7 + $0xe8] sm:$0xff]
    %v3050 = vld [vmem:[%s7 + $0xf0] sm:$0xff]
    %v3051 = vld [vmem:[%s7 + $0xf8] sm:$0xff]
    %v3052 = vld [vmem:[%s7 + $0x100] sm:$0xff]
    %v3053 = vld [vmem:[%s7 + $0x108] sm:$0xff]
    %v3054 = vld [vmem:[%s7 + $0x110] sm:$0xff]
    %v3055 = vld [vmem:[%s7 + $0x118] sm:$0xff]
    %v3056 = vld [vmem:[%s7 + $0x120] sm:$0xff]
    %v3057 = vld [vmem:[%s7 + $0x128] sm:$0xff]
    %v3058 = vld [vmem:[%s7 + $0x130] sm:$0xff]
    %v3059 = vld [vmem:[%s7 + $0x138] sm:$0xff]
    %v3060 = vld [vmem:[%s7 + $0x140] sm:$0xff]
    %v3061 = vld [vmem:[%s7 + $0x148] sm:$0xff]
    %v3062 = vld [vmem:[%s7 + $0x150] sm:$0xff]
    %v3063 = vld [vmem:[%s7 + $0x158] sm:$0xff]
    %v3064 = vld [vmem:[%s7 + $0x160] sm:$0xff]
    %v3065 = vld [vmem:[%s7 + $0x168] sm:$0xff]
    %v3066 = vld [vmem:[%s7 + $0x170] sm:$0xff]
    %v3067 = vld [vmem:[%s7 + $0x178] sm:$0xff]
    %v3068 = vld [vmem:[%s7 + $0x180] sm:$0xff]
    %v3069 = vld [vmem:[%s7 + $0x188] sm:$0xff]
    %v3070 = vld [vmem:[%s7 + $0x190] sm:$0xff]
    %v3071 = vld [vmem:[%s7 + $0x198] sm:$0xff]
    %v3072 = vld [vmem:[%s7 + $0x1a0] sm:$0xff]
    %v3073 = vld [vmem:[%s7 + $0x1a8] sm:$0xff]
    %v3074 = vld [vmem:[%s7 + $0x1b0] sm:$0xff]
    %v3075 = vld [vmem:[%s7 + $0x1b8] sm:$0xff]
    %v3076 = vld [vmem:[%s7 + $0x1c0] sm:$0xff]
    %v3077 = vld [vmem:[%s7 + $0x1c8] sm:$0xff]
    %v3078 = vld [vmem:[%s7 + $0x1d0] sm:$0xff]
    %v3079 = vld [vmem:[%s7 + $0x1d8] sm:$0xff]
    %v3080 = vld [vmem:[%s7 + $0x1e0] sm:$0xff]
    %v3081 = vld [vmem:[%s7 + $0x1e8] sm:$0xff]
    %v3082 = vld [vmem:[%s7 + $0x1f0] sm:$0xff]
    %v3083 = vld [vmem:[%s7 + $0x1f8] sm:$0xff]
    %v3084 = vld [vmem:[%s7 + $0x200] sm:$0xff]
    %v3085 = vld [vmem:[%s7 + $0x208] sm:$0xff]
    %v3086 = vld [vmem:[%s7 + $0x210] sm:$0xff]
    %v3087 = vld [vmem:[%s7 + $0x218] sm:$0xff]
    %v3088 = vld [vmem:[%s7 + $0x220] sm:$0xff]
    %v3089 = vld [vmem:[%s7 + $0x228] sm:$0xff]
    %v3090 = vld [vmem:[%s7 + $0x230] sm:$0xff]
    %v3091 = vld [vmem:[%s7 + $0x238] sm:$0xff]
    %v3092 = vld [vmem:[%s7 + $0x240] sm:$0xff]
    %v3093 = vld [vmem:[%s7 + $0x248] sm:$0xff]
    %v3094 = vld [vmem:[%s7 + $0x250] sm:$0xff]
    %v3095 = vld [vmem:[%s7 + $0x258] sm:$0xff]
    %v3096 = vld [vmem:[%s7 + $0x260] sm:$0xff]
    %v3097 = vld [vmem:[%s7 + $0x268] sm:$0xff]
    %v3098 = vld [vmem:[%s7 + $0x270] sm:$0xff]
    %v3099 = vld [vmem:[%s7 + $0x278] sm:$0xff]
    %v3100 = vld [vmem:[%s7 + $0x280] sm:$0xff]
    %v3101 = vld [vmem:[%s7 + $0x288] sm:$0xff]
    %v3102 = vld [vmem:[%s7 + $0x290] sm:$0xff]
    %v3103 = vld [vmem:[%s7 + $0x298] sm:$0xff]
    %v3104 = vld [vmem:[%s7 + $0x2a0] sm:$0xff]
    %v3105 = vld [vmem:[%s7 + $0x2a8] sm:$0xff]
    %v3106 = vld [vmem:[%s7 + $0x2b0] sm:$0xff]
    %v3107 = vld [vmem:[%s7 + $0x2b8] sm:$0xff]
    %v3108 = vld [vmem:[%s7 + $0x2c0] sm:$0xff]
    %v3109 = vld [vmem:[%s7 + $0x2c8] sm:$0xff]
    %v3110 = vld [vmem:[%s7 + $0x2d0] sm:$0xff]
    %v3111 = vld [vmem:[%s7 + $0x2d8] sm:$0xff]
    %v3112 = vld [vmem:[%s7 + $0x2e0] sm:$0xff]
    %v3113 = vld [vmem:[%s7 + $0x2e8] sm:$0xff]
    %v3114 = vld [vmem:[%s7 + $0x2f0] sm:$0xff]
    %v3115 = vld [vmem:[%s7 + $0x2f8] sm:$0xff]
    %v3116 = vld [vmem:[%s7 + $0x300] sm:$0xff]
    %v3117 = vld [vmem:[%s7 + $0x308] sm:$0xff]
    %v3118 = vld [vmem:[%s7 + $0x310] sm:$0xf]
    %v3119 = vld [vmem:[%s7 + $0x318] sm:$0xf]
    %vm3120 = vcmask 97280
    %v3122 = vsel %vm3120, %v3018, 0
    %vm3124 = vcmask 1043456
    %v3126 = vsel %vm3124, %v3118, 0
    %v3129 = vsel %vm3124, %v3119, 0
    %3131 = vmatprep.subr.mxu0 %v3051
    %3132 = vmatpush1.msra.mxu0 %v3050
    %3133 = vmatprep.subr.mxu0 %v3049
    %3134 = vmatpush1.msra.mxu0 %v3048
    %3135 = vmatprep.subr.mxu0 %v3047
    %3136 = vmatpush1.msra.mxu0 %v3046
    %3137 = vmatprep.subr.mxu0 %v3045
    %3138 = vmatpush1.msra.mxu0 %v3044
    %3139 = vmatprep.subr.mxu0 %v3043
    %3140 = vmatpush1.msra.mxu0 %v3042
    %3141 = vmatprep.subr.mxu0 %v3041
    %3142 = vmatpush1.msra.mxu0 %v3040
    %3143 = vmatprep.subr.mxu0 %v3039
    %3144 = vmatpush1.msra.mxu0 %v3038
    %3145 = vmatprep.subr.mxu0 %v3037
    %3146 = vmatpush1.msra.mxu0 %v3036
    %3147 = vmatprep.subr.mxu0 %v3035
    %3148 = vmatpush1.msra.mxu0 %v3034
    %3149 = vmatprep.subr.mxu0 %v3033
    %3150 = vmatpush1.msra.mxu0 %v3032
    %3151 = vmatprep.subr.mxu0 %v3031
    %3152 = vmatpush1.msra.mxu0 %v3030
    %3153 = vmatprep.subr.mxu0 %v3029
    %3154 = vmatpush1.msra.mxu0 %v3028
    %3155 = vmatprep.subr.mxu0 %v3027
    %3156 = vmatpush1.msra.mxu0 %v3026
    %3157 = vmatprep.subr.mxu0 %v3025
    %3158 = vmatpush1.msra.mxu0 %v3024
    %3159 = vmatprep.subr.mxu0 %v3023
    %3160 = vmatpush1.msra.mxu0 %v3022
    %3161 = vmatprep.subr.mxu0 %v3021
    %3162 = vmatpush1.msra.mxu0 %v3020
    %3163 = vmatprep.subr.mxu0 %v3083
    %3164 = vmatpush2.msra.mxu0 %v3082
    %3165 = vmatprep.subr.mxu0 %v3081
    %3166 = vmatpush2.msra.mxu0 %v3080
    %3167 = vmatprep.subr.mxu0 %v3079
    %3168 = vmatpush2.msra.mxu0 %v3078
    %3169 = vmatprep.subr.mxu0 %v3077
    %3170 = vmatpush2.msra.mxu0 %v3076
    %3171 = vmatprep.subr.mxu0 %v3075
    %3172 = vmatpush2.msra.mxu0 %v3074
    %3173 = vmatprep.subr.mxu0 %v3073
    %3174 = vmatpush2.msra.mxu0 %v3072
    %3175 = vmatprep.subr.mxu0 %v3071
    %3176 = vmatpush2.msra.mxu0 %v3070
    %3177 = vmatprep.subr.mxu0 %v3069
    %3178 = vmatpush2.msra.mxu0 %v3068
    %3179 = vmatprep.subr.mxu0 %v3067
    %3180 = vmatpush2.msra.mxu0 %v3066
    %3181 = vmatprep.subr.mxu0 %v3065
    %3182 = vmatpush2.msra.mxu0 %v3064
    %3183 = vmatprep.subr.mxu0 %v3063
    %3184 = vmatpush2.msra.mxu0 %v3062
    %3185 = vmatprep.subr.mxu0 %v3061
    %3186 = vmatpush2.msra.mxu0 %v3060
    %3187 = vmatprep.subr.mxu0 %v3059
    %3188 = vmatpush2.msra.mxu0 %v3058
    %3189 = vmatprep.subr.mxu0 %v3057
    %3190 = vmatpush2.msra.mxu0 %v3056
    %3191 = vmatprep.subr.mxu0 %v3055
    %3192 = vmatpush2.msra.mxu0 %v3054
    %3193 = vmatprep.subr.mxu0 %v3053
    %3194 = vmatpush2.msra.mxu0 %v3052
    %3195 = vmatprep.mubr.f32.mxu0 %v2947
    %3196 = vmatmul.mubr.f32.gmra.mxu0 %v2945
    %v3197 = vpop.f32.mrf.mxu0
    %v3198 = vadd.f32 0.0, %v3197
    %v3199 = vpop.f32.mrf.mxu0
    %v3200 = vadd.f32 0.0, %v3199
    %3201 = vdwg.mxu0
    %3202 = vmatprep.subr.mxu0 %v3115
    %3203 = vmatpush1.msra.mxu0 %v3114
    %3204 = vmatprep.subr.mxu0 %v3113
    %3205 = vmatpush1.msra.mxu0 %v3112
    %3206 = vmatprep.subr.mxu0 %v3111
    %3207 = vmatpush1.msra.mxu0 %v3110
    %3208 = vmatprep.subr.mxu0 %v3109
    %3209 = vmatpush1.msra.mxu0 %v3108
    %3210 = vmatprep.subr.mxu0 %v3107
    %3211 = vmatpush1.msra.mxu0 %v3106
    %3212 = vmatprep.subr.mxu0 %v3105
    %3213 = vmatpush1.msra.mxu0 %v3104
    %3214 = vmatprep.subr.mxu0 %v3103
    %3215 = vmatpush1.msra.mxu0 %v3102
    %3216 = vmatprep.subr.mxu0 %v3101
    %3217 = vmatpush1.msra.mxu0 %v3100
    %3218 = vmatprep.subr.mxu0 %v3099
    %3219 = vmatpush1.msra.mxu0 %v3098
    %3220 = vmatprep.subr.mxu0 %v3097
    %3221 = vmatpush1.msra.mxu0 %v3096
    %3222 = vmatprep.subr.mxu0 %v3095
    %3223 = vmatpush1.msra.mxu0 %v3094
    %3224 = vmatprep.subr.mxu0 %v3093
    %3225 = vmatpush1.msra.mxu0 %v3092
    %3226 = vmatprep.subr.mxu0 %v3091
    %3227 = vmatpush1.msra.mxu0 %v3090
    %3228 = vmatprep.subr.mxu0 %v3089
    %3229 = vmatpush1.msra.mxu0 %v3088
    %3230 = vmatprep.subr.mxu0 %v3087
    %3231 = vmatpush1.msra.mxu0 %v3086
    %3232 = vmatprep.subr.mxu0 %v3085
    %3233 = vmatpush1.msra.mxu0 %v3084
    %3234 = vmatprep.subr.mxu0 0.0
    %3235 = vmatpush2.msra.mxu0 0.0
    %3236 = vmatprep.subr.mxu0 0.0
    %3237 = vmatpush2.msra.mxu0 0.0
    %3238 = vmatprep.subr.mxu0 0.0
    %3239 = vmatpush2.msra.mxu0 0.0
    %3240 = vmatprep.subr.mxu0 0.0
    %3241 = vmatpush2.msra.mxu0 0.0
    %3242 = vmatprep.subr.mxu0 0.0
    %3243 = vmatpush2.msra.mxu0 0.0
    %3244 = vmatprep.subr.mxu0 0.0
    %3245 = vmatpush2.msra.mxu0 0.0
    %3246 = vmatprep.subr.mxu0 0.0
    %3247 = vmatpush2.msra.mxu0 0.0
    %3248 = vmatprep.subr.mxu0 0.0
    %3249 = vmatpush2.msra.mxu0 0.0
    %3250 = vmatprep.subr.mxu0 0.0
    %3251 = vmatpush2.msra.mxu0 0.0
    %3252 = vmatprep.subr.mxu0 0.0
    %3253 = vmatpush2.msra.mxu0 0.0
    %3254 = vmatprep.subr.mxu0 0.0
    %3255 = vmatpush2.msra.mxu0 0.0
    %3256 = vmatprep.subr.mxu0 0.0
    %3257 = vmatpush2.msra.mxu0 0.0
    %3258 = vmatprep.subr.mxu0 0.0
    %3259 = vmatpush2.msra.mxu0 0.0
    %3260 = vmatprep.subr.mxu0 0.0
    %3261 = vmatpush2.msra.mxu0 0.0
    %3262 = vmatprep.subr.mxu0 %v3129
    %3263 = vmatpush2.msra.mxu0 %v3126
    %3264 = vmatprep.subr.mxu0 %v3117
    %3265 = vmatpush2.msra.mxu0 %v3116
    %3266 = vmatprep.mubr.f32.mxu0 %v3122
    %3267 = vmatmul.mubr.f32.gmra.mxu0 %v3016
    %v3268 = vpop.f32.mrf.mxu0
    %v3269 = vadd.f32 %v3198, %v3268
    %v3270 = vpop.f32.mrf.mxu0
    %v3271 = vadd.f32 %v3200, %v3270
    %3272 = vdwg.mxu0
    %s3273 = scalar_lea.vmem %s7, 800
    %v3274 = vld [vmem:[%s3273] sm:$0xff]
    %v3275 = vld [vmem:[%s3273 + $0x8] sm:$0xff]
    %v3276 = vld [vmem:[%s3273 + $0x10] sm:$0xff]
    %v3277 = vld [vmem:[%s3273 + $0x18] sm:$0xff]
    %v3278 = vld [vmem:[%s3273 + $0x20] sm:$0xff]
    %v3279 = vld [vmem:[%s3273 + $0x28] sm:$0xff]
    %v3280 = vld [vmem:[%s3273 + $0x30] sm:$0xff]
    %v3281 = vld [vmem:[%s3273 + $0x38] sm:$0xff]
    %v3282 = vld [vmem:[%s3273 + $0x40] sm:$0xff]
    %v3283 = vld [vmem:[%s3273 + $0x48] sm:$0xff]
    %v3284 = vld [vmem:[%s3273 + $0x50] sm:$0xff]
    %v3285 = vld [vmem:[%s3273 + $0x58] sm:$0xff]
    %v3286 = vld [vmem:[%s3273 + $0x60] sm:$0xff]
    %v3287 = vld [vmem:[%s3273 + $0x68] sm:$0xff]
    %v3288 = vld [vmem:[%s3273 + $0x70] sm:$0xff]
    %v3289 = vld [vmem:[%s3273 + $0x78] sm:$0xff]
    %v3290 = vld [vmem:[%s3273 + $0x80] sm:$0xff]
    %v3291 = vld [vmem:[%s3273 + $0x88] sm:$0xff]
    %v3292 = vld [vmem:[%s3273 + $0x90] sm:$0xff]
    %v3293 = vld [vmem:[%s3273 + $0x98] sm:$0xff]
    %v3294 = vld [vmem:[%s3273 + $0xa0] sm:$0xff]
    %v3295 = vld [vmem:[%s3273 + $0xa8] sm:$0xff]
    %v3296 = vld [vmem:[%s3273 + $0xb0] sm:$0xff]
    %v3297 = vld [vmem:[%s3273 + $0xb8] sm:$0xff]
    %v3298 = vld [vmem:[%s3273 + $0xc0] sm:$0xff]
    %v3299 = vld [vmem:[%s3273 + $0xc8] sm:$0xff]
    %v3300 = vld [vmem:[%s3273 + $0xd0] sm:$0xff]
    %v3301 = vld [vmem:[%s3273 + $0xd8] sm:$0xff]
    %v3302 = vld [vmem:[%s3273 + $0xe0] sm:$0xff]
    %v3303 = vld [vmem:[%s3273 + $0xe8] sm:$0xff]
    %v3304 = vld [vmem:[%s3273 + $0xf0] sm:$0xff]
    %v3305 = vld [vmem:[%s3273 + $0xf8] sm:$0xff]
    %v3306 = vld [vmem:[%s3273 + $0x100] sm:$0xff]
    %v3307 = vld [vmem:[%s3273 + $0x108] sm:$0xff]
    %v3308 = vld [vmem:[%s3273 + $0x110] sm:$0xff]
    %v3309 = vld [vmem:[%s3273 + $0x118] sm:$0xff]
    %v3310 = vld [vmem:[%s3273 + $0x120] sm:$0xff]
    %v3311 = vld [vmem:[%s3273 + $0x128] sm:$0xff]
    %v3312 = vld [vmem:[%s3273 + $0x130] sm:$0xff]
    %v3313 = vld [vmem:[%s3273 + $0x138] sm:$0xff]
    %v3314 = vld [vmem:[%s3273 + $0x140] sm:$0xff]
    %v3315 = vld [vmem:[%s3273 + $0x148] sm:$0xff]
    %v3316 = vld [vmem:[%s3273 + $0x150] sm:$0xff]
    %v3317 = vld [vmem:[%s3273 + $0x158] sm:$0xff]
    %v3318 = vld [vmem:[%s3273 + $0x160] sm:$0xff]
    %v3319 = vld [vmem:[%s3273 + $0x168] sm:$0xff]
    %v3320 = vld [vmem:[%s3273 + $0x170] sm:$0xff]
    %v3321 = vld [vmem:[%s3273 + $0x178] sm:$0xff]
    %v3322 = vld [vmem:[%s3273 + $0x180] sm:$0xff]
    %v3323 = vld [vmem:[%s3273 + $0x188] sm:$0xff]
    %v3324 = vld [vmem:[%s3273 + $0x190] sm:$0xff]
    %v3325 = vld [vmem:[%s3273 + $0x198] sm:$0xff]
    %v3326 = vld [vmem:[%s3273 + $0x1a0] sm:$0xff]
    %v3327 = vld [vmem:[%s3273 + $0x1a8] sm:$0xff]
    %v3328 = vld [vmem:[%s3273 + $0x1b0] sm:$0xff]
    %v3329 = vld [vmem:[%s3273 + $0x1b8] sm:$0xff]
    %v3330 = vld [vmem:[%s3273 + $0x1c0] sm:$0xff]
    %v3331 = vld [vmem:[%s3273 + $0x1c8] sm:$0xff]
    %v3332 = vld [vmem:[%s3273 + $0x1d0] sm:$0xff]
    %v3333 = vld [vmem:[%s3273 + $0x1d8] sm:$0xff]
    %v3334 = vld [vmem:[%s3273 + $0x1e0] sm:$0xff]
    %v3335 = vld [vmem:[%s3273 + $0x1e8] sm:$0xff]
    %v3336 = vld [vmem:[%s3273 + $0x1f0] sm:$0xff]
    %v3337 = vld [vmem:[%s3273 + $0x1f8] sm:$0xff]
    %v3338 = vld [vmem:[%s3273 + $0x200] sm:$0xff]
    %v3339 = vld [vmem:[%s3273 + $0x208] sm:$0xff]
    %v3340 = vld [vmem:[%s3273 + $0x210] sm:$0xff]
    %v3341 = vld [vmem:[%s3273 + $0x218] sm:$0xff]
    %v3342 = vld [vmem:[%s3273 + $0x220] sm:$0xff]
    %v3343 = vld [vmem:[%s3273 + $0x228] sm:$0xff]
    %v3344 = vld [vmem:[%s3273 + $0x230] sm:$0xff]
    %v3345 = vld [vmem:[%s3273 + $0x238] sm:$0xff]
    %v3346 = vld [vmem:[%s3273 + $0x240] sm:$0xff]
    %v3347 = vld [vmem:[%s3273 + $0x248] sm:$0xff]
    %v3348 = vld [vmem:[%s3273 + $0x250] sm:$0xff]
    %v3349 = vld [vmem:[%s3273 + $0x258] sm:$0xff]
    %v3350 = vld [vmem:[%s3273 + $0x260] sm:$0xff]
    %v3351 = vld [vmem:[%s3273 + $0x268] sm:$0xff]
    %v3352 = vld [vmem:[%s3273 + $0x270] sm:$0xff]
    %v3353 = vld [vmem:[%s3273 + $0x278] sm:$0xff]
    %v3354 = vld [vmem:[%s3273 + $0x280] sm:$0xff]
    %v3355 = vld [vmem:[%s3273 + $0x288] sm:$0xff]
    %v3356 = vld [vmem:[%s3273 + $0x290] sm:$0xff]
    %v3357 = vld [vmem:[%s3273 + $0x298] sm:$0xff]
    %v3358 = vld [vmem:[%s3273 + $0x2a0] sm:$0xff]
    %v3359 = vld [vmem:[%s3273 + $0x2a8] sm:$0xff]
    %v3360 = vld [vmem:[%s3273 + $0x2b0] sm:$0xff]
    %v3361 = vld [vmem:[%s3273 + $0x2b8] sm:$0xff]
    %v3362 = vld [vmem:[%s3273 + $0x2c0] sm:$0xff]
    %v3363 = vld [vmem:[%s3273 + $0x2c8] sm:$0xff]
    %v3364 = vld [vmem:[%s3273 + $0x2d0] sm:$0xff]
    %v3365 = vld [vmem:[%s3273 + $0x2d8] sm:$0xff]
    %v3366 = vld [vmem:[%s3273 + $0x2e0] sm:$0xff]
    %v3367 = vld [vmem:[%s3273 + $0x2e8] sm:$0xff]
    %v3368 = vld [vmem:[%s3273 + $0x2f0] sm:$0xff]
    %v3369 = vld [vmem:[%s3273 + $0x2f8] sm:$0xff]
    %v3370 = vld [vmem:[%s3273 + $0x300] sm:$0xff]
    %v3371 = vld [vmem:[%s3273 + $0x308] sm:$0xff]
    %v3372 = vld [vmem:[%s3273 + $0x310] sm:$0xf]
    %v3373 = vld [vmem:[%s3273 + $0x318] sm:$0xf]
    %v3375 = vsel %vm3124, %v3372, 0
    %v3378 = vsel %vm3124, %v3373, 0
    %3380 = vmatprep.subr.mxu0 %v3305
    %3381 = vmatpush1.msra.mxu0 %v3304
    %3382 = vmatprep.subr.mxu0 %v3303
    %3383 = vmatpush1.msra.mxu0 %v3302
    %3384 = vmatprep.subr.mxu0 %v3301
    %3385 = vmatpush1.msra.mxu0 %v3300
    %3386 = vmatprep.subr.mxu0 %v3299
    %3387 = vmatpush1.msra.mxu0 %v3298
    %3388 = vmatprep.subr.mxu0 %v3297
    %3389 = vmatpush1.msra.mxu0 %v3296
    %3390 = vmatprep.subr.mxu0 %v3295
    %3391 = vmatpush1.msra.mxu0 %v3294
    %3392 = vmatprep.subr.mxu0 %v3293
    %3393 = vmatpush1.msra.mxu0 %v3292
    %3394 = vmatprep.subr.mxu0 %v3291
    %3395 = vmatpush1.msra.mxu0 %v3290
    %3396 = vmatprep.subr.mxu0 %v3289
    %3397 = vmatpush1.msra.mxu0 %v3288
    %3398 = vmatprep.subr.mxu0 %v3287
    %3399 = vmatpush1.msra.mxu0 %v3286
    %3400 = vmatprep.subr.mxu0 %v3285
    %3401 = vmatpush1.msra.mxu0 %v3284
    %3402 = vmatprep.subr.mxu0 %v3283
    %3403 = vmatpush1.msra.mxu0 %v3282
    %3404 = vmatprep.subr.mxu0 %v3281
    %3405 = vmatpush1.msra.mxu0 %v3280
    %3406 = vmatprep.subr.mxu0 %v3279
    %3407 = vmatpush1.msra.mxu0 %v3278
    %3408 = vmatprep.subr.mxu0 %v3277
    %3409 = vmatpush1.msra.mxu0 %v3276
    %3410 = vmatprep.subr.mxu0 %v3275
    %3411 = vmatpush1.msra.mxu0 %v3274
    %3412 = vmatprep.subr.mxu0 %v3337
    %3413 = vmatpush2.msra.mxu0 %v3336
    %3414 = vmatprep.subr.mxu0 %v3335
    %3415 = vmatpush2.msra.mxu0 %v3334
    %3416 = vmatprep.subr.mxu0 %v3333
    %3417 = vmatpush2.msra.mxu0 %v3332
    %3418 = vmatprep.subr.mxu0 %v3331
    %3419 = vmatpush2.msra.mxu0 %v3330
    %3420 = vmatprep.subr.mxu0 %v3329
    %3421 = vmatpush2.msra.mxu0 %v3328
    %3422 = vmatprep.subr.mxu0 %v3327
    %3423 = vmatpush2.msra.mxu0 %v3326
    %3424 = vmatprep.subr.mxu0 %v3325
    %3425 = vmatpush2.msra.mxu0 %v3324
    %3426 = vmatprep.subr.mxu0 %v3323
    %3427 = vmatpush2.msra.mxu0 %v3322
    %3428 = vmatprep.subr.mxu0 %v3321
    %3429 = vmatpush2.msra.mxu0 %v3320
    %3430 = vmatprep.subr.mxu0 %v3319
    %3431 = vmatpush2.msra.mxu0 %v3318
    %3432 = vmatprep.subr.mxu0 %v3317
    %3433 = vmatpush2.msra.mxu0 %v3316
    %3434 = vmatprep.subr.mxu0 %v3315
    %3435 = vmatpush2.msra.mxu0 %v3314
    %3436 = vmatprep.subr.mxu0 %v3313
    %3437 = vmatpush2.msra.mxu0 %v3312
    %3438 = vmatprep.subr.mxu0 %v3311
    %3439 = vmatpush2.msra.mxu0 %v3310
    %3440 = vmatprep.subr.mxu0 %v3309
    %3441 = vmatpush2.msra.mxu0 %v3308
    %3442 = vmatprep.subr.mxu0 %v3307
    %3443 = vmatpush2.msra.mxu0 %v3306
    %3444 = vmatprep.mubr.f32.mxu0 %v2947
    %3445 = vmatmul.mubr.f32.gmra.mxu0 %v2945
    %v3446 = vpop.f32.mrf.mxu0
    %v3447 = vadd.f32 0.0, %v3446
    %v3448 = vpop.f32.mrf.mxu0
    %v3449 = vadd.f32 0.0, %v3448
    %3450 = vdwg.mxu0
    %3451 = vmatprep.subr.mxu0 %v3369
    %3452 = vmatpush1.msra.mxu0 %v3368
    %3453 = vmatprep.subr.mxu0 %v3367
    %3454 = vmatpush1.msra.mxu0 %v3366
    %3455 = vmatprep.subr.mxu0 %v3365
    %3456 = vmatpush1.msra.mxu0 %v3364
    %3457 = vmatprep.subr.mxu0 %v3363
    %3458 = vmatpush1.msra.mxu0 %v3362
    %3459 = vmatprep.subr.mxu0 %v3361
    %3460 = vmatpush1.msra.mxu0 %v3360
    %3461 = vmatprep.subr.mxu0 %v3359
    %3462 = vmatpush1.msra.mxu0 %v3358
    %3463 = vmatprep.subr.mxu0 %v3357
    %3464 = vmatpush1.msra.mxu0 %v3356
    %3465 = vmatprep.subr.mxu0 %v3355
    %3466 = vmatpush1.msra.mxu0 %v3354
    %3467 = vmatprep.subr.mxu0 %v3353
    %3468 = vmatpush1.msra.mxu0 %v3352
    %3469 = vmatprep.subr.mxu0 %v3351
    %3470 = vmatpush1.msra.mxu0 %v3350
    %3471 = vmatprep.subr.mxu0 %v3349
    %3472 = vmatpush1.msra.mxu0 %v3348
    %3473 = vmatprep.subr.mxu0 %v3347
    %3474 = vmatpush1.msra.mxu0 %v3346
    %3475 = vmatprep.subr.mxu0 %v3345
    %3476 = vmatpush1.msra.mxu0 %v3344
    %3477 = vmatprep.subr.mxu0 %v3343
    %3478 = vmatpush1.msra.mxu0 %v3342
    %3479 = vmatprep.subr.mxu0 %v3341
    %3480 = vmatpush1.msra.mxu0 %v3340
    %3481 = vmatprep.subr.mxu0 %v3339
    %3482 = vmatpush1.msra.mxu0 %v3338
    %3483 = vmatprep.subr.mxu0 0.0
    %3484 = vmatpush2.msra.mxu0 0.0
    %3485 = vmatprep.subr.mxu0 0.0
    %3486 = vmatpush2.msra.mxu0 0.0
    %3487 = vmatprep.subr.mxu0 0.0
    %3488 = vmatpush2.msra.mxu0 0.0
    %3489 = vmatprep.subr.mxu0 0.0
    %3490 = vmatpush2.msra.mxu0 0.0
    %3491 = vmatprep.subr.mxu0 0.0
    %3492 = vmatpush2.msra.mxu0 0.0
    %3493 = vmatprep.subr.mxu0 0.0
    %3494 = vmatpush2.msra.mxu0 0.0
    %3495 = vmatprep.subr.mxu0 0.0
    %3496 = vmatpush2.msra.mxu0 0.0
    %3497 = vmatprep.subr.mxu0 0.0
    %3498 = vmatpush2.msra.mxu0 0.0
    %3499 = vmatprep.subr.mxu0 0.0
    %3500 = vmatpush2.msra.mxu0 0.0
    %3501 = vmatprep.subr.mxu0 0.0
    %3502 = vmatpush2.msra.mxu0 0.0
    %3503 = vmatprep.subr.mxu0 0.0
    %3504 = vmatpush2.msra.mxu0 0.0
    %3505 = vmatprep.subr.mxu0 0.0
    %3506 = vmatpush2.msra.mxu0 0.0
    %3507 = vmatprep.subr.mxu0 0.0
    %3508 = vmatpush2.msra.mxu0 0.0
    %3509 = vmatprep.subr.mxu0 0.0
    %3510 = vmatpush2.msra.mxu0 0.0
    %3511 = vmatprep.subr.mxu0 %v3378
    %3512 = vmatpush2.msra.mxu0 %v3375
    %3513 = vmatprep.subr.mxu0 %v3371
    %3514 = vmatpush2.msra.mxu0 %v3370
    %3515 = vmatprep.mubr.f32.mxu0 %v3122
    %3516 = vmatmul.mubr.f32.gmra.mxu0 %v3016
    %v3517 = vpop.f32.mrf.mxu0
    %v3518 = vadd.f32 %v3447, %v3517
    %v3519 = vpop.f32.mrf.mxu0
    %v3520 = vadd.f32 %v3449, %v3519
    %3521 = vdwg.mxu0
    %v3522 = vmax.f32 %v3269, %v3518
    %v3523 = vmax.f32 %v3271, %v3520
    %s3524 = scalar_lea.vmem %s6, 4
    %v3525 = vld [vmem:[%s3524] sm:$0xf]
    %v3527 = vsel %vm103, %v3525, 0
    %3529 = vmatprep.subr.mxu0 0.0
    %3530 = vmatpush1.msra.mxu0 0.0
    %3531 = vmatprep.subr.mxu0 0.0
    %3532 = vmatpush1.msra.mxu0 0.0
    %3533 = vmatprep.subr.mxu0 0.0
    %3534 = vmatpush1.msra.mxu0 0.0
    %3535 = vmatprep.subr.mxu0 0.0
    %3536 = vmatpush1.msra.mxu0 0.0
    %3537 = vmatprep.subr.mxu0 0.0
    %3538 = vmatpush1.msra.mxu0 0.0
    %3539 = vmatprep.subr.mxu0 0.0
    %3540 = vmatpush1.msra.mxu0 0.0
    %3541 = vmatprep.subr.mxu0 0.0
    %3542 = vmatpush1.msra.mxu0 0.0
    %3543 = vmatprep.subr.mxu0 0.0
    %3544 = vmatpush1.msra.mxu0 0.0
    %3545 = vmatprep.subr.mxu0 0.0
    %3546 = vmatpush1.msra.mxu0 0.0
    %3547 = vmatprep.subr.mxu0 0.0
    %3548 = vmatpush1.msra.mxu0 0.0
    %3549 = vmatprep.subr.mxu0 0.0
    %3550 = vmatpush1.msra.mxu0 0.0
    %3551 = vmatprep.subr.mxu0 0.0
    %3552 = vmatpush1.msra.mxu0 0.0
    %3553 = vmatprep.subr.mxu0 0.0
    %3554 = vmatpush1.msra.mxu0 0.0
    %3555 = vmatprep.subr.mxu0 0.0
    %3556 = vmatpush1.msra.mxu0 0.0
    %3557 = vmatprep.subr.mxu0 %v2871
    %3558 = vmatpush1.msra.mxu0 %v2870
    %3559 = vmatprep.subr.mxu0 %v2867
    %3560 = vmatpush1.msra.mxu0 %v2866
    %3561 = vmatprep.subr.mxu0 0.0
    %3562 = vmatpush2.msra.mxu0 0.0
    %3563 = vmatprep.subr.mxu0 0.0
    %3564 = vmatpush2.msra.mxu0 0.0
    %3565 = vmatprep.subr.mxu0 0.0
    %3566 = vmatpush2.msra.mxu0 0.0
    %3567 = vmatprep.subr.mxu0 0.0
    %3568 = vmatpush2.msra.mxu0 0.0
    %3569 = vmatprep.subr.mxu0 0.0
    %3570 = vmatpush2.msra.mxu0 0.0
    %3571 = vmatprep.subr.mxu0 0.0
    %3572 = vmatpush2.msra.mxu0 0.0
    %3573 = vmatprep.subr.mxu0 0.0
    %3574 = vmatpush2.msra.mxu0 0.0
    %3575 = vmatprep.subr.mxu0 0.0
    %3576 = vmatpush2.msra.mxu0 0.0
    %3577 = vmatprep.subr.mxu0 0.0
    %3578 = vmatpush2.msra.mxu0 0.0
    %3579 = vmatprep.subr.mxu0 0.0
    %3580 = vmatpush2.msra.mxu0 0.0
    %3581 = vmatprep.subr.mxu0 0.0
    %3582 = vmatpush2.msra.mxu0 0.0
    %3583 = vmatprep.subr.mxu0 0.0
    %3584 = vmatpush2.msra.mxu0 0.0
    %3585 = vmatprep.subr.mxu0 0.0
    %3586 = vmatpush2.msra.mxu0 0.0
    %3587 = vmatprep.subr.mxu0 0.0
    %3588 = vmatpush2.msra.mxu0 0.0
    %3589 = vmatprep.subr.mxu0 0.0
    %3590 = vmatpush2.msra.mxu0 0.0
    %3591 = vmatprep.subr.mxu0 0.0
    %3592 = vmatpush2.msra.mxu0 0.0
    %3593 = vmatprep.mubr.f32.mxu0 0.0
    %3594 = vmatmul.mubr.f32.gmra.mxu0 %v3527
    %v3595 = vpop.f32.mrf.mxu0
    %v3596 = vadd.f32 0.0, %v3595
    %v3597 = vpop.f32.mrf.mxu0
    %v3598 = vadd.f32 0.0, %v3597
    %3599 = vdwg.mxu0
    %3600 = vmatprep.subr.mxu0 0.0
    %3601 = vmatpush1.msra.mxu0 0.0
    %3602 = vmatprep.subr.mxu0 0.0
    %3603 = vmatpush1.msra.mxu0 0.0
    %3604 = vmatprep.subr.mxu0 0.0
    %3605 = vmatpush1.msra.mxu0 0.0
    %3606 = vmatprep.subr.mxu0 0.0
    %3607 = vmatpush1.msra.mxu0 0.0
    %3608 = vmatprep.subr.mxu0 0.0
    %3609 = vmatpush1.msra.mxu0 0.0
    %3610 = vmatprep.subr.mxu0 0.0
    %3611 = vmatpush1.msra.mxu0 0.0
    %3612 = vmatprep.subr.mxu0 0.0
    %3613 = vmatpush1.msra.mxu0 0.0
    %3614 = vmatprep.subr.mxu0 0.0
    %3615 = vmatpush1.msra.mxu0 0.0
    %3616 = vmatprep.subr.mxu0 0.0
    %3617 = vmatpush1.msra.mxu0 0.0
    %3618 = vmatprep.subr.mxu0 0.0
    %3619 = vmatpush1.msra.mxu0 0.0
    %3620 = vmatprep.subr.mxu0 0.0
    %3621 = vmatpush1.msra.mxu0 0.0
    %3622 = vmatprep.subr.mxu0 0.0
    %3623 = vmatpush1.msra.mxu0 0.0
    %3624 = vmatprep.subr.mxu0 0.0
    %3625 = vmatpush1.msra.mxu0 0.0
    %3626 = vmatprep.subr.mxu0 0.0
    %3627 = vmatpush1.msra.mxu0 0.0
    %3628 = vmatprep.subr.mxu0 %v2873
    %3629 = vmatpush1.msra.mxu0 %v2872
    %3630 = vmatprep.subr.mxu0 %v2869
    %3631 = vmatpush1.msra.mxu0 %v2868
    %3632 = vmatprep.subr.mxu0 0.0
    %3633 = vmatpush2.msra.mxu0 0.0
    %3634 = vmatprep.subr.mxu0 0.0
    %3635 = vmatpush2.msra.mxu0 0.0
    %3636 = vmatprep.subr.mxu0 0.0
    %3637 = vmatpush2.msra.mxu0 0.0
    %3638 = vmatprep.subr.mxu0 0.0
    %3639 = vmatpush2.msra.mxu0 0.0
    %3640 = vmatprep.subr.mxu0 0.0
    %3641 = vmatpush2.msra.mxu0 0.0
    %3642 = vmatprep.subr.mxu0 0.0
    %3643 = vmatpush2.msra.mxu0 0.0
    %3644 = vmatprep.subr.mxu0 0.0
    %3645 = vmatpush2.msra.mxu0 0.0
    %3646 = vmatprep.subr.mxu0 0.0
    %3647 = vmatpush2.msra.mxu0 0.0
    %3648 = vmatprep.subr.mxu0 0.0
    %3649 = vmatpush2.msra.mxu0 0.0
    %3650 = vmatprep.subr.mxu0 0.0
    %3651 = vmatpush2.msra.mxu0 0.0
    %3652 = vmatprep.subr.mxu0 0.0
    %3653 = vmatpush2.msra.mxu0 0.0
    %3654 = vmatprep.subr.mxu0 0.0
    %3655 = vmatpush2.msra.mxu0 0.0
    %3656 = vmatprep.subr.mxu0 0.0
    %3657 = vmatpush2.msra.mxu0 0.0
    %3658 = vmatprep.subr.mxu0 0.0
    %3659 = vmatpush2.msra.mxu0 0.0
    %3660 = vmatprep.subr.mxu0 0.0
    %3661 = vmatpush2.msra.mxu0 0.0
    %3662 = vmatprep.subr.mxu0 0.0
    %3663 = vmatpush2.msra.mxu0 0.0
    %3664 = vmatprep.mubr.f32.mxu0 0.0
    %3665 = vmatmul.mubr.f32.gmra.mxu0 %v3527
    %v3666 = vpop.f32.mrf.mxu0
    %v3667 = vadd.f32 0.0, %v3666
    %v3668 = vpop.f32.mrf.mxu0
    %v3669 = vadd.f32 0.0, %v3668
    %3670 = vdwg.mxu0
    %v3672 = vsel %vm3120, %v3669, 0
    %3674 = vmatprep.subr.mxu0 %v3051
    %3675 = vmatpush1.msra.mxu0 %v3050
    %3676 = vmatprep.subr.mxu0 %v3049
    %3677 = vmatpush1.msra.mxu0 %v3048
    %3678 = vmatprep.subr.mxu0 %v3047
    %3679 = vmatpush1.msra.mxu0 %v3046
    %3680 = vmatprep.subr.mxu0 %v3045
    %3681 = vmatpush1.msra.mxu0 %v3044
    %3682 = vmatprep.subr.mxu0 %v3043
    %3683 = vmatpush1.msra.mxu0 %v3042
    %3684 = vmatprep.subr.mxu0 %v3041
    %3685 = vmatpush1.msra.mxu0 %v3040
    %3686 = vmatprep.subr.mxu0 %v3039
    %3687 = vmatpush1.msra.mxu0 %v3038
    %3688 = vmatprep.subr.mxu0 %v3037
    %3689 = vmatpush1.msra.mxu0 %v3036
    %3690 = vmatprep.subr.mxu0 %v3035
    %3691 = vmatpush1.msra.mxu0 %v3034
    %3692 = vmatprep.subr.mxu0 %v3033
    %3693 = vmatpush1.msra.mxu0 %v3032
    %3694 = vmatprep.subr.mxu0 %v3031
    %3695 = vmatpush1.msra.mxu0 %v3030
    %3696 = vmatprep.subr.mxu0 %v3029
    %3697 = vmatpush1.msra.mxu0 %v3028
    %3698 = vmatprep.subr.mxu0 %v3027
    %3699 = vmatpush1.msra.mxu0 %v3026
    %3700 = vmatprep.subr.mxu0 %v3025
    %3701 = vmatpush1.msra.mxu0 %v3024
    %3702 = vmatprep.subr.mxu0 %v3023
    %3703 = vmatpush1.msra.mxu0 %v3022
    %3704 = vmatprep.subr.mxu0 %v3021
    %3705 = vmatpush1.msra.mxu0 %v3020
    %3706 = vmatprep.subr.mxu0 %v3083
    %3707 = vmatpush2.msra.mxu0 %v3082
    %3708 = vmatprep.subr.mxu0 %v3081
    %3709 = vmatpush2.msra.mxu0 %v3080
    %3710 = vmatprep.subr.mxu0 %v3079
    %3711 = vmatpush2.msra.mxu0 %v3078
    %3712 = vmatprep.subr.mxu0 %v3077
    %3713 = vmatpush2.msra.mxu0 %v3076
    %3714 = vmatprep.subr.mxu0 %v3075
    %3715 = vmatpush2.msra.mxu0 %v3074
    %3716 = vmatprep.subr.mxu0 %v3073
    %3717 = vmatpush2.msra.mxu0 %v3072
    %3718 = vmatprep.subr.mxu0 %v3071
    %3719 = vmatpush2.msra.mxu0 %v3070
    %3720 = vmatprep.subr.mxu0 %v3069
    %3721 = vmatpush2.msra.mxu0 %v3068
    %3722 = vmatprep.subr.mxu0 %v3067
    %3723 = vmatpush2.msra.mxu0 %v3066
    %3724 = vmatprep.subr.mxu0 %v3065
    %3725 = vmatpush2.msra.mxu0 %v3064
    %3726 = vmatprep.subr.mxu0 %v3063
    %3727 = vmatpush2.msra.mxu0 %v3062
    %3728 = vmatprep.subr.mxu0 %v3061
    %3729 = vmatpush2.msra.mxu0 %v3060
    %3730 = vmatprep.subr.mxu0 %v3059
    %3731 = vmatpush2.msra.mxu0 %v3058
    %3732 = vmatprep.subr.mxu0 %v3057
    %3733 = vmatpush2.msra.mxu0 %v3056
    %3734 = vmatprep.subr.mxu0 %v3055
    %3735 = vmatpush2.msra.mxu0 %v3054
    %3736 = vmatprep.subr.mxu0 %v3053
    %3737 = vmatpush2.msra.mxu0 %v3052
    %3738 = vmatprep.mubr.f32.mxu0 %v3598
    %3739 = vmatmul.mubr.f32.gmra.mxu0 %v3596
    %v3740 = vpop.f32.mrf.mxu0
    %v3741 = vadd.f32 0.0, %v3740
    %v3742 = vpop.f32.mrf.mxu0
    %v3743 = vadd.f32 0.0, %v3742
    %3744 = vdwg.mxu0
    %3745 = vmatprep.subr.mxu0 %v3115
    %3746 = vmatpush1.msra.mxu0 %v3114
    %3747 = vmatprep.subr.mxu0 %v3113
    %3748 = vmatpush1.msra.mxu0 %v3112
    %3749 = vmatprep.subr.mxu0 %v3111
    %3750 = vmatpush1.msra.mxu0 %v3110
    %3751 = vmatprep.subr.mxu0 %v3109
    %3752 = vmatpush1.msra.mxu0 %v3108
    %3753 = vmatprep.subr.mxu0 %v3107
    %3754 = vmatpush1.msra.mxu0 %v3106
    %3755 = vmatprep.subr.mxu0 %v3105
    %3756 = vmatpush1.msra.mxu0 %v3104
    %3757 = vmatprep.subr.mxu0 %v3103
    %3758 = vmatpush1.msra.mxu0 %v3102
    %3759 = vmatprep.subr.mxu0 %v3101
    %3760 = vmatpush1.msra.mxu0 %v3100
    %3761 = vmatprep.subr.mxu0 %v3099
    %3762 = vmatpush1.msra.mxu0 %v3098
    %3763 = vmatprep.subr.mxu0 %v3097
    %3764 = vmatpush1.msra.mxu0 %v3096
    %3765 = vmatprep.subr.mxu0 %v3095
    %3766 = vmatpush1.msra.mxu0 %v3094
    %3767 = vmatprep.subr.mxu0 %v3093
    %3768 = vmatpush1.msra.mxu0 %v3092
    %3769 = vmatprep.subr.mxu0 %v3091
    %3770 = vmatpush1.msra.mxu0 %v3090
    %3771 = vmatprep.subr.mxu0 %v3089
    %3772 = vmatpush1.msra.mxu0 %v3088
    %3773 = vmatprep.subr.mxu0 %v3087
    %3774 = vmatpush1.msra.mxu0 %v3086
    %3775 = vmatprep.subr.mxu0 %v3085
    %3776 = vmatpush1.msra.mxu0 %v3084
    %3777 = vmatprep.subr.mxu0 0.0
    %3778 = vmatpush2.msra.mxu0 0.0
    %3779 = vmatprep.subr.mxu0 0.0
    %3780 = vmatpush2.msra.mxu0 0.0
    %3781 = vmatprep.subr.mxu0 0.0
    %3782 = vmatpush2.msra.mxu0 0.0
    %3783 = vmatprep.subr.mxu0 0.0
    %3784 = vmatpush2.msra.mxu0 0.0
    %3785 = vmatprep.subr.mxu0 0.0
    %3786 = vmatpush2.msra.mxu0 0.0
    %3787 = vmatprep.subr.mxu0 0.0
    %3788 = vmatpush2.msra.mxu0 0.0
    %3789 = vmatprep.subr.mxu0 0.0
    %3790 = vmatpush2.msra.mxu0 0.0
    %3791 = vmatprep.subr.mxu0 0.0
    %3792 = vmatpush2.msra.mxu0 0.0
    %3793 = vmatprep.subr.mxu0 0.0
    %3794 = vmatpush2.msra.mxu0 0.0
    %3795 = vmatprep.subr.mxu0 0.0
    %3796 = vmatpush2.msra.mxu0 0.0
    %3797 = vmatprep.subr.mxu0 0.0
    %3798 = vmatpush2.msra.mxu0 0.0
    %3799 = vmatprep.subr.mxu0 0.0
    %3800 = vmatpush2.msra.mxu0 0.0
    %3801 = vmatprep.subr.mxu0 0.0
    %3802 = vmatpush2.msra.mxu0 0.0
    %3803 = vmatprep.subr.mxu0 0.0
    %3804 = vmatpush2.msra.mxu0 0.0
    %3805 = vmatprep.subr.mxu0 %v3129
    %3806 = vmatpush2.msra.mxu0 %v3126
    %3807 = vmatprep.subr.mxu0 %v3117
    %3808 = vmatpush2.msra.mxu0 %v3116
    %3809 = vmatprep.mubr.f32.mxu0 %v3672
    %3810 = vmatmul.mubr.f32.gmra.mxu0 %v3667
    %v3811 = vpop.f32.mrf.mxu0
    %v3812 = vadd.f32 %v3741, %v3811
    %v3813 = vpop.f32.mrf.mxu0
    %v3814 = vadd.f32 %v3743, %v3813
    %3815 = vdwg.mxu0
    %v3816 = vmax.f32 %v3522, %v3812
    %v3817 = vmax.f32 %v3523, %v3814
    %3818 = vmatprep.subr.mxu0 %v3305
    %3819 = vmatpush1.msra.mxu0 %v3304
    %3820 = vmatprep.subr.mxu0 %v3303
    %3821 = vmatpush1.msra.mxu0 %v3302
    %3822 = vmatprep.subr.mxu0 %v3301
    %3823 = vmatpush1.msra.mxu0 %v3300
    %3824 = vmatprep.subr.mxu0 %v3299
    %3825 = vmatpush1.msra.mxu0 %v3298
    %3826 = vmatprep.subr.mxu0 %v3297
    %3827 = vmatpush1.msra.mxu0 %v3296
    %3828 = vmatprep.subr.mxu0 %v3295
    %3829 = vmatpush1.msra.mxu0 %v3294
    %3830 = vmatprep.subr.mxu0 %v3293
    %3831 = vmatpush1.msra.mxu0 %v3292
    %3832 = vmatprep.subr.mxu0 %v3291
    %3833 = vmatpush1.msra.mxu0 %v3290
    %3834 = vmatprep.subr.mxu0 %v3289
    %3835 = vmatpush1.msra.mxu0 %v3288
    %3836 = vmatprep.subr.mxu0 %v3287
    %3837 = vmatpush1.msra.mxu0 %v3286
    %3838 = vmatprep.subr.mxu0 %v3285
    %3839 = vmatpush1.msra.mxu0 %v3284
    %3840 = vmatprep.subr.mxu0 %v3283
    %3841 = vmatpush1.msra.mxu0 %v3282
    %3842 = vmatprep.subr.mxu0 %v3281
    %3843 = vmatpush1.msra.mxu0 %v3280
    %3844 = vmatprep.subr.mxu0 %v3279
    %3845 = vmatpush1.msra.mxu0 %v3278
    %3846 = vmatprep.subr.mxu0 %v3277
    %3847 = vmatpush1.msra.mxu0 %v3276
    %3848 = vmatprep.subr.mxu0 %v3275
    %3849 = vmatpush1.msra.mxu0 %v3274
    %3850 = vmatprep.subr.mxu0 %v3337
    %3851 = vmatpush2.msra.mxu0 %v3336
    %3852 = vmatprep.subr.mxu0 %v3335
    %3853 = vmatpush2.msra.mxu0 %v3334
    %3854 = vmatprep.subr.mxu0 %v3333
    %3855 = vmatpush2.msra.mxu0 %v3332
    %3856 = vmatprep.subr.mxu0 %v3331
    %3857 = vmatpush2.msra.mxu0 %v3330
    %3858 = vmatprep.subr.mxu0 %v3329
    %3859 = vmatpush2.msra.mxu0 %v3328
    %3860 = vmatprep.subr.mxu0 %v3327
    %3861 = vmatpush2.msra.mxu0 %v3326
    %3862 = vmatprep.subr.mxu0 %v3325
    %3863 = vmatpush2.msra.mxu0 %v3324
    %3864 = vmatprep.subr.mxu0 %v3323
    %3865 = vmatpush2.msra.mxu0 %v3322
    %3866 = vmatprep.subr.mxu0 %v3321
    %3867 = vmatpush2.msra.mxu0 %v3320
    %3868 = vmatprep.subr.mxu0 %v3319
    %3869 = vmatpush2.msra.mxu0 %v3318
    %3870 = vmatprep.subr.mxu0 %v3317
    %3871 = vmatpush2.msra.mxu0 %v3316
    %3872 = vmatprep.subr.mxu0 %v3315
    %3873 = vmatpush2.msra.mxu0 %v3314
    %3874 = vmatprep.subr.mxu0 %v3313
    %3875 = vmatpush2.msra.mxu0 %v3312
    %3876 = vmatprep.subr.mxu0 %v3311
    %3877 = vmatpush2.msra.mxu0 %v3310
    %3878 = vmatprep.subr.mxu0 %v3309
    %3879 = vmatpush2.msra.mxu0 %v3308
    %3880 = vmatprep.subr.mxu0 %v3307
    %3881 = vmatpush2.msra.mxu0 %v3306
    %3882 = vmatprep.mubr.f32.mxu0 %v3598
    %3883 = vmatmul.mubr.f32.gmra.mxu0 %v3596
    %v3884 = vpop.f32.mrf.mxu0
    %v3885 = vadd.f32 0.0, %v3884
    %v3886 = vpop.f32.mrf.mxu0
    %v3887 = vadd.f32 0.0, %v3886
    %3888 = vdwg.mxu0
    %3889 = vmatprep.subr.mxu0 %v3369
    %3890 = vmatpush1.msra.mxu0 %v3368
    %3891 = vmatprep.subr.mxu0 %v3367
    %3892 = vmatpush1.msra.mxu0 %v3366
    %3893 = vmatprep.subr.mxu0 %v3365
    %3894 = vmatpush1.msra.mxu0 %v3364
    %3895 = vmatprep.subr.mxu0 %v3363
    %3896 = vmatpush1.msra.mxu0 %v3362
    %3897 = vmatprep.subr.mxu0 %v3361
    %3898 = vmatpush1.msra.mxu0 %v3360
    %3899 = vmatprep.subr.mxu0 %v3359
    %3900 = vmatpush1.msra.mxu0 %v3358
    %3901 = vmatprep.subr.mxu0 %v3357
    %3902 = vmatpush1.msra.mxu0 %v3356
    %3903 = vmatprep.subr.mxu0 %v3355
    %3904 = vmatpush1.msra.mxu0 %v3354
    %3905 = vmatprep.subr.mxu0 %v3353
    %3906 = vmatpush1.msra.mxu0 %v3352
    %3907 = vmatprep.subr.mxu0 %v3351
    %3908 = vmatpush1.msra.mxu0 %v3350
    %3909 = vmatprep.subr.mxu0 %v3349
    %3910 = vmatpush1.msra.mxu0 %v3348
    %3911 = vmatprep.subr.mxu0 %v3347
    %3912 = vmatpush1.msra.mxu0 %v3346
    %3913 = vmatprep.subr.mxu0 %v3345
    %3914 = vmatpush1.msra.mxu0 %v3344
    %3915 = vmatprep.subr.mxu0 %v3343
    %3916 = vmatpush1.msra.mxu0 %v3342
    %3917 = vmatprep.subr.mxu0 %v3341
    %3918 = vmatpush1.msra.mxu0 %v3340
    %3919 = vmatprep.subr.mxu0 %v3339
    %3920 = vmatpush1.msra.mxu0 %v3338
    %3921 = vmatprep.subr.mxu0 0.0
    %3922 = vmatpush2.msra.mxu0 0.0
    %3923 = vmatprep.subr.mxu0 0.0
    %3924 = vmatpush2.msra.mxu0 0.0
    %3925 = vmatprep.subr.mxu0 0.0
    %3926 = vmatpush2.msra.mxu0 0.0
    %3927 = vmatprep.subr.mxu0 0.0
    %3928 = vmatpush2.msra.mxu0 0.0
    %3929 = vmatprep.subr.mxu0 0.0
    %3930 = vmatpush2.msra.mxu0 0.0
    %3931 = vmatprep.subr.mxu0 0.0
    %3932 = vmatpush2.msra.mxu0 0.0
    %3933 = vmatprep.subr.mxu0 0.0
    %3934 = vmatpush2.msra.mxu0 0.0
    %3935 = vmatprep.subr.mxu0 0.0
    %3936 = vmatpush2.msra.mxu0 0.0
    %3937 = vmatprep.subr.mxu0 0.0
    %3938 = vmatpush2.msra.mxu0 0.0
    %3939 = vmatprep.subr.mxu0 0.0
    %3940 = vmatpush2.msra.mxu0 0.0
    %3941 = vmatprep.subr.mxu0 0.0
    %3942 = vmatpush2.msra.mxu0 0.0
    %3943 = vmatprep.subr.mxu0 0.0
    %3944 = vmatpush2.msra.mxu0 0.0
    %3945 = vmatprep.subr.mxu0 0.0
    %3946 = vmatpush2.msra.mxu0 0.0
    %3947 = vmatprep.subr.mxu0 0.0
    %3948 = vmatpush2.msra.mxu0 0.0
    %3949 = vmatprep.subr.mxu0 %v3378
    %3950 = vmatpush2.msra.mxu0 %v3375
    %3951 = vmatprep.subr.mxu0 %v3371
    %3952 = vmatpush2.msra.mxu0 %v3370
    %3953 = vmatprep.mubr.f32.mxu0 %v3672
    %3954 = vmatmul.mubr.f32.gmra.mxu0 %v3667
    %v3955 = vpop.f32.mrf.mxu0
    %v3956 = vadd.f32 %v3885, %v3955
    %v3957 = vpop.f32.mrf.mxu0
    %v3958 = vadd.f32 %v3887, %v3957
    %3959 = vdwg.mxu0
    %v3960 = vmax.f32 %v3816, %v3956
    %v3961 = vmax.f32 %v3817, %v3958
    %s3962 = scalar_lea.vmem %s6, 8
    %v3963 = vld [vmem:[%s3962] sm:$0xf]
    %v3965 = vsel %vm103, %v3963, 0
    %3967 = vmatprep.subr.mxu0 0.0
    %3968 = vmatpush1.msra.mxu0 0.0
    %3969 = vmatprep.subr.mxu0 0.0
    %3970 = vmatpush1.msra.mxu0 0.0
    %3971 = vmatprep.subr.mxu0 0.0
    %3972 = vmatpush1.msra.mxu0 0.0
    %3973 = vmatprep.subr.mxu0 0.0
    %3974 = vmatpush1.msra.mxu0 0.0
    %3975 = vmatprep.subr.mxu0 0.0
    %3976 = vmatpush1.msra.mxu0 0.0
    %3977 = vmatprep.subr.mxu0 0.0
    %3978 = vmatpush1.msra.mxu0 0.0
    %3979 = vmatprep.subr.mxu0 0.0
    %3980 = vmatpush1.msra.mxu0 0.0
    %3981 = vmatprep.subr.mxu0 0.0
    %3982 = vmatpush1.msra.mxu0 0.0
    %3983 = vmatprep.subr.mxu0 0.0
    %3984 = vmatpush1.msra.mxu0 0.0
    %3985 = vmatprep.subr.mxu0 0.0
    %3986 = vmatpush1.msra.mxu0 0.0
    %3987 = vmatprep.subr.mxu0 0.0
    %3988 = vmatpush1.msra.mxu0 0.0
    %3989 = vmatprep.subr.mxu0 0.0
    %3990 = vmatpush1.msra.mxu0 0.0
    %3991 = vmatprep.subr.mxu0 0.0
    %3992 = vmatpush1.msra.mxu0 0.0
    %3993 = vmatprep.subr.mxu0 0.0
    %3994 = vmatpush1.msra.mxu0 0.0
    %3995 = vmatprep.subr.mxu0 %v2871
    %3996 = vmatpush1.msra.mxu0 %v2870
    %3997 = vmatprep.subr.mxu0 %v2867
    %3998 = vmatpush1.msra.mxu0 %v2866
    %3999 = vmatprep.subr.mxu0 0.0
    %4000 = vmatpush2.msra.mxu0 0.0
    %4001 = vmatprep.subr.mxu0 0.0
    %4002 = vmatpush2.msra.mxu0 0.0
    %4003 = vmatprep.subr.mxu0 0.0
    %4004 = vmatpush2.msra.mxu0 0.0
    %4005 = vmatprep.subr.mxu0 0.0
    %4006 = vmatpush2.msra.mxu0 0.0
    %4007 = vmatprep.subr.mxu0 0.0
    %4008 = vmatpush2.msra.mxu0 0.0
    %4009 = vmatprep.subr.mxu0 0.0
    %4010 = vmatpush2.msra.mxu0 0.0
    %4011 = vmatprep.subr.mxu0 0.0
    %4012 = vmatpush2.msra.mxu0 0.0
    %4013 = vmatprep.subr.mxu0 0.0
    %4014 = vmatpush2.msra.mxu0 0.0
    %4015 = vmatprep.subr.mxu0 0.0
    %4016 = vmatpush2.msra.mxu0 0.0
    %4017 = vmatprep.subr.mxu0 0.0
    %4018 = vmatpush2.msra.mxu0 0.0
    %4019 = vmatprep.subr.mxu0 0.0
    %4020 = vmatpush2.msra.mxu0 0.0
    %4021 = vmatprep.subr.mxu0 0.0
    %4022 = vmatpush2.msra.mxu0 0.0
    %4023 = vmatprep.subr.mxu0 0.0
    %4024 = vmatpush2.msra.mxu0 0.0
    %4025 = vmatprep.subr.mxu0 0.0
    %4026 = vmatpush2.msra.mxu0 0.0
    %4027 = vmatprep.subr.mxu0 0.0
    %4028 = vmatpush2.msra.mxu0 0.0
    %4029 = vmatprep.subr.mxu0 0.0
    %4030 = vmatpush2.msra.mxu0 0.0
    %4031 = vmatprep.mubr.f32.mxu0 0.0
    %4032 = vmatmul.mubr.f32.gmra.mxu0 %v3965
    %v4033 = vpop.f32.mrf.mxu0
    %v4034 = vadd.f32 0.0, %v4033
    %v4035 = vpop.f32.mrf.mxu0
    %v4036 = vadd.f32 0.0, %v4035
    %4037 = vdwg.mxu0
    %4038 = vmatprep.subr.mxu0 0.0
    %4039 = vmatpush1.msra.mxu0 0.0
    %4040 = vmatprep.subr.mxu0 0.0
    %4041 = vmatpush1.msra.mxu0 0.0
    %4042 = vmatprep.subr.mxu0 0.0
    %4043 = vmatpush1.msra.mxu0 0.0
    %4044 = vmatprep.subr.mxu0 0.0
    %4045 = vmatpush1.msra.mxu0 0.0
    %4046 = vmatprep.subr.mxu0 0.0
    %4047 = vmatpush1.msra.mxu0 0.0
    %4048 = vmatprep.subr.mxu0 0.0
    %4049 = vmatpush1.msra.mxu0 0.0
    %4050 = vmatprep.subr.mxu0 0.0
    %4051 = vmatpush1.msra.mxu0 0.0
    %4052 = vmatprep.subr.mxu0 0.0
    %4053 = vmatpush1.msra.mxu0 0.0
    %4054 = vmatprep.subr.mxu0 0.0
    %4055 = vmatpush1.msra.mxu0 0.0
    %4056 = vmatprep.subr.mxu0 0.0
    %4057 = vmatpush1.msra.mxu0 0.0
    %4058 = vmatprep.subr.mxu0 0.0
    %4059 = vmatpush1.msra.mxu0 0.0
    %4060 = vmatprep.subr.mxu0 0.0
    %4061 = vmatpush1.msra.mxu0 0.0
    %4062 = vmatprep.subr.mxu0 0.0
    %4063 = vmatpush1.msra.mxu0 0.0
    %4064 = vmatprep.subr.mxu0 0.0
    %4065 = vmatpush1.msra.mxu0 0.0
    %4066 = vmatprep.subr.mxu0 %v2873
    %4067 = vmatpush1.msra.mxu0 %v2872
    %4068 = vmatprep.subr.mxu0 %v2869
    %4069 = vmatpush1.msra.mxu0 %v2868
    %4070 = vmatprep.subr.mxu0 0.0
    %4071 = vmatpush2.msra.mxu0 0.0
    %4072 = vmatprep.subr.mxu0 0.0
    %4073 = vmatpush2.msra.mxu0 0.0
    %4074 = vmatprep.subr.mxu0 0.0
    %4075 = vmatpush2.msra.mxu0 0.0
    %4076 = vmatprep.subr.mxu0 0.0
    %4077 = vmatpush2.msra.mxu0 0.0
    %4078 = vmatprep.subr.mxu0 0.0
    %4079 = vmatpush2.msra.mxu0 0.0
    %4080 = vmatprep.subr.mxu0 0.0
    %4081 = vmatpush2.msra.mxu0 0.0
    %4082 = vmatprep.subr.mxu0 0.0
    %4083 = vmatpush2.msra.mxu0 0.0
    %4084 = vmatprep.subr.mxu0 0.0
    %4085 = vmatpush2.msra.mxu0 0.0
    %4086 = vmatprep.subr.mxu0 0.0
    %4087 = vmatpush2.msra.mxu0 0.0
    %4088 = vmatprep.subr.mxu0 0.0
    %4089 = vmatpush2.msra.mxu0 0.0
    %4090 = vmatprep.subr.mxu0 0.0
    %4091 = vmatpush2.msra.mxu0 0.0
    %4092 = vmatprep.subr.mxu0 0.0
    %4093 = vmatpush2.msra.mxu0 0.0
    %4094 = vmatprep.subr.mxu0 0.0
    %4095 = vmatpush2.msra.mxu0 0.0
    %4096 = vmatprep.subr.mxu0 0.0
    %4097 = vmatpush2.msra.mxu0 0.0
    %4098 = vmatprep.subr.mxu0 0.0
    %4099 = vmatpush2.msra.mxu0 0.0
    %4100 = vmatprep.subr.mxu0 0.0
    %4101 = vmatpush2.msra.mxu0 0.0
    %4102 = vmatprep.mubr.f32.mxu0 0.0
    %4103 = vmatmul.mubr.f32.gmra.mxu0 %v3965
    %v4104 = vpop.f32.mrf.mxu0
    %v4105 = vadd.f32 0.0, %v4104
    %v4106 = vpop.f32.mrf.mxu0
    %v4107 = vadd.f32 0.0, %v4106
    %4108 = vdwg.mxu0
    %v4110 = vsel %vm3120, %v4107, 0
    %4112 = vmatprep.subr.mxu0 %v3051
    %4113 = vmatpush1.msra.mxu0 %v3050
    %4114 = vmatprep.subr.mxu0 %v3049
    %4115 = vmatpush1.msra.mxu0 %v3048
    %4116 = vmatprep.subr.mxu0 %v3047
    %4117 = vmatpush1.msra.mxu0 %v3046
    %4118 = vmatprep.subr.mxu0 %v3045
    %4119 = vmatpush1.msra.mxu0 %v3044
    %4120 = vmatprep.subr.mxu0 %v3043
    %4121 = vmatpush1.msra.mxu0 %v3042
    %4122 = vmatprep.subr.mxu0 %v3041
    %4123 = vmatpush1.msra.mxu0 %v3040
    %4124 = vmatprep.subr.mxu0 %v3039
    %4125 = vmatpush1.msra.mxu0 %v3038
    %4126 = vmatprep.subr.mxu0 %v3037
    %4127 = vmatpush1.msra.mxu0 %v3036
    %4128 = vmatprep.subr.mxu0 %v3035
    %4129 = vmatpush1.msra.mxu0 %v3034
    %4130 = vmatprep.subr.mxu0 %v3033
    %4131 = vmatpush1.msra.mxu0 %v3032
    %4132 = vmatprep.subr.mxu0 %v3031
    %4133 = vmatpush1.msra.mxu0 %v3030
    %4134 = vmatprep.subr.mxu0 %v3029
    %4135 = vmatpush1.msra.mxu0 %v3028
    %4136 = vmatprep.subr.mxu0 %v3027
    %4137 = vmatpush1.msra.mxu0 %v3026
    %4138 = vmatprep.subr.mxu0 %v3025
    %4139 = vmatpush1.msra.mxu0 %v3024
    %4140 = vmatprep.subr.mxu0 %v3023
    %4141 = vmatpush1.msra.mxu0 %v3022
    %4142 = vmatprep.subr.mxu0 %v3021
    %4143 = vmatpush1.msra.mxu0 %v3020
    %4144 = vmatprep.subr.mxu0 %v3083
    %4145 = vmatpush2.msra.mxu0 %v3082
    %4146 = vmatprep.subr.mxu0 %v3081
    %4147 = vmatpush2.msra.mxu0 %v3080
    %4148 = vmatprep.subr.mxu0 %v3079
    %4149 = vmatpush2.msra.mxu0 %v3078
    %4150 = vmatprep.subr.mxu0 %v3077
    %4151 = vmatpush2.msra.mxu0 %v3076
    %4152 = vmatprep.subr.mxu0 %v3075
    %4153 = vmatpush2.msra.mxu0 %v3074
    %4154 = vmatprep.subr.mxu0 %v3073
    %4155 = vmatpush2.msra.mxu0 %v3072
    %4156 = vmatprep.subr.mxu0 %v3071
    %4157 = vmatpush2.msra.mxu0 %v3070
    %4158 = vmatprep.subr.mxu0 %v3069
    %4159 = vmatpush2.msra.mxu0 %v3068
    %4160 = vmatprep.subr.mxu0 %v3067
    %4161 = vmatpush2.msra.mxu0 %v3066
    %4162 = vmatprep.subr.mxu0 %v3065
    %4163 = vmatpush2.msra.mxu0 %v3064
    %4164 = vmatprep.subr.mxu0 %v3063
    %4165 = vmatpush2.msra.mxu0 %v3062
    %4166 = vmatprep.subr.mxu0 %v3061
    %4167 = vmatpush2.msra.mxu0 %v3060
    %4168 = vmatprep.subr.mxu0 %v3059
    %4169 = vmatpush2.msra.mxu0 %v3058
    %4170 = vmatprep.subr.mxu0 %v3057
    %4171 = vmatpush2.msra.mxu0 %v3056
    %4172 = vmatprep.subr.mxu0 %v3055
    %4173 = vmatpush2.msra.mxu0 %v3054
    %4174 = vmatprep.subr.mxu0 %v3053
    %4175 = vmatpush2.msra.mxu0 %v3052
    %4176 = vmatprep.mubr.f32.mxu0 %v4036
    %4177 = vmatmul.mubr.f32.gmra.mxu0 %v4034
    %v4178 = vpop.f32.mrf.mxu0
    %v4179 = vadd.f32 0.0, %v4178
    %v4180 = vpop.f32.mrf.mxu0
    %v4181 = vadd.f32 0.0, %v4180
    %4182 = vdwg.mxu0
    %4183 = vmatprep.subr.mxu0 %v3115
    %4184 = vmatpush1.msra.mxu0 %v3114
    %4185 = vmatprep.subr.mxu0 %v3113
    %4186 = vmatpush1.msra.mxu0 %v3112
    %4187 = vmatprep.subr.mxu0 %v3111
    %4188 = vmatpush1.msra.mxu0 %v3110
    %4189 = vmatprep.subr.mxu0 %v3109
    %4190 = vmatpush1.msra.mxu0 %v3108
    %4191 = vmatprep.subr.mxu0 %v3107
    %4192 = vmatpush1.msra.mxu0 %v3106
    %4193 = vmatprep.subr.mxu0 %v3105
    %4194 = vmatpush1.msra.mxu0 %v3104
    %4195 = vmatprep.subr.mxu0 %v3103
    %4196 = vmatpush1.msra.mxu0 %v3102
    %4197 = vmatprep.subr.mxu0 %v3101
    %4198 = vmatpush1.msra.mxu0 %v3100
    %4199 = vmatprep.subr.mxu0 %v3099
    %4200 = vmatpush1.msra.mxu0 %v3098
    %4201 = vmatprep.subr.mxu0 %v3097
    %4202 = vmatpush1.msra.mxu0 %v3096
    %4203 = vmatprep.subr.mxu0 %v3095
    %4204 = vmatpush1.msra.mxu0 %v3094
    %4205 = vmatprep.subr.mxu0 %v3093
    %4206 = vmatpush1.msra.mxu0 %v3092
    %4207 = vmatprep.subr.mxu0 %v3091
    %4208 = vmatpush1.msra.mxu0 %v3090
    %4209 = vmatprep.subr.mxu0 %v3089
    %4210 = vmatpush1.msra.mxu0 %v3088
    %4211 = vmatprep.subr.mxu0 %v3087
    %4212 = vmatpush1.msra.mxu0 %v3086
    %4213 = vmatprep.subr.mxu0 %v3085
    %4214 = vmatpush1.msra.mxu0 %v3084
    %4215 = vmatprep.subr.mxu0 0.0
    %4216 = vmatpush2.msra.mxu0 0.0
    %4217 = vmatprep.subr.mxu0 0.0
    %4218 = vmatpush2.msra.mxu0 0.0
    %4219 = vmatprep.subr.mxu0 0.0
    %4220 = vmatpush2.msra.mxu0 0.0
    %4221 = vmatprep.subr.mxu0 0.0
    %4222 = vmatpush2.msra.mxu0 0.0
    %4223 = vmatprep.subr.mxu0 0.0
    %4224 = vmatpush2.msra.mxu0 0.0
    %4225 = vmatprep.subr.mxu0 0.0
    %4226 = vmatpush2.msra.mxu0 0.0
    %4227 = vmatprep.subr.mxu0 0.0
    %4228 = vmatpush2.msra.mxu0 0.0
    %4229 = vmatprep.subr.mxu0 0.0
    %4230 = vmatpush2.msra.mxu0 0.0
    %4231 = vmatprep.subr.mxu0 0.0
    %4232 = vmatpush2.msra.mxu0 0.0
    %4233 = vmatprep.subr.mxu0 0.0
    %4234 = vmatpush2.msra.mxu0 0.0
    %4235 = vmatprep.subr.mxu0 0.0
    %4236 = vmatpush2.msra.mxu0 0.0
    %4237 = vmatprep.subr.mxu0 0.0
    %4238 = vmatpush2.msra.mxu0 0.0
    %4239 = vmatprep.subr.mxu0 0.0
    %4240 = vmatpush2.msra.mxu0 0.0
    %4241 = vmatprep.subr.mxu0 0.0
    %4242 = vmatpush2.msra.mxu0 0.0
    %4243 = vmatprep.subr.mxu0 %v3129
    %4244 = vmatpush2.msra.mxu0 %v3126
    %4245 = vmatprep.subr.mxu0 %v3117
    %4246 = vmatpush2.msra.mxu0 %v3116
    %4247 = vmatprep.mubr.f32.mxu0 %v4110
    %4248 = vmatmul.mubr.f32.gmra.mxu0 %v4105
    %v4249 = vpop.f32.mrf.mxu0
    %v4250 = vadd.f32 %v4179, %v4249
    %v4251 = vpop.f32.mrf.mxu0
    %v4252 = vadd.f32 %v4181, %v4251
    %4253 = vdwg.mxu0
    %v4254 = vmax.f32 %v3960, %v4250
    %v4255 = vmax.f32 %v3961, %v4252
    %4256 = vmatprep.subr.mxu0 %v3305
    %4257 = vmatpush1.msra.mxu0 %v3304
    %4258 = vmatprep.subr.mxu0 %v3303
    %4259 = vmatpush1.msra.mxu0 %v3302
    %4260 = vmatprep.subr.mxu0 %v3301
    %4261 = vmatpush1.msra.mxu0 %v3300
    %4262 = vmatprep.subr.mxu0 %v3299
    %4263 = vmatpush1.msra.mxu0 %v3298
    %4264 = vmatprep.subr.mxu0 %v3297
    %4265 = vmatpush1.msra.mxu0 %v3296
    %4266 = vmatprep.subr.mxu0 %v3295
    %4267 = vmatpush1.msra.mxu0 %v3294
    %4268 = vmatprep.subr.mxu0 %v3293
    %4269 = vmatpush1.msra.mxu0 %v3292
    %4270 = vmatprep.subr.mxu0 %v3291
    %4271 = vmatpush1.msra.mxu0 %v3290
    %4272 = vmatprep.subr.mxu0 %v3289
    %4273 = vmatpush1.msra.mxu0 %v3288
    %4274 = vmatprep.subr.mxu0 %v3287
    %4275 = vmatpush1.msra.mxu0 %v3286
    %4276 = vmatprep.subr.mxu0 %v3285
    %4277 = vmatpush1.msra.mxu0 %v3284
    %4278 = vmatprep.subr.mxu0 %v3283
    %4279 = vmatpush1.msra.mxu0 %v3282
    %4280 = vmatprep.subr.mxu0 %v3281
    %4281 = vmatpush1.msra.mxu0 %v3280
    %4282 = vmatprep.subr.mxu0 %v3279
    %4283 = vmatpush1.msra.mxu0 %v3278
    %4284 = vmatprep.subr.mxu0 %v3277
    %4285 = vmatpush1.msra.mxu0 %v3276
    %4286 = vmatprep.subr.mxu0 %v3275
    %4287 = vmatpush1.msra.mxu0 %v3274
    %4288 = vmatprep.subr.mxu0 %v3337
    %4289 = vmatpush2.msra.mxu0 %v3336
    %4290 = vmatprep.subr.mxu0 %v3335
    %4291 = vmatpush2.msra.mxu0 %v3334
    %4292 = vmatprep.subr.mxu0 %v3333
    %4293 = vmatpush2.msra.mxu0 %v3332
    %4294 = vmatprep.subr.mxu0 %v3331
    %4295 = vmatpush2.msra.mxu0 %v3330
    %4296 = vmatprep.subr.mxu0 %v3329
    %4297 = vmatpush2.msra.mxu0 %v3328
    %4298 = vmatprep.subr.mxu0 %v3327
    %4299 = vmatpush2.msra.mxu0 %v3326
    %4300 = vmatprep.subr.mxu0 %v3325
    %4301 = vmatpush2.msra.mxu0 %v3324
    %4302 = vmatprep.subr.mxu0 %v3323
    %4303 = vmatpush2.msra.mxu0 %v3322
    %4304 = vmatprep.subr.mxu0 %v3321
    %4305 = vmatpush2.msra.mxu0 %v3320
    %4306 = vmatprep.subr.mxu0 %v3319
    %4307 = vmatpush2.msra.mxu0 %v3318
    %4308 = vmatprep.subr.mxu0 %v3317
    %4309 = vmatpush2.msra.mxu0 %v3316
    %4310 = vmatprep.subr.mxu0 %v3315
    %4311 = vmatpush2.msra.mxu0 %v3314
    %4312 = vmatprep.subr.mxu0 %v3313
    %4313 = vmatpush2.msra.mxu0 %v3312
    %4314 = vmatprep.subr.mxu0 %v3311
    %4315 = vmatpush2.msra.mxu0 %v3310
    %4316 = vmatprep.subr.mxu0 %v3309
    %4317 = vmatpush2.msra.mxu0 %v3308
    %4318 = vmatprep.subr.mxu0 %v3307
    %4319 = vmatpush2.msra.mxu0 %v3306
    %4320 = vmatprep.mubr.f32.mxu0 %v4036
    %4321 = vmatmul.mubr.f32.gmra.mxu0 %v4034
    %v4322 = vpop.f32.mrf.mxu0
    %v4323 = vadd.f32 0.0, %v4322
    %v4324 = vpop.f32.mrf.mxu0
    %v4325 = vadd.f32 0.0, %v4324
    %4326 = vdwg.mxu0
    %4327 = vmatprep.subr.mxu0 %v3369
    %4328 = vmatpush1.msra.mxu0 %v3368
    %4329 = vmatprep.subr.mxu0 %v3367
    %4330 = vmatpush1.msra.mxu0 %v3366
    %4331 = vmatprep.subr.mxu0 %v3365
    %4332 = vmatpush1.msra.mxu0 %v3364
    %4333 = vmatprep.subr.mxu0 %v3363
    %4334 = vmatpush1.msra.mxu0 %v3362
    %4335 = vmatprep.subr.mxu0 %v3361
    %4336 = vmatpush1.msra.mxu0 %v3360
    %4337 = vmatprep.subr.mxu0 %v3359
    %4338 = vmatpush1.msra.mxu0 %v3358
    %4339 = vmatprep.subr.mxu0 %v3357
    %4340 = vmatpush1.msra.mxu0 %v3356
    %4341 = vmatprep.subr.mxu0 %v3355
    %4342 = vmatpush1.msra.mxu0 %v3354
    %4343 = vmatprep.subr.mxu0 %v3353
    %4344 = vmatpush1.msra.mxu0 %v3352
    %4345 = vmatprep.subr.mxu0 %v3351
    %4346 = vmatpush1.msra.mxu0 %v3350
    %4347 = vmatprep.subr.mxu0 %v3349
    %4348 = vmatpush1.msra.mxu0 %v3348
    %4349 = vmatprep.subr.mxu0 %v3347
    %4350 = vmatpush1.msra.mxu0 %v3346
    %4351 = vmatprep.subr.mxu0 %v3345
    %4352 = vmatpush1.msra.mxu0 %v3344
    %4353 = vmatprep.subr.mxu0 %v3343
    %4354 = vmatpush1.msra.mxu0 %v3342
    %4355 = vmatprep.subr.mxu0 %v3341
    %4356 = vmatpush1.msra.mxu0 %v3340
    %4357 = vmatprep.subr.mxu0 %v3339
    %4358 = vmatpush1.msra.mxu0 %v3338
    %4359 = vmatprep.subr.mxu0 0.0
    %4360 = vmatpush2.msra.mxu0 0.0
    %4361 = vmatprep.subr.mxu0 0.0
    %4362 = vmatpush2.msra.mxu0 0.0
    %4363 = vmatprep.subr.mxu0 0.0
    %4364 = vmatpush2.msra.mxu0 0.0
    %4365 = vmatprep.subr.mxu0 0.0
    %4366 = vmatpush2.msra.mxu0 0.0
    %4367 = vmatprep.subr.mxu0 0.0
    %4368 = vmatpush2.msra.mxu0 0.0
    %4369 = vmatprep.subr.mxu0 0.0
    %4370 = vmatpush2.msra.mxu0 0.0
    %4371 = vmatprep.subr.mxu0 0.0
    %4372 = vmatpush2.msra.mxu0 0.0
    %4373 = vmatprep.subr.mxu0 0.0
    %4374 = vmatpush2.msra.mxu0 0.0
    %4375 = vmatprep.subr.mxu0 0.0
    %4376 = vmatpush2.msra.mxu0 0.0
    %4377 = vmatprep.subr.mxu0 0.0
    %4378 = vmatpush2.msra.mxu0 0.0
    %4379 = vmatprep.subr.mxu0 0.0
    %4380 = vmatpush2.msra.mxu0 0.0
    %4381 = vmatprep.subr.mxu0 0.0
    %4382 = vmatpush2.msra.mxu0 0.0
    %4383 = vmatprep.subr.mxu0 0.0
    %4384 = vmatpush2.msra.mxu0 0.0
    %4385 = vmatprep.subr.mxu0 0.0
    %4386 = vmatpush2.msra.mxu0 0.0
    %4387 = vmatprep.subr.mxu0 %v3378
    %4388 = vmatpush2.msra.mxu0 %v3375
    %4389 = vmatprep.subr.mxu0 %v3371
    %4390 = vmatpush2.msra.mxu0 %v3370
    %4391 = vmatprep.mubr.f32.mxu0 %v4110
    %4392 = vmatmul.mubr.f32.gmra.mxu0 %v4105
    %v4393 = vpop.f32.mrf.mxu0
    %v4394 = vadd.f32 %v4323, %v4393
    %v4395 = vpop.f32.mrf.mxu0
    %v4396 = vadd.f32 %v4325, %v4395
    %4397 = vdwg.mxu0
    %v4398 = vmax.f32 %v4254, %v4394
    %v4399 = vmax.f32 %v4255, %v4396
    %s4400 = scalar_lea.vmem %s6, 12
    %v4401 = vld [vmem:[%s4400] sm:$0xf]
    %v4403 = vsel %vm103, %v4401, 0
    %4405 = vmatprep.subr.mxu0 0.0
    %4406 = vmatpush1.msra.mxu0 0.0
    %4407 = vmatprep.subr.mxu0 0.0
    %4408 = vmatpush1.msra.mxu0 0.0
    %4409 = vmatprep.subr.mxu0 0.0
    %4410 = vmatpush1.msra.mxu0 0.0
    %4411 = vmatprep.subr.mxu0 0.0
    %4412 = vmatpush1.msra.mxu0 0.0
    %4413 = vmatprep.subr.mxu0 0.0
    %4414 = vmatpush1.msra.mxu0 0.0
    %4415 = vmatprep.subr.mxu0 0.0
    %4416 = vmatpush1.msra.mxu0 0.0
    %4417 = vmatprep.subr.mxu0 0.0
    %4418 = vmatpush1.msra.mxu0 0.0
    %4419 = vmatprep.subr.mxu0 0.0
    %4420 = vmatpush1.msra.mxu0 0.0
    %4421 = vmatprep.subr.mxu0 0.0
    %4422 = vmatpush1.msra.mxu0 0.0
    %4423 = vmatprep.subr.mxu0 0.0
    %4424 = vmatpush1.msra.mxu0 0.0
    %4425 = vmatprep.subr.mxu0 0.0
    %4426 = vmatpush1.msra.mxu0 0.0
    %4427 = vmatprep.subr.mxu0 0.0
    %4428 = vmatpush1.msra.mxu0 0.0
    %4429 = vmatprep.subr.mxu0 0.0
    %4430 = vmatpush1.msra.mxu0 0.0
    %4431 = vmatprep.subr.mxu0 0.0
    %4432 = vmatpush1.msra.mxu0 0.0
    %4433 = vmatprep.subr.mxu0 %v2871
    %4434 = vmatpush1.msra.mxu0 %v2870
    %4435 = vmatprep.subr.mxu0 %v2867
    %4436 = vmatpush1.msra.mxu0 %v2866
    %4437 = vmatprep.subr.mxu0 0.0
    %4438 = vmatpush2.msra.mxu0 0.0
    %4439 = vmatprep.subr.mxu0 0.0
    %4440 = vmatpush2.msra.mxu0 0.0
    %4441 = vmatprep.subr.mxu0 0.0
    %4442 = vmatpush2.msra.mxu0 0.0
    %4443 = vmatprep.subr.mxu0 0.0
    %4444 = vmatpush2.msra.mxu0 0.0
    %4445 = vmatprep.subr.mxu0 0.0
    %4446 = vmatpush2.msra.mxu0 0.0
    %4447 = vmatprep.subr.mxu0 0.0
    %4448 = vmatpush2.msra.mxu0 0.0
    %4449 = vmatprep.subr.mxu0 0.0
    %4450 = vmatpush2.msra.mxu0 0.0
    %4451 = vmatprep.subr.mxu0 0.0
    %4452 = vmatpush2.msra.mxu0 0.0
    %4453 = vmatprep.subr.mxu0 0.0
    %4454 = vmatpush2.msra.mxu0 0.0
    %4455 = vmatprep.subr.mxu0 0.0
    %4456 = vmatpush2.msra.mxu0 0.0
    %4457 = vmatprep.subr.mxu0 0.0
    %4458 = vmatpush2.msra.mxu0 0.0
    %4459 = vmatprep.subr.mxu0 0.0
    %4460 = vmatpush2.msra.mxu0 0.0
    %4461 = vmatprep.subr.mxu0 0.0
    %4462 = vmatpush2.msra.mxu0 0.0
    %4463 = vmatprep.subr.mxu0 0.0
    %4464 = vmatpush2.msra.mxu0 0.0
    %4465 = vmatprep.subr.mxu0 0.0
    %4466 = vmatpush2.msra.mxu0 0.0
    %4467 = vmatprep.subr.mxu0 0.0
    %4468 = vmatpush2.msra.mxu0 0.0
    %4469 = vmatprep.mubr.f32.mxu0 0.0
    %4470 = vmatmul.mubr.f32.gmra.mxu0 %v4403
    %v4471 = vpop.f32.mrf.mxu0
    %v4472 = vadd.f32 0.0, %v4471
    %v4473 = vpop.f32.mrf.mxu0
    %v4474 = vadd.f32 0.0, %v4473
    %4475 = vdwg.mxu0
    %4476 = vmatprep.subr.mxu0 0.0
    %4477 = vmatpush1.msra.mxu0 0.0
    %4478 = vmatprep.subr.mxu0 0.0
    %4479 = vmatpush1.msra.mxu0 0.0
    %4480 = vmatprep.subr.mxu0 0.0
    %4481 = vmatpush1.msra.mxu0 0.0
    %4482 = vmatprep.subr.mxu0 0.0
    %4483 = vmatpush1.msra.mxu0 0.0
    %4484 = vmatprep.subr.mxu0 0.0
    %4485 = vmatpush1.msra.mxu0 0.0
    %4486 = vmatprep.subr.mxu0 0.0
    %4487 = vmatpush1.msra.mxu0 0.0
    %4488 = vmatprep.subr.mxu0 0.0
    %4489 = vmatpush1.msra.mxu0 0.0
    %4490 = vmatprep.subr.mxu0 0.0
    %4491 = vmatpush1.msra.mxu0 0.0
    %4492 = vmatprep.subr.mxu0 0.0
    %4493 = vmatpush1.msra.mxu0 0.0
    %4494 = vmatprep.subr.mxu0 0.0
    %4495 = vmatpush1.msra.mxu0 0.0
    %4496 = vmatprep.subr.mxu0 0.0
    %4497 = vmatpush1.msra.mxu0 0.0
    %4498 = vmatprep.subr.mxu0 0.0
    %4499 = vmatpush1.msra.mxu0 0.0
    %4500 = vmatprep.subr.mxu0 0.0
    %4501 = vmatpush1.msra.mxu0 0.0
    %4502 = vmatprep.subr.mxu0 0.0
    %4503 = vmatpush1.msra.mxu0 0.0
    %4504 = vmatprep.subr.mxu0 %v2873
    %4505 = vmatpush1.msra.mxu0 %v2872
    %4506 = vmatprep.subr.mxu0 %v2869
    %4507 = vmatpush1.msra.mxu0 %v2868
    %4508 = vmatprep.subr.mxu0 0.0
    %4509 = vmatpush2.msra.mxu0 0.0
    %4510 = vmatprep.subr.mxu0 0.0
    %4511 = vmatpush2.msra.mxu0 0.0
    %4512 = vmatprep.subr.mxu0 0.0
    %4513 = vmatpush2.msra.mxu0 0.0
    %4514 = vmatprep.subr.mxu0 0.0
    %4515 = vmatpush2.msra.mxu0 0.0
    %4516 = vmatprep.subr.mxu0 0.0
    %4517 = vmatpush2.msra.mxu0 0.0
    %4518 = vmatprep.subr.mxu0 0.0
    %4519 = vmatpush2.msra.mxu0 0.0
    %4520 = vmatprep.subr.mxu0 0.0
    %4521 = vmatpush2.msra.mxu0 0.0
    %4522 = vmatprep.subr.mxu0 0.0
    %4523 = vmatpush2.msra.mxu0 0.0
    %4524 = vmatprep.subr.mxu0 0.0
    %4525 = vmatpush2.msra.mxu0 0.0
    %4526 = vmatprep.subr.mxu0 0.0
    %4527 = vmatpush2.msra.mxu0 0.0
    %4528 = vmatprep.subr.mxu0 0.0
    %4529 = vmatpush2.msra.mxu0 0.0
    %4530 = vmatprep.subr.mxu0 0.0
    %4531 = vmatpush2.msra.mxu0 0.0
    %4532 = vmatprep.subr.mxu0 0.0
    %4533 = vmatpush2.msra.mxu0 0.0
    %4534 = vmatprep.subr.mxu0 0.0
    %4535 = vmatpush2.msra.mxu0 0.0
    %4536 = vmatprep.subr.mxu0 0.0
    %4537 = vmatpush2.msra.mxu0 0.0
    %4538 = vmatprep.subr.mxu0 0.0
    %4539 = vmatpush2.msra.mxu0 0.0
    %4540 = vmatprep.mubr.f32.mxu0 0.0
    %4541 = vmatmul.mubr.f32.gmra.mxu0 %v4403
    %v4542 = vpop.f32.mrf.mxu0
    %v4543 = vadd.f32 0.0, %v4542
    %v4544 = vpop.f32.mrf.mxu0
    %v4545 = vadd.f32 0.0, %v4544
    %4546 = vdwg.mxu0
    %v4548 = vsel %vm3120, %v4545, 0
    %4550 = vmatprep.subr.mxu0 %v3051
    %4551 = vmatpush1.msra.mxu0 %v3050
    %4552 = vmatprep.subr.mxu0 %v3049
    %4553 = vmatpush1.msra.mxu0 %v3048
    %4554 = vmatprep.subr.mxu0 %v3047
    %4555 = vmatpush1.msra.mxu0 %v3046
    %4556 = vmatprep.subr.mxu0 %v3045
    %4557 = vmatpush1.msra.mxu0 %v3044
    %4558 = vmatprep.subr.mxu0 %v3043
    %4559 = vmatpush1.msra.mxu0 %v3042
    %4560 = vmatprep.subr.mxu0 %v3041
    %4561 = vmatpush1.msra.mxu0 %v3040
    %4562 = vmatprep.subr.mxu0 %v3039
    %4563 = vmatpush1.msra.mxu0 %v3038
    %4564 = vmatprep.subr.mxu0 %v3037
    %4565 = vmatpush1.msra.mxu0 %v3036
    %4566 = vmatprep.subr.mxu0 %v3035
    %4567 = vmatpush1.msra.mxu0 %v3034
    %4568 = vmatprep.subr.mxu0 %v3033
    %4569 = vmatpush1.msra.mxu0 %v3032
    %4570 = vmatprep.subr.mxu0 %v3031
    %4571 = vmatpush1.msra.mxu0 %v3030
    %4572 = vmatprep.subr.mxu0 %v3029
    %4573 = vmatpush1.msra.mxu0 %v3028
    %4574 = vmatprep.subr.mxu0 %v3027
    %4575 = vmatpush1.msra.mxu0 %v3026
    %4576 = vmatprep.subr.mxu0 %v3025
    %4577 = vmatpush1.msra.mxu0 %v3024
    %4578 = vmatprep.subr.mxu0 %v3023
    %4579 = vmatpush1.msra.mxu0 %v3022
    %4580 = vmatprep.subr.mxu0 %v3021
    %4581 = vmatpush1.msra.mxu0 %v3020
    %4582 = vmatprep.subr.mxu0 %v3083
    %4583 = vmatpush2.msra.mxu0 %v3082
    %4584 = vmatprep.subr.mxu0 %v3081
    %4585 = vmatpush2.msra.mxu0 %v3080
    %4586 = vmatprep.subr.mxu0 %v3079
    %4587 = vmatpush2.msra.mxu0 %v3078
    %4588 = vmatprep.subr.mxu0 %v3077
    %4589 = vmatpush2.msra.mxu0 %v3076
    %4590 = vmatprep.subr.mxu0 %v3075
    %4591 = vmatpush2.msra.mxu0 %v3074
    %4592 = vmatprep.subr.mxu0 %v3073
    %4593 = vmatpush2.msra.mxu0 %v3072
    %4594 = vmatprep.subr.mxu0 %v3071
    %4595 = vmatpush2.msra.mxu0 %v3070
    %4596 = vmatprep.subr.mxu0 %v3069
    %4597 = vmatpush2.msra.mxu0 %v3068
    %4598 = vmatprep.subr.mxu0 %v3067
    %4599 = vmatpush2.msra.mxu0 %v3066
    %4600 = vmatprep.subr.mxu0 %v3065
    %4601 = vmatpush2.msra.mxu0 %v3064
    %4602 = vmatprep.subr.mxu0 %v3063
    %4603 = vmatpush2.msra.mxu0 %v3062
    %4604 = vmatprep.subr.mxu0 %v3061
    %4605 = vmatpush2.msra.mxu0 %v3060
    %4606 = vmatprep.subr.mxu0 %v3059
    %4607 = vmatpush2.msra.mxu0 %v3058
    %4608 = vmatprep.subr.mxu0 %v3057
    %4609 = vmatpush2.msra.mxu0 %v3056
    %4610 = vmatprep.subr.mxu0 %v3055
    %4611 = vmatpush2.msra.mxu0 %v3054
    %4612 = vmatprep.subr.mxu0 %v3053
    %4613 = vmatpush2.msra.mxu0 %v3052
    %4614 = vmatprep.mubr.f32.mxu0 %v4474
    %4615 = vmatmul.mubr.f32.gmra.mxu0 %v4472
    %v4616 = vpop.f32.mrf.mxu0
    %v4617 = vadd.f32 0.0, %v4616
    %v4618 = vpop.f32.mrf.mxu0
    %v4619 = vadd.f32 0.0, %v4618
    %4620 = vdwg.mxu0
    %4621 = vmatprep.subr.mxu0 %v3115
    %4622 = vmatpush1.msra.mxu0 %v3114
    %4623 = vmatprep.subr.mxu0 %v3113
    %4624 = vmatpush1.msra.mxu0 %v3112
    %4625 = vmatprep.subr.mxu0 %v3111
    %4626 = vmatpush1.msra.mxu0 %v3110
    %4627 = vmatprep.subr.mxu0 %v3109
    %4628 = vmatpush1.msra.mxu0 %v3108
    %4629 = vmatprep.subr.mxu0 %v3107
    %4630 = vmatpush1.msra.mxu0 %v3106
    %4631 = vmatprep.subr.mxu0 %v3105
    %4632 = vmatpush1.msra.mxu0 %v3104
    %4633 = vmatprep.subr.mxu0 %v3103
    %4634 = vmatpush1.msra.mxu0 %v3102
    %4635 = vmatprep.subr.mxu0 %v3101
    %4636 = vmatpush1.msra.mxu0 %v3100
    %4637 = vmatprep.subr.mxu0 %v3099
    %4638 = vmatpush1.msra.mxu0 %v3098
    %4639 = vmatprep.subr.mxu0 %v3097
    %4640 = vmatpush1.msra.mxu0 %v3096
    %4641 = vmatprep.subr.mxu0 %v3095
    %4642 = vmatpush1.msra.mxu0 %v3094
    %4643 = vmatprep.subr.mxu0 %v3093
    %4644 = vmatpush1.msra.mxu0 %v3092
    %4645 = vmatprep.subr.mxu0 %v3091
    %4646 = vmatpush1.msra.mxu0 %v3090
    %4647 = vmatprep.subr.mxu0 %v3089
    %4648 = vmatpush1.msra.mxu0 %v3088
    %4649 = vmatprep.subr.mxu0 %v3087
    %4650 = vmatpush1.msra.mxu0 %v3086
    %4651 = vmatprep.subr.mxu0 %v3085
    %4652 = vmatpush1.msra.mxu0 %v3084
    %4653 = vmatprep.subr.mxu0 0.0
    %4654 = vmatpush2.msra.mxu0 0.0
    %4655 = vmatprep.subr.mxu0 0.0
    %4656 = vmatpush2.msra.mxu0 0.0
    %4657 = vmatprep.subr.mxu0 0.0
    %4658 = vmatpush2.msra.mxu0 0.0
    %4659 = vmatprep.subr.mxu0 0.0
    %4660 = vmatpush2.msra.mxu0 0.0
    %4661 = vmatprep.subr.mxu0 0.0
    %4662 = vmatpush2.msra.mxu0 0.0
    %4663 = vmatprep.subr.mxu0 0.0
    %4664 = vmatpush2.msra.mxu0 0.0
    %4665 = vmatprep.subr.mxu0 0.0
    %4666 = vmatpush2.msra.mxu0 0.0
    %4667 = vmatprep.subr.mxu0 0.0
    %4668 = vmatpush2.msra.mxu0 0.0
    %4669 = vmatprep.subr.mxu0 0.0
    %4670 = vmatpush2.msra.mxu0 0.0
    %4671 = vmatprep.subr.mxu0 0.0
    %4672 = vmatpush2.msra.mxu0 0.0
    %4673 = vmatprep.subr.mxu0 0.0
    %4674 = vmatpush2.msra.mxu0 0.0
    %4675 = vmatprep.subr.mxu0 0.0
    %4676 = vmatpush2.msra.mxu0 0.0
    %4677 = vmatprep.subr.mxu0 0.0
    %4678 = vmatpush2.msra.mxu0 0.0
    %4679 = vmatprep.subr.mxu0 0.0
    %4680 = vmatpush2.msra.mxu0 0.0
    %4681 = vmatprep.subr.mxu0 %v3129
    %4682 = vmatpush2.msra.mxu0 %v3126
    %4683 = vmatprep.subr.mxu0 %v3117
    %4684 = vmatpush2.msra.mxu0 %v3116
    %4685 = vmatprep.mubr.f32.mxu0 %v4548
    %4686 = vmatmul.mubr.f32.gmra.mxu0 %v4543
    %v4687 = vpop.f32.mrf.mxu0
    %v4688 = vadd.f32 %v4617, %v4687
    %v4689 = vpop.f32.mrf.mxu0
    %v4690 = vadd.f32 %v4619, %v4689
    %4691 = vdwg.mxu0
    %v4692 = vmax.f32 %v4398, %v4688
    %v4693 = vmax.f32 %v4399, %v4690
    %4694 = vmatprep.subr.mxu0 %v3305
    %4695 = vmatpush1.msra.mxu0 %v3304
    %4696 = vmatprep.subr.mxu0 %v3303
    %4697 = vmatpush1.msra.mxu0 %v3302
    %4698 = vmatprep.subr.mxu0 %v3301
    %4699 = vmatpush1.msra.mxu0 %v3300
    %4700 = vmatprep.subr.mxu0 %v3299
    %4701 = vmatpush1.msra.mxu0 %v3298
    %4702 = vmatprep.subr.mxu0 %v3297
    %4703 = vmatpush1.msra.mxu0 %v3296
    %4704 = vmatprep.subr.mxu0 %v3295
    %4705 = vmatpush1.msra.mxu0 %v3294
    %4706 = vmatprep.subr.mxu0 %v3293
    %4707 = vmatpush1.msra.mxu0 %v3292
    %4708 = vmatprep.subr.mxu0 %v3291
    %4709 = vmatpush1.msra.mxu0 %v3290
    %4710 = vmatprep.subr.mxu0 %v3289
    %4711 = vmatpush1.msra.mxu0 %v3288
    %4712 = vmatprep.subr.mxu0 %v3287
    %4713 = vmatpush1.msra.mxu0 %v3286
    %4714 = vmatprep.subr.mxu0 %v3285
    %4715 = vmatpush1.msra.mxu0 %v3284
    %4716 = vmatprep.subr.mxu0 %v3283
    %4717 = vmatpush1.msra.mxu0 %v3282
    %4718 = vmatprep.subr.mxu0 %v3281
    %4719 = vmatpush1.msra.mxu0 %v3280
    %4720 = vmatprep.subr.mxu0 %v3279
    %4721 = vmatpush1.msra.mxu0 %v3278
    %4722 = vmatprep.subr.mxu0 %v3277
    %4723 = vmatpush1.msra.mxu0 %v3276
    %4724 = vmatprep.subr.mxu0 %v3275
    %4725 = vmatpush1.msra.mxu0 %v3274
    %4726 = vmatprep.subr.mxu0 %v3337
    %4727 = vmatpush2.msra.mxu0 %v3336
    %4728 = vmatprep.subr.mxu0 %v3335
    %4729 = vmatpush2.msra.mxu0 %v3334
    %4730 = vmatprep.subr.mxu0 %v3333
    %4731 = vmatpush2.msra.mxu0 %v3332
    %4732 = vmatprep.subr.mxu0 %v3331
    %4733 = vmatpush2.msra.mxu0 %v3330
    %4734 = vmatprep.subr.mxu0 %v3329
    %4735 = vmatpush2.msra.mxu0 %v3328
    %4736 = vmatprep.subr.mxu0 %v3327
    %4737 = vmatpush2.msra.mxu0 %v3326
    %4738 = vmatprep.subr.mxu0 %v3325
    %4739 = vmatpush2.msra.mxu0 %v3324
    %4740 = vmatprep.subr.mxu0 %v3323
    %4741 = vmatpush2.msra.mxu0 %v3322
    %4742 = vmatprep.subr.mxu0 %v3321
    %4743 = vmatpush2.msra.mxu0 %v3320
    %4744 = vmatprep.subr.mxu0 %v3319
    %4745 = vmatpush2.msra.mxu0 %v3318
    %4746 = vmatprep.subr.mxu0 %v3317
    %4747 = vmatpush2.msra.mxu0 %v3316
    %4748 = vmatprep.subr.mxu0 %v3315
    %4749 = vmatpush2.msra.mxu0 %v3314
    %4750 = vmatprep.subr.mxu0 %v3313
    %4751 = vmatpush2.msra.mxu0 %v3312
    %4752 = vmatprep.subr.mxu0 %v3311
    %4753 = vmatpush2.msra.mxu0 %v3310
    %4754 = vmatprep.subr.mxu0 %v3309
    %4755 = vmatpush2.msra.mxu0 %v3308
    %4756 = vmatprep.subr.mxu0 %v3307
    %4757 = vmatpush2.msra.mxu0 %v3306
    %4758 = vmatprep.mubr.f32.mxu0 %v4474
    %4759 = vmatmul.mubr.f32.gmra.mxu0 %v4472
    %v4760 = vpop.f32.mrf.mxu0
    %v4761 = vadd.f32 0.0, %v4760
    %v4762 = vpop.f32.mrf.mxu0
    %v4763 = vadd.f32 0.0, %v4762
    %4764 = vdwg.mxu0
    %4765 = vmatprep.subr.mxu0 %v3369
    %4766 = vmatpush1.msra.mxu0 %v3368
    %4767 = vmatprep.subr.mxu0 %v3367
    %4768 = vmatpush1.msra.mxu0 %v3366
    %4769 = vmatprep.subr.mxu0 %v3365
    %4770 = vmatpush1.msra.mxu0 %v3364
    %4771 = vmatprep.subr.mxu0 %v3363
    %4772 = vmatpush1.msra.mxu0 %v3362
    %4773 = vmatprep.subr.mxu0 %v3361
    %4774 = vmatpush1.msra.mxu0 %v3360
    %4775 = vmatprep.subr.mxu0 %v3359
    %4776 = vmatpush1.msra.mxu0 %v3358
    %4777 = vmatprep.subr.mxu0 %v3357
    %4778 = vmatpush1.msra.mxu0 %v3356
    %4779 = vmatprep.subr.mxu0 %v3355
    %4780 = vmatpush1.msra.mxu0 %v3354
    %4781 = vmatprep.subr.mxu0 %v3353
    %4782 = vmatpush1.msra.mxu0 %v3352
    %4783 = vmatprep.subr.mxu0 %v3351
    %4784 = vmatpush1.msra.mxu0 %v3350
    %4785 = vmatprep.subr.mxu0 %v3349
    %4786 = vmatpush1.msra.mxu0 %v3348
    %4787 = vmatprep.subr.mxu0 %v3347
    %4788 = vmatpush1.msra.mxu0 %v3346
    %4789 = vmatprep.subr.mxu0 %v3345
    %4790 = vmatpush1.msra.mxu0 %v3344
    %4791 = vmatprep.subr.mxu0 %v3343
    %4792 = vmatpush1.msra.mxu0 %v3342
    %4793 = vmatprep.subr.mxu0 %v3341
    %4794 = vmatpush1.msra.mxu0 %v3340
    %4795 = vmatprep.subr.mxu0 %v3339
    %4796 = vmatpush1.msra.mxu0 %v3338
    %4797 = vmatprep.subr.mxu0 0.0
    %4798 = vmatpush2.msra.mxu0 0.0
    %4799 = vmatprep.subr.mxu0 0.0
    %4800 = vmatpush2.msra.mxu0 0.0
    %4801 = vmatprep.subr.mxu0 0.0
    %4802 = vmatpush2.msra.mxu0 0.0
    %4803 = vmatprep.subr.mxu0 0.0
    %4804 = vmatpush2.msra.mxu0 0.0
    %4805 = vmatprep.subr.mxu0 0.0
    %4806 = vmatpush2.msra.mxu0 0.0
    %4807 = vmatprep.subr.mxu0 0.0
    %4808 = vmatpush2.msra.mxu0 0.0
    %4809 = vmatprep.subr.mxu0 0.0
    %4810 = vmatpush2.msra.mxu0 0.0
    %4811 = vmatprep.subr.mxu0 0.0
    %4812 = vmatpush2.msra.mxu0 0.0
    %4813 = vmatprep.subr.mxu0 0.0
    %4814 = vmatpush2.msra.mxu0 0.0
    %4815 = vmatprep.subr.mxu0 0.0
    %4816 = vmatpush2.msra.mxu0 0.0
    %4817 = vmatprep.subr.mxu0 0.0
    %4818 = vmatpush2.msra.mxu0 0.0
    %4819 = vmatprep.subr.mxu0 0.0
    %4820 = vmatpush2.msra.mxu0 0.0
    %4821 = vmatprep.subr.mxu0 0.0
    %4822 = vmatpush2.msra.mxu0 0.0
    %4823 = vmatprep.subr.mxu0 0.0
    %4824 = vmatpush2.msra.mxu0 0.0
    %4825 = vmatprep.subr.mxu0 %v3378
    %4826 = vmatpush2.msra.mxu0 %v3375
    %4827 = vmatprep.subr.mxu0 %v3371
    %4828 = vmatpush2.msra.mxu0 %v3370
    %4829 = vmatprep.mubr.f32.mxu0 %v4548
    %4830 = vmatmul.mubr.f32.gmra.mxu0 %v4543
    %v4831 = vpop.f32.mrf.mxu0
    %v4832 = vadd.f32 %v4761, %v4831
    %v4833 = vpop.f32.mrf.mxu0
    %v4834 = vadd.f32 %v4763, %v4833
    %4835 = vdwg.mxu0
    %v4836 = vmax.f32 %v4692, %v4832
    %v4837 = vmax.f32 %v4693, %v4834
    %v4838 = vld [vmem:[%s8] sm:$0x3]
    %vm4839 = vcmask 31744
    %v4841 = vsel %vm4839, %v4838, 0
    %v4844 = vsel %vm3124, %v4836, 0
    %v4847 = vsel %vm3124, %v4837, 0
    %4849 = vmatprep.subr.mxu0 0.0
    %4850 = vmatpush1.msra.mxu0 0.0
    %4851 = vmatprep.subr.mxu0 0.0
    %4852 = vmatpush1.msra.mxu0 0.0
    %4853 = vmatprep.subr.mxu0 0.0
    %4854 = vmatpush1.msra.mxu0 0.0
    %4855 = vmatprep.subr.mxu0 0.0
    %4856 = vmatpush1.msra.mxu0 0.0
    %4857 = vmatprep.subr.mxu0 0.0
    %4858 = vmatpush1.msra.mxu0 0.0
    %4859 = vmatprep.subr.mxu0 0.0
    %4860 = vmatpush1.msra.mxu0 0.0
    %4861 = vmatprep.subr.mxu0 0.0
    %4862 = vmatpush1.msra.mxu0 0.0
    %4863 = vmatprep.subr.mxu0 0.0
    %4864 = vmatpush1.msra.mxu0 0.0
    %4865 = vmatprep.subr.mxu0 0.0
    %4866 = vmatpush1.msra.mxu0 0.0
    %4867 = vmatprep.subr.mxu0 0.0
    %4868 = vmatpush1.msra.mxu0 0.0
    %4869 = vmatprep.subr.mxu0 0.0
    %4870 = vmatpush1.msra.mxu0 0.0
    %4871 = vmatprep.subr.mxu0 0.0
    %4872 = vmatpush1.msra.mxu0 0.0
    %4873 = vmatprep.subr.mxu0 0.0
    %4874 = vmatpush1.msra.mxu0 0.0
    %4875 = vmatprep.subr.mxu0 0.0
    %4876 = vmatpush1.msra.mxu0 0.0
    %4877 = vmatprep.subr.mxu0 0.0
    %4878 = vmatpush1.msra.mxu0 0.0
    %4879 = vmatprep.subr.mxu0 %v4847
    %4880 = vmatpush1.msra.mxu0 %v4844
    %4881 = vmatprep.subr.mxu0 0.0
    %4882 = vmatpush2.msra.mxu0 0.0
    %4883 = vmatprep.subr.mxu0 0.0
    %4884 = vmatpush2.msra.mxu0 0.0
    %4885 = vmatprep.subr.mxu0 0.0
    %4886 = vmatpush2.msra.mxu0 0.0
    %4887 = vmatprep.subr.mxu0 0.0
    %4888 = vmatpush2.msra.mxu0 0.0
    %4889 = vmatprep.subr.mxu0 0.0
    %4890 = vmatpush2.msra.mxu0 0.0
    %4891 = vmatprep.subr.mxu0 0.0
    %4892 = vmatpush2.msra.mxu0 0.0
    %4893 = vmatprep.subr.mxu0 0.0
    %4894 = vmatpush2.msra.mxu0 0.0
    %4895 = vmatprep.subr.mxu0 0.0
    %4896 = vmatpush2.msra.mxu0 0.0
    %4897 = vmatprep.subr.mxu0 0.0
    %4898 = vmatpush2.msra.mxu0 0.0
    %4899 = vmatprep.subr.mxu0 0.0
    %4900 = vmatpush2.msra.mxu0 0.0
    %4901 = vmatprep.subr.mxu0 0.0
    %4902 = vmatpush2.msra.mxu0 0.0
    %4903 = vmatprep.subr.mxu0 0.0
    %4904 = vmatpush2.msra.mxu0 0.0
    %4905 = vmatprep.subr.mxu0 0.0
    %4906 = vmatpush2.msra.mxu0 0.0
    %4907 = vmatprep.subr.mxu0 0.0
    %4908 = vmatpush2.msra.mxu0 0.0
    %4909 = vmatprep.subr.mxu0 0.0
    %4910 = vmatpush2.msra.mxu0 0.0
    %4911 = vmatprep.subr.mxu0 0.0
    %4912 = vmatpush2.msra.mxu0 0.0
    %4913 = vmatprep.mubr.f32.mxu0 0.0
    %4914 = vmatmul.mubr.f32.gmra.mxu0 %v4841
    %v4915 = vpop.f32.mrf.mxu0
    %v4916 = vadd.f32 0.0, %v4915
    %v4917 = vpop.f32.mrf.mxu0
    %v4918 = vadd.f32 0.0, %v4917
    %4919 = vdwg.mxu0
    %v4920 = vld [vmem:[%s9] sm:$0xff]
    %v4921 = vld [vmem:[%s9 + $0x8] sm:$0xff]
    %v4922 = vld [vmem:[%s9 + $0x10] sm:$0xff]
    %v4923 = vld [vmem:[%s9 + $0x18] sm:$0xff]
    %v4924 = vld [vmem:[%s9 + $0x20] sm:$0xff]
    %v4925 = vld [vmem:[%s9 + $0x28] sm:$0xff]
    %v4926 = vld [vmem:[%s9 + $0x30] sm:$0xff]
    %v4927 = vld [vmem:[%s9 + $0x38] sm:$0xff]
    %v4928 = vld [vmem:[%s9 + $0x40] sm:$0xff]
    %v4929 = vld [vmem:[%s9 + $0x48] sm:$0xff]
    %v4930 = vld [vmem:[%s9 + $0x50] sm:$0xff]
    %v4931 = vld [vmem:[%s9 + $0x58] sm:$0xff]
    %v4932 = vld [vmem:[%s9 + $0x60] sm:$0xff]
    %v4933 = vld [vmem:[%s9 + $0x68] sm:$0xff]
    %v4934 = vld [vmem:[%s9 + $0x70] sm:$0xff]
    %v4935 = vld [vmem:[%s9 + $0x78] sm:$0xff]
    %v4936 = vld [vmem:[%s9 + $0x80] sm:$0xff]
    %v4937 = vld [vmem:[%s9 + $0x88] sm:$0xff]
    %v4938 = vld [vmem:[%s9 + $0x90] sm:$0xff]
    %v4939 = vld [vmem:[%s9 + $0x98] sm:$0xff]
    %v4940 = vld [vmem:[%s9 + $0xa0] sm:$0xff]
    %v4941 = vld [vmem:[%s9 + $0xa8] sm:$0xff]
    %v4942 = vld [vmem:[%s9 + $0xb0] sm:$0xff]
    %v4943 = vld [vmem:[%s9 + $0xb8] sm:$0xff]
    %v4944 = vld [vmem:[%s9 + $0xc0] sm:$0x3f]
    %s4945 = scalar_lea.vmem %s8, 2
    %v4946 = vld [vmem:[%s4945] sm:$0x3]
    %v4948 = vsel %vm4839, %v4946, 0
    %4950 = vmatprep.subr.mxu0 0.0
    %4951 = vmatpush1.msra.mxu0 0.0
    %4952 = vmatprep.subr.mxu0 0.0
    %4953 = vmatpush1.msra.mxu0 0.0
    %4954 = vmatprep.subr.mxu0 0.0
    %4955 = vmatpush1.msra.mxu0 0.0
    %4956 = vmatprep.subr.mxu0 0.0
    %4957 = vmatpush1.msra.mxu0 0.0
    %4958 = vmatprep.subr.mxu0 0.0
    %4959 = vmatpush1.msra.mxu0 0.0
    %4960 = vmatprep.subr.mxu0 0.0
    %4961 = vmatpush1.msra.mxu0 0.0
    %4962 = vmatprep.subr.mxu0 0.0
    %4963 = vmatpush1.msra.mxu0 0.0
    %4964 = vmatprep.subr.mxu0 0.0
    %4965 = vmatpush1.msra.mxu0 0.0
    %4966 = vmatprep.subr.mxu0 0.0
    %4967 = vmatpush1.msra.mxu0 0.0
    %4968 = vmatprep.subr.mxu0 0.0
    %4969 = vmatpush1.msra.mxu0 0.0
    %4970 = vmatprep.subr.mxu0 0.0
    %4971 = vmatpush1.msra.mxu0 0.0
    %4972 = vmatprep.subr.mxu0 0.0
    %4973 = vmatpush1.msra.mxu0 0.0
    %4974 = vmatprep.subr.mxu0 0.0
    %4975 = vmatpush1.msra.mxu0 0.0
    %4976 = vmatprep.subr.mxu0 0.0
    %4977 = vmatpush1.msra.mxu0 0.0
    %4978 = vmatprep.subr.mxu0 0.0
    %4979 = vmatpush1.msra.mxu0 0.0
    %4980 = vmatprep.subr.mxu0 %v4847
    %4981 = vmatpush1.msra.mxu0 %v4844
    %4982 = vmatprep.subr.mxu0 0.0
    %4983 = vmatpush2.msra.mxu0 0.0
    %4984 = vmatprep.subr.mxu0 0.0
    %4985 = vmatpush2.msra.mxu0 0.0
    %4986 = vmatprep.subr.mxu0 0.0
    %4987 = vmatpush2.msra.mxu0 0.0
    %4988 = vmatprep.subr.mxu0 0.0
    %4989 = vmatpush2.msra.mxu0 0.0
    %4990 = vmatprep.subr.mxu0 0.0
    %4991 = vmatpush2.msra.mxu0 0.0
    %4992 = vmatprep.subr.mxu0 0.0
    %4993 = vmatpush2.msra.mxu0 0.0
    %4994 = vmatprep.subr.mxu0 0.0
    %4995 = vmatpush2.msra.mxu0 0.0
    %4996 = vmatprep.subr.mxu0 0.0
    %4997 = vmatpush2.msra.mxu0 0.0
    %4998 = vmatprep.subr.mxu0 0.0
    %4999 = vmatpush2.msra.mxu0 0.0
    %5000 = vmatprep.subr.mxu0 0.0
    %5001 = vmatpush2.msra.mxu0 0.0
    %5002 = vmatprep.subr.mxu0 0.0
    %5003 = vmatpush2.msra.mxu0 0.0
    %5004 = vmatprep.subr.mxu0 0.0
    %5005 = vmatpush2.msra.mxu0 0.0
    %5006 = vmatprep.subr.mxu0 0.0
    %5007 = vmatpush2.msra.mxu0 0.0
    %5008 = vmatprep.subr.mxu0 0.0
    %5009 = vmatpush2.msra.mxu0 0.0
    %5010 = vmatprep.subr.mxu0 0.0
    %5011 = vmatpush2.msra.mxu0 0.0
    %5012 = vmatprep.subr.mxu0 0.0
    %5013 = vmatpush2.msra.mxu0 0.0
    %5014 = vmatprep.mubr.f32.mxu0 0.0
    %5015 = vmatmul.mubr.f32.gmra.mxu0 %v4948
    %v5016 = vpop.f32.mrf.mxu0
    %v5017 = vadd.f32 0.0, %v5016
    %v5018 = vpop.f32.mrf.mxu0
    %v5019 = vadd.f32 0.0, %v5018
    %5020 = vdwg.mxu0
    %s5021 = scalar_lea.vmem %s9, 200
    %v5022 = vld [vmem:[%s5021] sm:$0xff]
    %v5023 = vld [vmem:[%s5021 + $0x8] sm:$0xff]
    %v5024 = vld [vmem:[%s5021 + $0x10] sm:$0xff]
    %v5025 = vld [vmem:[%s5021 + $0x18] sm:$0xff]
    %v5026 = vld [vmem:[%s5021 + $0x20] sm:$0xff]
    %v5027 = vld [vmem:[%s5021 + $0x28] sm:$0xff]
    %v5028 = vld [vmem:[%s5021 + $0x30] sm:$0xff]
    %v5029 = vld [vmem:[%s5021 + $0x38] sm:$0xff]
    %v5030 = vld [vmem:[%s5021 + $0x40] sm:$0xff]
    %v5031 = vld [vmem:[%s5021 + $0x48] sm:$0xff]
    %v5032 = vld [vmem:[%s5021 + $0x50] sm:$0xff]
    %v5033 = vld [vmem:[%s5021 + $0x58] sm:$0xff]
    %v5034 = vld [vmem:[%s5021 + $0x60] sm:$0xff]
    %v5035 = vld [vmem:[%s5021 + $0x68] sm:$0xff]
    %v5036 = vld [vmem:[%s5021 + $0x70] sm:$0xff]
    %v5037 = vld [vmem:[%s5021 + $0x78] sm:$0xff]
    %v5038 = vld [vmem:[%s5021 + $0x80] sm:$0xff]
    %v5039 = vld [vmem:[%s5021 + $0x88] sm:$0xff]
    %v5040 = vld [vmem:[%s5021 + $0x90] sm:$0xff]
    %v5041 = vld [vmem:[%s5021 + $0x98] sm:$0xff]
    %v5042 = vld [vmem:[%s5021 + $0xa0] sm:$0xff]
    %v5043 = vld [vmem:[%s5021 + $0xa8] sm:$0xff]
    %v5044 = vld [vmem:[%s5021 + $0xb0] sm:$0xff]
    %v5045 = vld [vmem:[%s5021 + $0xb8] sm:$0xff]
    %v5046 = vld [vmem:[%s5021 + $0xc0] sm:$0x3f]
    %vm5047 = vcmask 572416
    %v5049 = vsel %vm5047, %v5019, 0
    %v5052 = vsel %vm281, %v5046, 0
    %5054 = vmatprep.subr.mxu0 0.0
    %5055 = vmatpush1.msra.mxu0 %v5037
    %5056 = vmatprep.subr.mxu0 0.0
    %5057 = vmatpush1.msra.mxu0 %v5036
    %5058 = vmatprep.subr.mxu0 0.0
    %5059 = vmatpush1.msra.mxu0 %v5035
    %5060 = vmatprep.subr.mxu0 0.0
    %5061 = vmatpush1.msra.mxu0 %v5034
    %5062 = vmatprep.subr.mxu0 0.0
    %5063 = vmatpush1.msra.mxu0 %v5033
    %5064 = vmatprep.subr.mxu0 0.0
    %5065 = vmatpush1.msra.mxu0 %v5032
    %5066 = vmatprep.subr.mxu0 0.0
    %5067 = vmatpush1.msra.mxu0 %v5031
    %5068 = vmatprep.subr.mxu0 0.0
    %5069 = vmatpush1.msra.mxu0 %v5030
    %5070 = vmatprep.subr.mxu0 0.0
    %5071 = vmatpush1.msra.mxu0 %v5029
    %5072 = vmatprep.subr.mxu0 0.0
    %5073 = vmatpush1.msra.mxu0 %v5028
    %5074 = vmatprep.subr.mxu0 0.0
    %5075 = vmatpush1.msra.mxu0 %v5027
    %5076 = vmatprep.subr.mxu0 0.0
    %5077 = vmatpush1.msra.mxu0 %v5026
    %5078 = vmatprep.subr.mxu0 0.0
    %5079 = vmatpush1.msra.mxu0 %v5025
    %5080 = vmatprep.subr.mxu0 0.0
    %5081 = vmatpush1.msra.mxu0 %v5024
    %5082 = vmatprep.subr.mxu0 0.0
    %5083 = vmatpush1.msra.mxu0 %v5023
    %5084 = vmatprep.subr.mxu0 0.0
    %5085 = vmatpush1.msra.mxu0 %v5022
    %5086 = vmatprep.subr.mxu0 0.0
    %5087 = vmatpush2.msra.mxu0 0.0
    %5088 = vmatprep.subr.mxu0 0.0
    %5089 = vmatpush2.msra.mxu0 0.0
    %5090 = vmatprep.subr.mxu0 0.0
    %5091 = vmatpush2.msra.mxu0 0.0
    %5092 = vmatprep.subr.mxu0 0.0
    %5093 = vmatpush2.msra.mxu0 0.0
    %5094 = vmatprep.subr.mxu0 0.0
    %5095 = vmatpush2.msra.mxu0 0.0
    %5096 = vmatprep.subr.mxu0 0.0
    %5097 = vmatpush2.msra.mxu0 0.0
    %5098 = vmatprep.subr.mxu0 0.0
    %5099 = vmatpush2.msra.mxu0 0.0
    %5100 = vmatprep.subr.mxu0 0.0
    %5101 = vmatpush2.msra.mxu0 %v5052
    %5102 = vmatprep.subr.mxu0 0.0
    %5103 = vmatpush2.msra.mxu0 %v5045
    %5104 = vmatprep.subr.mxu0 0.0
    %5105 = vmatpush2.msra.mxu0 %v5044
    %5106 = vmatprep.subr.mxu0 0.0
    %5107 = vmatpush2.msra.mxu0 %v5043
    %5108 = vmatprep.subr.mxu0 0.0
    %5109 = vmatpush2.msra.mxu0 %v5042
    %5110 = vmatprep.subr.mxu0 0.0
    %5111 = vmatpush2.msra.mxu0 %v5041
    %5112 = vmatprep.subr.mxu0 0.0
    %5113 = vmatpush2.msra.mxu0 %v5040
    %5114 = vmatprep.subr.mxu0 0.0
    %5115 = vmatpush2.msra.mxu0 %v5039
    %5116 = vmatprep.subr.mxu0 0.0
    %5117 = vmatpush2.msra.mxu0 %v5038
    %5118 = vmatprep.mubr.f32.mxu0 %v5049
    %5119 = vmatmul.mubr.f32.gmra.mxu0 %v5017
    %v5120 = vpop.f32.mrf.mxu0
    %v5121 = vadd.f32 0.0, %v5120
    %v5122 = vpop.f32.mrf.mxu0
    %5123 = vdwg.mxu0
    %v5125 = vsel %vm5047, %v4918, 0
    %v5128 = vsel %vm281, %v4944, 0
    %5130 = vmatprep.subr.mxu0 0.0
    %5131 = vmatpush1.msra.mxu0 %v4935
    %5132 = vmatprep.subr.mxu0 0.0
    %5133 = vmatpush1.msra.mxu0 %v4934
    %5134 = vmatprep.subr.mxu0 0.0
    %5135 = vmatpush1.msra.mxu0 %v4933
    %5136 = vmatprep.subr.mxu0 0.0
    %5137 = vmatpush1.msra.mxu0 %v4932
    %5138 = vmatprep.subr.mxu0 0.0
    %5139 = vmatpush1.msra.mxu0 %v4931
    %5140 = vmatprep.subr.mxu0 0.0
    %5141 = vmatpush1.msra.mxu0 %v4930
    %5142 = vmatprep.subr.mxu0 0.0
    %5143 = vmatpush1.msra.mxu0 %v4929
    %5144 = vmatprep.subr.mxu0 0.0
    %5145 = vmatpush1.msra.mxu0 %v4928
    %5146 = vmatprep.subr.mxu0 0.0
    %5147 = vmatpush1.msra.mxu0 %v4927
    %5148 = vmatprep.subr.mxu0 0.0
    %5149 = vmatpush1.msra.mxu0 %v4926
    %5150 = vmatprep.subr.mxu0 0.0
    %5151 = vmatpush1.msra.mxu0 %v4925
    %5152 = vmatprep.subr.mxu0 0.0
    %5153 = vmatpush1.msra.mxu0 %v4924
    %5154 = vmatprep.subr.mxu0 0.0
    %5155 = vmatpush1.msra.mxu0 %v4923
    %5156 = vmatprep.subr.mxu0 0.0
    %5157 = vmatpush1.msra.mxu0 %v4922
    %5158 = vmatprep.subr.mxu0 0.0
    %5159 = vmatpush1.msra.mxu0 %v4921
    %5160 = vmatprep.subr.mxu0 0.0
    %5161 = vmatpush1.msra.mxu0 %v4920
    %5162 = vmatprep.subr.mxu0 0.0
    %5163 = vmatpush2.msra.mxu0 0.0
    %5164 = vmatprep.subr.mxu0 0.0
    %5165 = vmatpush2.msra.mxu0 0.0
    %5166 = vmatprep.subr.mxu0 0.0
    %5167 = vmatpush2.msra.mxu0 0.0
    %5168 = vmatprep.subr.mxu0 0.0
    %5169 = vmatpush2.msra.mxu0 0.0
    %5170 = vmatprep.subr.mxu0 0.0
    %5171 = vmatpush2.msra.mxu0 0.0
    %5172 = vmatprep.subr.mxu0 0.0
    %5173 = vmatpush2.msra.mxu0 0.0
    %5174 = vmatprep.subr.mxu0 0.0
    %5175 = vmatpush2.msra.mxu0 0.0
    %5176 = vmatprep.subr.mxu0 0.0
    %5177 = vmatpush2.msra.mxu0 %v5128
    %5178 = vmatprep.subr.mxu0 0.0
    %5179 = vmatpush2.msra.mxu0 %v4943
    %5180 = vmatprep.subr.mxu0 0.0
    %5181 = vmatpush2.msra.mxu0 %v4942
    %5182 = vmatprep.subr.mxu0 0.0
    %5183 = vmatpush2.msra.mxu0 %v4941
    %5184 = vmatprep.subr.mxu0 0.0
    %5185 = vmatpush2.msra.mxu0 %v4940
    %5186 = vmatprep.subr.mxu0 0.0
    %5187 = vmatpush2.msra.mxu0 %v4939
    %5188 = vmatprep.subr.mxu0 0.0
    %5189 = vmatpush2.msra.mxu0 %v4938
    %5190 = vmatprep.subr.mxu0 0.0
    %5191 = vmatpush2.msra.mxu0 %v4937
    %5192 = vmatprep.subr.mxu0 0.0
    %5193 = vmatpush2.msra.mxu0 %v4936
    %5194 = vmatprep.mubr.f32.mxu0 %v5125
    %5195 = vmatmul.mubr.f32.gmra.mxu0 %v4916
    %v5196 = vpop.f32.mrf.mxu0
    %v5197 = vadd.f32 %v5121, %v5196
    %v5198 = vpop.f32.mrf.mxu0
    %5199 = vdwg.mxu0
    %v5200 = vld [vmem:[%s10] sm:$0x1]
    %v5202 = vlaneseq
    %v5203 = vshrl.u32 %v5202, 7
    %v5204 = vsub.s32 0, %v5203
    %v5205 = vrot.slane %v5200, %v5204
    %v5207 = vadd.f32 %v5197, %v5205
    %v5208 = vmax.f32 %v5207, 0.0
    %v5209 = vld [vmem:[%s11] sm:$0xff]
    %v5210 = vld [vmem:[%s11 + $0x8] sm:$0xff]
    %v5211 = vld [vmem:[%s11 + $0x10] sm:$0xff]
    %v5212 = vld [vmem:[%s11 + $0x18] sm:$0xff]
    %v5213 = vld [vmem:[%s11 + $0x20] sm:$0xff]
    %v5214 = vld [vmem:[%s11 + $0x28] sm:$0xff]
    %v5215 = vld [vmem:[%s11 + $0x30] sm:$0xff]
    %v5216 = vld [vmem:[%s11 + $0x38] sm:$0xff]
    %v5217 = vld [vmem:[%s12] sm:$0x1]
    %v5219 = vlaneseq
    %v5220 = vshrl.u32 %v5219, 7
    %v5221 = vsub.s32 0, %v5220
    %v5222 = vrot.slane %v5217, %v5221
    %vm5224 = vcmask 523264
    %v5226 = vsel %vm5224, %v5208, 0
    %5228 = vmatprep.subr.mxu0 0.0
    %5229 = vmatpush1.msra.mxu0 0.0
    %5230 = vmatprep.subr.mxu0 0.0
    %5231 = vmatpush1.msra.mxu0 0.0
    %5232 = vmatprep.subr.mxu0 0.0
    %5233 = vmatpush1.msra.mxu0 0.0
    %5234 = vmatprep.subr.mxu0 0.0
    %5235 = vmatpush1.msra.mxu0 0.0
    %5236 = vmatprep.subr.mxu0 0.0
    %5237 = vmatpush1.msra.mxu0 0.0
    %5238 = vmatprep.subr.mxu0 0.0
    %5239 = vmatpush1.msra.mxu0 0.0
    %5240 = vmatprep.subr.mxu0 0.0
    %5241 = vmatpush1.msra.mxu0 0.0
    %5242 = vmatprep.subr.mxu0 0.0
    %5243 = vmatpush1.msra.mxu0 0.0
    %5244 = vmatprep.subr.mxu0 0.0
    %5245 = vmatpush1.msra.mxu0 %v5216
    %5246 = vmatprep.subr.mxu0 0.0
    %5247 = vmatpush1.msra.mxu0 %v5215
    %5248 = vmatprep.subr.mxu0 0.0
    %5249 = vmatpush1.msra.mxu0 %v5214
    %5250 = vmatprep.subr.mxu0 0.0
    %5251 = vmatpush1.msra.mxu0 %v5213
    %5252 = vmatprep.subr.mxu0 0.0
    %5253 = vmatpush1.msra.mxu0 %v5212
    %5254 = vmatprep.subr.mxu0 0.0
    %5255 = vmatpush1.msra.mxu0 %v5211
    %5256 = vmatprep.subr.mxu0 0.0
    %5257 = vmatpush1.msra.mxu0 %v5210
    %5258 = vmatprep.subr.mxu0 0.0
    %5259 = vmatpush1.msra.mxu0 %v5209
    %5260 = vmatprep.subr.mxu0 0.0
    %5261 = vmatpush2.msra.mxu0 0.0
    %5262 = vmatprep.subr.mxu0 0.0
    %5263 = vmatpush2.msra.mxu0 0.0
    %5264 = vmatprep.subr.mxu0 0.0
    %5265 = vmatpush2.msra.mxu0 0.0
    %5266 = vmatprep.subr.mxu0 0.0
    %5267 = vmatpush2.msra.mxu0 0.0
    %5268 = vmatprep.subr.mxu0 0.0
    %5269 = vmatpush2.msra.mxu0 0.0
    %5270 = vmatprep.subr.mxu0 0.0
    %5271 = vmatpush2.msra.mxu0 0.0
    %5272 = vmatprep.subr.mxu0 0.0
    %5273 = vmatpush2.msra.mxu0 0.0
    %5274 = vmatprep.subr.mxu0 0.0
    %5275 = vmatpush2.msra.mxu0 0.0
    %5276 = vmatprep.subr.mxu0 0.0
    %5277 = vmatpush2.msra.mxu0 0.0
    %5278 = vmatprep.subr.mxu0 0.0
    %5279 = vmatpush2.msra.mxu0 0.0
    %5280 = vmatprep.subr.mxu0 0.0
    %5281 = vmatpush2.msra.mxu0 0.0
    %5282 = vmatprep.subr.mxu0 0.0
    %5283 = vmatpush2.msra.mxu0 0.0
    %5284 = vmatprep.subr.mxu0 0.0
    %5285 = vmatpush2.msra.mxu0 0.0
    %5286 = vmatprep.subr.mxu0 0.0
    %5287 = vmatpush2.msra.mxu0 0.0
    %5288 = vmatprep.subr.mxu0 0.0
    %5289 = vmatpush2.msra.mxu0 0.0
    %5290 = vmatprep.subr.mxu0 0.0
    %5291 = vmatpush2.msra.mxu0 0.0
    %5292 = vmatprep.mubr.f32.mxu0 0.0
    %5293 = vmatmul.mubr.f32.gmra.mxu0 %v5226
    %v5294 = vpop.f32.mrf.mxu0
    %v5295 = vadd.f32 %v5222, %v5294
    %v5296 = vpop.f32.mrf.mxu0
    %5297 = vdwg.mxu0
    %vm5298 = vcmask 9216
    %5299 = vst.msk [vmem:[#allocation2] sm:$0x3] %vm5298, %v5295
    // Predicated region
    $region54: #{smallnet_forward.1} parent=1 // pred_check
      _
    $region55: #{smallnet_forward.1} parent=1 // pred_check_branch
      %5301 = sbr.rel (0) target = $region57
    $region56: #{smallnet_forward.1} parent=1 // pred_region
      %s5303 = ssub.s32 32, 32
      %5304 = vsyncadd [#allocation3], %s5303
      %s5306 = sshll.u32 [#allocation2], 4
      %s5307 = int_to_ptr.vmem [resolvable:$true] %s5306
      %5309 = dma.vmem_to_hbm [thread:$0]  %s5307, 32, %s13, [#allocation3]
    $region57: #{smallnet_forward.1} parent=1 // pred_fallthru
      _
    // Predicated region
    $region58: #{smallnet_forward.1} parent=1 // pred_check
      _
    $region59: #{smallnet_forward.1} parent=1 // pred_check_branch
      %5311 = sbr.rel (0) target = $region61
    $region60: #{smallnet_forward.1} parent=1 // pred_region
      %5312 = dma.done [#allocation3], 32
    $region61: #{smallnet_forward.1} parent=1 // pred_fallthru
      _
    %5313 = vsyncpa [#allocation3], 1

</llo_original>
